<compile_context>
chip_gen: v7x
topology: tpu7x:2x2x1
jax: 0.10.0
libtpu: 0.0.40
codegen_flags: <defaults>
</compile_context>

<pallas_src>
import jax
import jax.numpy as jnp
from jax.experimental import pallas as pl
from jax.experimental.pallas import tpu as pltpu

LANE = 128


def _round_up(v, m):
    return (v + m - 1) // m * m


# ----------------------------------------------------------------------------
# Fused C3 kernel (one image per grid step)
# ----------------------------------------------------------------------------
def _make_c3_kernel(n_repeat, shortcut, H, W):
    """Builds the fused kernel body for a fixed (n_repeat, shortcut, H, W)."""
    PADL = 8  # sublane-aligned column offset of the 3x3 'same'-pad interior

    def kernel(x_ref, c12w_ref, c12b_ref,
               bw1_ref, bb1_ref, bw2_ref, bb2_ref,
               w3h_ref, w3y_ref, b3_ref,
               o_ref, pad_scr):
        Ci = x_ref.shape[3]
        Ce = bw1_ref.shape[2]
        Co = o_ref.shape[3]
        M = H * W

        # Zero the padded-halo scratch every step (borders must be zero; the
        # scratch persists across grid steps / megacore shards).
        pad_scr[...] = jnp.zeros_like(pad_scr)

        # --- C3.conv1 / C3.conv2: shared input -> one fused dual-output matmul
        x2d = x_ref[0].reshape(M, Ci)                              # bf16
        acc12 = jnp.dot(x2d, c12w_ref[...],
                        preferred_element_type=jnp.float32)
        acc12 = jnp.maximum(acc12 + c12b_ref[...], 0.0)            # BN bias + ReLU
        h = acc12[:, :Ce]          # (M, Ce) f32 — bottleneck stream (y1)
        y2 = acc12[:, Ce:]         # (M, Ce) f32 — bypass stream     (y2)

        # --- Bottleneck stack: 1x1 -> 3x3 (+ post-activation shortcut),
        #     intermediates never leave VMEM.
        for i in range(n_repeat):
            # Bottleneck.conv1 (1x1 + BN + ReLU)
            b1 = jnp.dot(h.astype(jnp.bfloat16), bw1_ref[i],
                         preferred_element_type=jnp.float32)
            b1 = jnp.maximum(b1 + bb1_ref[i], 0.0)
            # Write interior of the zero-padded halo buffer: row offset 1
            # (untiled dim), col offset 8 (sublane-aligned), lane dim full.
            pad_scr[1:1 + H, PADL:PADL + W, :] = b1.reshape(H, W, Ce)

            # Bottleneck.conv2 (3x3 'same'): 9 shifted taps on the MXU.
            acc = jnp.zeros((M, Ce), jnp.float32)
            for dy in range(3):
                for dx in range(3):
                    xs = pad_scr[dy:dy + H,
                                 PADL - 1 + dx:PADL - 1 + dx + W, :]
                    acc = acc + jnp.dot(xs.reshape(M, Ce).astype(jnp.bfloat16),
                                        bw2_ref[i, dy * 3 + dx],
                                        preferred_element_type=jnp.float32)
            acc = jnp.maximum(acc + bb2_ref[i], 0.0)               # BN + ReLU
            if shortcut:
                acc = acc + h                                      # x + act(bn(conv(x)))
            h = acc

        # --- C3.conv3 over cat([h, y2], channel) without building the concat.
        out = jnp.dot(h.astype(jnp.bfloat16), w3h_ref[...],
                      preferred_element_type=jnp.float32)
        out = out + jnp.dot(y2.astype(jnp.bfloat16), w3y_ref[...],
                            preferred_element_type=jnp.float32)
        out = jnp.maximum(out + b3_ref[...], 0.0)
        o_ref[0] = out.reshape(H, W, Co).astype(o_ref.dtype)

    return kernel


def _resident_spec(arr):
    """Weight / bias spec: full array resident, same block every grid step."""
    ndim = arr.ndim
    return pl.BlockSpec(arr.shape, lambda n, _nd=ndim: (0,) * _nd)


def c3_pallas(x_nhwc_padded, params, shortcut=True):
    """x_nhwc_padded: (N, H, W, Cin_padded) bf16. Returns (N, H, W, Cout_padded) f32."""
    N, H, W, cp_in = x_nhwc_padded.shape
    Ce = params["w3h"].shape[0]
    cp_out = params["w3h"].shape[1]
    n_repeat = params["bw1"].shape[0]

    kernel = _make_c3_kernel(n_repeat, shortcut, H, W)

    return pl.pallas_call(
        kernel,
        out_shape=jax.ShapeDtypeStruct((N, H, W, cp_out), jnp.float32),
        grid_spec=pltpu.PrefetchScalarGridSpec(
            num_scalar_prefetch=0,
            grid=(N,),
            in_specs=[
                pl.BlockSpec((1, H, W, cp_in), lambda n: (n, 0, 0, 0)),
                _resident_spec(params["conv12_w"]),
                _resident_spec(params["conv12_b"]),
                _resident_spec(params["bw1"]),
                _resident_spec(params["bb1"]),
                _resident_spec(params["bw2"]),
                _resident_spec(params["bb2"]),
                _resident_spec(params["w3h"]),
                _resident_spec(params["w3y"]),
                _resident_spec(params["b3"]),
            ],
            out_specs=pl.BlockSpec((1, H, W, cp_out), lambda n: (n, 0, 0, 0)),
            # Padded-halo buffer for the 3x3 conv: interior at (1, 8), borders 0.
            scratch_shapes=[pltpu.VMEM((H + 2, W + 16, Ce), jnp.float32)],
        ),
        compiler_params=pltpu.CompilerParams(
            dimension_semantics=("parallel",)),
    )(x_nhwc_padded,
      params["conv12_w"], params["conv12_b"],
      params["bw1"], params["bb1"], params["bw2"], params["bb2"],
      params["w3h"], params["w3y"], params["b3"])


# ----------------------------------------------------------------------------
# Parameter preparation (fold eval-mode BN, pad channels, cast to bf16)
# ----------------------------------------------------------------------------
def fold_bn(w, gamma, beta, mean, var, eps=1e-5):
    """w: (Cout, Cin, kh, kw). Returns w_eff (kh, kw, Cin, Cout), b_eff (Cout,)."""
    scale = gamma / jnp.sqrt(var + eps)
    w_eff = jnp.transpose(w, (2, 3, 1, 0)) * scale
    b_eff = beta - mean * scale
    return w_eff, b_eff


def pack_1x1(w_eff, b_eff, cp_in, cp_out):
    ci, co = w_eff.shape[2], w_eff.shape[3]
    wm = jnp.pad(w_eff.reshape(ci, co), ((0, cp_in - ci), (0, cp_out - co)))
    bm = jnp.pad(b_eff, (0, cp_out - co)).reshape(1, cp_out)
    return wm.astype(jnp.bfloat16), bm.astype(jnp.float32)


def pack_3x3(w_eff, b_eff, cp_in, cp_out):
    ci, co = w_eff.shape[2], w_eff.shape[3]
    wm = jnp.pad(w_eff.reshape(9, ci, co),
                 ((0, 0), (0, cp_in - ci), (0, cp_out - co)))
    bm = jnp.pad(b_eff, (0, cp_out - co)).reshape(1, cp_out)
    return wm.astype(jnp.bfloat16), bm.astype(jnp.float32)


def init_conv_params(key, cin, cout, k):
    kw_, kg, kb, km, kv = jax.random.split(key, 5)
    w = 0.1 * jax.random.normal(kw_, (cout, cin, k, k), jnp.float32)
    gamma = 1.0 + 0.1 * jax.random.normal(kg, (cout,), jnp.float32)
    beta = 0.1 * jax.random.normal(kb, (cout,), jnp.float32)
    mean = 0.1 * jax.random.normal(km, (cout,), jnp.float32)
    var = 1.0 + 0.1 * jnp.abs(jax.random.normal(kv, (cout,), jnp.float32))
    return fold_bn(w, gamma, beta, mean, var)


def build_params(key, in_channels, out_channels, n_repeat, expansion=0.5):
    exp_c = int(out_channels * expansion)
    cp_in = _round_up(in_channels, LANE)
    cp_e = _round_up(exp_c, LANE)
    cp_out = _round_up(out_channels, LANE)

    keys = jax.random.split(key, 3 + 2 * n_repeat)

    # C3.conv1 / C3.conv2: both (Cin -> exp_c, 1x1), fused along the output dim.
    w1e, b1e = init_conv_params(keys[0], in_channels, exp_c, 1)
    w2e, b2e = init_conv_params(keys[1], in_channels, exp_c, 1)
    w1p, b1p = pack_1x1(w1e, b1e, cp_in, cp_e)
    w2p, b2p = pack_1x1(w2e, b2e, cp_in, cp_e)
    conv12_w = jnp.concatenate([w1p, w2p], axis=1)        # (cp_in, 2*cp_e)
    conv12_b = jnp.concatenate([b1p, b2p], axis=1)        # (1, 2*cp_e)

    # C3.conv3 (2*exp_c -> out): split along K so the concat never exists.
    w3e, b3e = init_conv_params(keys[2], 2 * exp_c, out_channels, 1)
    w3 = w3e.reshape(2 * exp_c, out_channels)
    w3h = jnp.pad(w3[:exp_c], ((0, cp_e - exp_c), (0, cp_out - out_channels)))
    w3y = jnp.pad(w3[exp_c:], ((0, cp_e - exp_c), (0, cp_out - out_channels)))
    b3 = jnp.pad(b3e, (0, cp_out - out_channels)).reshape(1, cp_out)

    # Bottleneck stack weights, stacked along n_repeat (all resident in VMEM).
    bw1, bb1, bw2, bb2 = [], [], [], []
    for i in range(n_repeat):
        wa, ba = init_conv_params(keys[3 + 2 * i], exp_c, exp_c, 1)
        wb, bb = init_conv_params(keys[4 + 2 * i], exp_c, exp_c, 3)
        w1i, b1i = pack_1x1(wa, ba, cp_e, cp_e)
        w2i, b2i = pack_3x3(wb, bb, cp_e, cp_e)
        bw1.append(w1i); bb1.append(b1i); bw2.append(w2i); bb2.append(b2i)

    return {
        "conv12_w": conv12_w, "conv12_b": conv12_b,
        "bw1": jnp.stack(bw1), "bb1": jnp.stack(bb1),
        "bw2": jnp.stack(bw2), "bb2": jnp.stack(bb2),
        "w3h": w3h.astype(jnp.bfloat16), "w3y": w3y.astype(jnp.bfloat16),
        "b3": b3.astype(jnp.float32),
        "out_channels": out_channels,
    }


# ----------------------------------------------------------------------------
# C3 forward (PyTorch-facing NCHW f32 in / out)
# ----------------------------------------------------------------------------
def c3_forward(x_nchw, params, shortcut=True):
    N, Cin, H, W = x_nchw.shape
    cp_in = params["conv12_w"].shape[0]
    out_channels = params["out_channels"]

    # NCHW -> NHWC, lane-pad channels to a multiple of 128, cast to bf16.
    x = jnp.transpose(x_nchw, (0, 2, 3, 1))
    x = jnp.pad(x, ((0, 0), (0, 0), (0, 0), (0, cp_in - Cin))).astype(jnp.bfloat16)

    out = c3_pallas(x, params, shortcut=shortcut)      # (N, H, W, cp_out) f32
    out = out[..., :out_channels]                      # drop lane padding
    return jnp.transpose(out, (0, 3, 1, 2))            # NHWC -> NCHW


if __name__ == "__main__":
    key = jax.random.PRNGKey(0)
    kx, kp = jax.random.split(key)

    in_channels, out_channels, n_repeat = 4, 4, 1
    N, H, W = 2, 16, 16

    x = jax.random.normal(kx, (N, in_channels, H, W), jnp.float32)
    params = build_params(kp, in_channels, out_channels, n_repeat, expansion=0.5)

    out = c3_forward(x, params, shortcut=True)
    out = jax.block_until_ready(out)

    assert out.shape == (N, out_channels, H, W)
    assert out.dtype == jnp.float32
    assert bool(jnp.all(jnp.isfinite(out)))
    print("KERNEL_OK")
</pallas_src>

<mosaic_0001>
module attributes {stable_mosaic.version = 11 : i64} {
  func.func @kernel(%arg0: i32, %arg1: memref<1x16x16x128xbf16, #tpu.memory_space<vmem>>, %arg2: memref<128x256xbf16, #tpu.memory_space<vmem>>, %arg3: memref<1x256xf32, #tpu.memory_space<vmem>>, %arg4: memref<1x128x128xbf16, #tpu.memory_space<vmem>>, %arg5: memref<1x1x128xf32, #tpu.memory_space<vmem>>, %arg6: memref<1x9x128x128xbf16, #tpu.memory_space<vmem>>, %arg7: memref<1x1x128xf32, #tpu.memory_space<vmem>>, %arg8: memref<128x128xbf16, #tpu.memory_space<vmem>>, %arg9: memref<128x128xbf16, #tpu.memory_space<vmem>>, %arg10: memref<1x128xf32, #tpu.memory_space<vmem>>, %arg11: memref<1x16x16x128xf32, #tpu.memory_space<vmem>>, %arg12: memref<18x32x128xf32, #tpu.memory_space<vmem>>) attributes {dimension_semantics = [#tpu.dimension_semantics<parallel>], iteration_bounds = array<i64: 2>, scalar_prefetch = 0 : i64, scratch_operands = 1 : i64, tpu.core_type = #tpu.core_type<tc>, window_params = [{transform_indices = @transform_0, window_bounds = array<i64: 1, 16, 16, 128>}, {pipeline_mode = #tpu.pipeline_mode<synchronous>, transform_indices = @transform_1, window_bounds = array<i64: 128, 256>}, {pipeline_mode = #tpu.pipeline_mode<synchronous>, transform_indices = @transform_2, window_bounds = array<i64: 1, 256>}, {pipeline_mode = #tpu.pipeline_mode<synchronous>, transform_indices = @transform_3, window_bounds = array<i64: 1, 128, 128>}, {pipeline_mode = #tpu.pipeline_mode<synchronous>, transform_indices = @transform_4, window_bounds = array<i64: 1, 1, 128>}, {pipeline_mode = #tpu.pipeline_mode<synchronous>, transform_indices = @transform_5, window_bounds = array<i64: 1, 9, 128, 128>}, {pipeline_mode = #tpu.pipeline_mode<synchronous>, transform_indices = @transform_6, window_bounds = array<i64: 1, 1, 128>}, {pipeline_mode = #tpu.pipeline_mode<synchronous>, transform_indices = @transform_7, window_bounds = array<i64: 128, 128>}, {pipeline_mode = #tpu.pipeline_mode<synchronous>, transform_indices = @transform_8, window_bounds = array<i64: 128, 128>}, {pipeline_mode = #tpu.pipeline_mode<synchronous>, transform_indices = @transform_9, window_bounds = array<i64: 1, 128>}, {transform_indices = @transform_10, window_bounds = array<i64: 1, 16, 16, 128>}]} {
    %cst = arith.constant 0.000000e+00 : f32
    %0 = vector.broadcast %cst : f32 to vector<18x32x128xf32>
    %c0 = arith.constant 0 : index
    %c0_0 = arith.constant 0 : index
    %c0_1 = arith.constant 0 : index
    %1 = vector.load %arg12[%c0, %c0_0, %c0_1] : memref<18x32x128xf32, #tpu.memory_space<vmem>>, vector<18x32x128xf32>
    tpu.vector_store %arg12[%c0, %c0_0, %c0_1], %0 {strides = array<i32>} : memref<18x32x128xf32, #tpu.memory_space<vmem>>, vector<18x32x128xf32>,
    %c0_2 = arith.constant 0 : index
    %c0_3 = arith.constant 0 : index
    %c0_4 = arith.constant 0 : index
    %c0_5 = arith.constant 0 : index
    %2 = vector.load %arg1[%c0_2, %c0_3, %c0_4, %c0_5] : memref<1x16x16x128xbf16, #tpu.memory_space<vmem>>, vector<1x16x16x128xbf16>
    %3 = vector.shape_cast %2 : vector<1x16x16x128xbf16> to vector<16x16x128xbf16>
    %4 = vector.shape_cast %3 : vector<16x16x128xbf16> to vector<256x128xbf16>
    %c0_6 = arith.constant 0 : index
    %c0_7 = arith.constant 0 : index
    %5 = vector.load %arg2[%c0_6, %c0_7] : memref<128x256xbf16, #tpu.memory_space<vmem>>, vector<128x256xbf16>
    %cst_8 = arith.constant dense<0.000000e+00> : vector<256x256xf32>
    %6 = tpu.matmul %4, %5, %cst_8 {dimension_numbers = #tpu.dot_dimension_numbers<[1], [0], [0], [1], [0, 0, 1, 1], [], []>} : vector<256x128xbf16>, vector<128x256xbf16>, vector<256x256xf32> -> vector<256x256xf32>
    %c0_9 = arith.constant 0 : index
    %c0_10 = arith.constant 0 : index
    %7 = vector.load %arg3[%c0_9, %c0_10] : memref<1x256xf32, #tpu.memory_space<vmem>>, vector<1x256xf32>
    %8 = vector.broadcast %7 : vector<1x256xf32> to vector<256x256xf32>
    %9 = arith.addf %6, %8 : vector<256x256xf32>
    %cst_11 = arith.constant 0.000000e+00 : f32
    %10 = vector.broadcast %cst_11 : f32 to vector<256x256xf32>
    %11 = arith.maximumf %9, %10 : vector<256x256xf32>
    %12 = vector.extract_strided_slice %11 {offsets = [0, 0], sizes = [256, 128], strides = [1, 1]} : vector<256x256xf32> to vector<256x128xf32>
    %13 = vector.extract_strided_slice %11 {offsets = [0, 128], sizes = [256, 128], strides = [1, 1]} : vector<256x256xf32> to vector<256x128xf32>
    %14 = arith.truncf %12 : vector<256x128xf32> to vector<256x128xbf16>
    %c0_12 = arith.constant 0 : index
    %c0_13 = arith.constant 0 : index
    %c0_14 = arith.constant 0 : index
    %15 = vector.load %arg4[%c0_12, %c0_13, %c0_14] : memref<1x128x128xbf16, #tpu.memory_space<vmem>>, vector<1x128x128xbf16>
    %16 = vector.shape_cast %15 : vector<1x128x128xbf16> to vector<128x128xbf16>
    %cst_15 = arith.constant dense<0.000000e+00> : vector<256x128xf32>
    %17 = tpu.matmul %14, %16, %cst_15 {dimension_numbers = #tpu.dot_dimension_numbers<[1], [0], [0], [1], [0, 0, 1, 1], [], []>} : vector<256x128xbf16>, vector<128x128xbf16>, vector<256x128xf32> -> vector<256x128xf32>
    %c0_16 = arith.constant 0 : index
    %c0_17 = arith.constant 0 : index
    %c0_18 = arith.constant 0 : index
    %18 = vector.load %arg5[%c0_16, %c0_17, %c0_18] : memref<1x1x128xf32, #tpu.memory_space<vmem>>, vector<1x1x128xf32>
    %19 = vector.shape_cast %18 : vector<1x1x128xf32> to vector<1x128xf32>
    %20 = vector.broadcast %19 : vector<1x128xf32> to vector<256x128xf32>
    %21 = arith.addf %17, %20 : vector<256x128xf32>
    %cst_19 = arith.constant 0.000000e+00 : f32
    %22 = vector.broadcast %cst_19 : f32 to vector<256x128xf32>
    %23 = arith.maximumf %21, %22 : vector<256x128xf32>
    %24 = vector.shape_cast %23 : vector<256x128xf32> to vector<16x16x128xf32>
    %c1 = arith.constant 1 : index
    %c8 = arith.constant 8 : index
    %c0_20 = arith.constant 0 : index
    %25 = vector.load %arg12[%c1, %c8, %c0_20] : memref<18x32x128xf32, #tpu.memory_space<vmem>>, vector<16x16x128xf32>
    tpu.vector_store %arg12[%c1, %c8, %c0_20], %24 {strides = array<i32>} : memref<18x32x128xf32, #tpu.memory_space<vmem>>, vector<16x16x128xf32>,
    %cst_21 = arith.constant 0.000000e+00 : f32
    %26 = vector.broadcast %cst_21 : f32 to vector<256x128xf32>
    %c0_22 = arith.constant 0 : index
    %c7 = arith.constant 7 : index
    %c0_23 = arith.constant 0 : index
    %27 = vector.load %arg12[%c0_22, %c7, %c0_23] : memref<18x32x128xf32, #tpu.memory_space<vmem>>, vector<16x16x128xf32>
    %28 = vector.shape_cast %27 : vector<16x16x128xf32> to vector<256x128xf32>
    %29 = arith.truncf %28 : vector<256x128xf32> to vector<256x128xbf16>
    %c0_24 = arith.constant 0 : index
    %c0_25 = arith.constant 0 : index
    %c0_26 = arith.constant 0 : index
    %c0_27 = arith.constant 0 : index
    %30 = vector.load %arg6[%c0_24, %c0_25, %c0_26, %c0_27] : memref<1x9x128x128xbf16, #tpu.memory_space<vmem>>, vector<1x1x128x128xbf16>
    %31 = vector.shape_cast %30 : vector<1x1x128x128xbf16> to vector<128x128xbf16>
    %cst_28 = arith.constant dense<0.000000e+00> : vector<256x128xf32>
    %32 = tpu.matmul %29, %31, %cst_28 {dimension_numbers = #tpu.dot_dimension_numbers<[1], [0], [0], [1], [0, 0, 1, 1], [], []>} : vector<256x128xbf16>, vector<128x128xbf16>, vector<256x128xf32> -> vector<256x128xf32>
    %33 = arith.addf %26, %32 : vector<256x128xf32>
    %c0_29 = arith.constant 0 : index
    %c8_30 = arith.constant 8 : index
    %c0_31 = arith.constant 0 : index
    %34 = vector.load %arg12[%c0_29, %c8_30, %c0_31] : memref<18x32x128xf32, #tpu.memory_space<vmem>>, vector<16x16x128xf32>
    %35 = vector.shape_cast %34 : vector<16x16x128xf32> to vector<256x128xf32>
    %36 = arith.truncf %35 : vector<256x128xf32> to vector<256x128xbf16>
    %c0_32 = arith.constant 0 : index
    %c1_33 = arith.constant 1 : index
    %c0_34 = arith.constant 0 : index
    %c0_35 = arith.constant 0 : index
    %37 = vector.load %arg6[%c0_32, %c1_33, %c0_34, %c0_35] : memref<1x9x128x128xbf16, #tpu.memory_space<vmem>>, vector<1x1x128x128xbf16>
    %38 = vector.shape_cast %37 : vector<1x1x128x128xbf16> to vector<128x128xbf16>
    %cst_36 = arith.constant dense<0.000000e+00> : vector<256x128xf32>
    %39 = tpu.matmul %36, %38, %cst_36 {dimension_numbers = #tpu.dot_dimension_numbers<[1], [0], [0], [1], [0, 0, 1, 1], [], []>} : vector<256x128xbf16>, vector<128x128xbf16>, vector<256x128xf32> -> vector<256x128xf32>
    %40 = arith.addf %33, %39 : vector<256x128xf32>
    %c0_37 = arith.constant 0 : index
    %c9 = arith.constant 9 : index
    %c0_38 = arith.constant 0 : index
    %41 = vector.load %arg12[%c0_37, %c9, %c0_38] : memref<18x32x128xf32, #tpu.memory_space<vmem>>, vector<16x16x128xf32>
    %42 = vector.shape_cast %41 : vector<16x16x128xf32> to vector<256x128xf32>
    %43 = arith.truncf %42 : vector<256x128xf32> to vector<256x128xbf16>
    %c0_39 = arith.constant 0 : index
    %c2 = arith.constant 2 : index
    %c0_40 = arith.constant 0 : index
    %c0_41 = arith.constant 0 : index
    %44 = vector.load %arg6[%c0_39, %c2, %c0_40, %c0_41] : memref<1x9x128x128xbf16, #tpu.memory_space<vmem>>, vector<1x1x128x128xbf16>
    %45 = vector.shape_cast %44 : vector<1x1x128x128xbf16> to vector<128x128xbf16>
    %cst_42 = arith.constant dense<0.000000e+00> : vector<256x128xf32>
    %46 = tpu.matmul %43, %45, %cst_42 {dimension_numbers = #tpu.dot_dimension_numbers<[1], [0], [0], [1], [0, 0, 1, 1], [], []>} : vector<256x128xbf16>, vector<128x128xbf16>, vector<256x128xf32> -> vector<256x128xf32>
    %47 = arith.addf %40, %46 : vector<256x128xf32>
    %c1_43 = arith.constant 1 : index
    %c7_44 = arith.constant 7 : index
    %c0_45 = arith.constant 0 : index
    %48 = vector.load %arg12[%c1_43, %c7_44, %c0_45] : memref<18x32x128xf32, #tpu.memory_space<vmem>>, vector<16x16x128xf32>
    %49 = vector.shape_cast %48 : vector<16x16x128xf32> to vector<256x128xf32>
    %50 = arith.truncf %49 : vector<256x128xf32> to vector<256x128xbf16>
    %c0_46 = arith.constant 0 : index
    %c3 = arith.constant 3 : index
    %c0_47 = arith.constant 0 : index
    %c0_48 = arith.constant 0 : index
    %51 = vector.load %arg6[%c0_46, %c3, %c0_47, %c0_48] : memref<1x9x128x128xbf16, #tpu.memory_space<vmem>>, vector<1x1x128x128xbf16>
    %52 = vector.shape_cast %51 : vector<1x1x128x128xbf16> to vector<128x128xbf16>
    %cst_49 = arith.constant dense<0.000000e+00> : vector<256x128xf32>
    %53 = tpu.matmul %50, %52, %cst_49 {dimension_numbers = #tpu.dot_dimension_numbers<[1], [0], [0], [1], [0, 0, 1, 1], [], []>} : vector<256x128xbf16>, vector<128x128xbf16>, vector<256x128xf32> -> vector<256x128xf32>
    %54 = arith.addf %47, %53 : vector<256x128xf32>
    %c1_50 = arith.constant 1 : index
    %c8_51 = arith.constant 8 : index
    %c0_52 = arith.constant 0 : index
    %55 = vector.load %arg12[%c1_50, %c8_51, %c0_52] : memref<18x32x128xf32, #tpu.memory_space<vmem>>, vector<16x16x128xf32>
    %56 = vector.shape_cast %55 : vector<16x16x128xf32> to vector<256x128xf32>
    %57 = arith.truncf %56 : vector<256x128xf32> to vector<256x128xbf16>
    %c0_53 = arith.constant 0 : index
    %c4 = arith.constant 4 : index
    %c0_54 = arith.constant 0 : index
    %c0_55 = arith.constant 0 : index
    %58 = vector.load %arg6[%c0_53, %c4, %c0_54, %c0_55] : memref<1x9x128x128xbf16, #tpu.memory_space<vmem>>, vector<1x1x128x128xbf16>
    %59 = vector.shape_cast %58 : vector<1x1x128x128xbf16> to vector<128x128xbf16>
    %cst_56 = arith.constant dense<0.000000e+00> : vector<256x128xf32>
    %60 = tpu.matmul %57, %59, %cst_56 {dimension_numbers = #tpu.dot_dimension_numbers<[1], [0], [0], [1], [0, 0, 1, 1], [], []>} : vector<256x128xbf16>, vector<128x128xbf16>, vector<256x128xf32> -> vector<256x128xf32>
    %61 = arith.addf %54, %60 : vector<256x128xf32>
    %c1_57 = arith.constant 1 : index
    %c9_58 = arith.constant 9 : index
    %c0_59 = arith.constant 0 : index
    %62 = vector.load %arg12[%c1_57, %c9_58, %c0_59] : memref<18x32x128xf32, #tpu.memory_space<vmem>>, vector<16x16x128xf32>
    %63 = vector.shape_cast %62 : vector<16x16x128xf32> to vector<256x128xf32>
    %64 = arith.truncf %63 : vector<256x128xf32> to vector<256x128xbf16>
    %c0_60 = arith.constant 0 : index
    %c5 = arith.constant 5 : index
    %c0_61 = arith.constant 0 : index
    %c0_62 = arith.constant 0 : index
    %65 = vector.load %arg6[%c0_60, %c5, %c0_61, %c0_62] : memref<1x9x128x128xbf16, #tpu.memory_space<vmem>>, vector<1x1x128x128xbf16>
    %66 = vector.shape_cast %65 : vector<1x1x128x128xbf16> to vector<128x128xbf16>
    %cst_63 = arith.constant dense<0.000000e+00> : vector<256x128xf32>
    %67 = tpu.matmul %64, %66, %cst_63 {dimension_numbers = #tpu.dot_dimension_numbers<[1], [0], [0], [1], [0, 0, 1, 1], [], []>} : vector<256x128xbf16>, vector<128x128xbf16>, vector<256x128xf32> -> vector<256x128xf32>
    %68 = arith.addf %61, %67 : vector<256x128xf32>
    %c2_64 = arith.constant 2 : index
    %c7_65 = arith.constant 7 : index
    %c0_66 = arith.constant 0 : index
    %69 = vector.load %arg12[%c2_64, %c7_65, %c0_66] : memref<18x32x128xf32, #tpu.memory_space<vmem>>, vector<16x16x128xf32>
    %70 = vector.shape_cast %69 : vector<16x16x128xf32> to vector<256x128xf32>
    %71 = arith.truncf %70 : vector<256x128xf32> to vector<256x128xbf16>
    %c0_67 = arith.constant 0 : index
    %c6 = arith.constant 6 : index
    %c0_68 = arith.constant 0 : index
    %c0_69 = arith.constant 0 : index
    %72 = vector.load %arg6[%c0_67, %c6, %c0_68, %c0_69] : memref<1x9x128x128xbf16, #tpu.memory_space<vmem>>, vector<1x1x128x128xbf16>
    %73 = vector.shape_cast %72 : vector<1x1x128x128xbf16> to vector<128x128xbf16>
    %cst_70 = arith.constant dense<0.000000e+00> : vector<256x128xf32>
    %74 = tpu.matmul %71, %73, %cst_70 {dimension_numbers = #tpu.dot_dimension_numbers<[1], [0], [0], [1], [0, 0, 1, 1], [], []>} : vector<256x128xbf16>, vector<128x128xbf16>, vector<256x128xf32> -> vector<256x128xf32>
    %75 = arith.addf %68, %74 : vector<256x128xf32>
    %c2_71 = arith.constant 2 : index
    %c8_72 = arith.constant 8 : index
    %c0_73 = arith.constant 0 : index
    %76 = vector.load %arg12[%c2_71, %c8_72, %c0_73] : memref<18x32x128xf32, #tpu.memory_space<vmem>>, vector<16x16x128xf32>
    %77 = vector.shape_cast %76 : vector<16x16x128xf32> to vector<256x128xf32>
    %78 = arith.truncf %77 : vector<256x128xf32> to vector<256x128xbf16>
    %c0_74 = arith.constant 0 : index
    %c7_75 = arith.constant 7 : index
    %c0_76 = arith.constant 0 : index
    %c0_77 = arith.constant 0 : index
    %79 = vector.load %arg6[%c0_74, %c7_75, %c0_76, %c0_77] : memref<1x9x128x128xbf16, #tpu.memory_space<vmem>>, vector<1x1x128x128xbf16>
    %80 = vector.shape_cast %79 : vector<1x1x128x128xbf16> to vector<128x128xbf16>
    %cst_78 = arith.constant dense<0.000000e+00> : vector<256x128xf32>
    %81 = tpu.matmul %78, %80, %cst_78 {dimension_numbers = #tpu.dot_dimension_numbers<[1], [0], [0], [1], [0, 0, 1, 1], [], []>} : vector<256x128xbf16>, vector<128x128xbf16>, vector<256x128xf32> -> vector<256x128xf32>
    %82 = arith.addf %75, %81 : vector<256x128xf32>
    %c2_79 = arith.constant 2 : index
    %c9_80 = arith.constant 9 : index
    %c0_81 = arith.constant 0 : index
    %83 = vector.load %arg12[%c2_79, %c9_80, %c0_81] : memref<18x32x128xf32, #tpu.memory_space<vmem>>, vector<16x16x128xf32>
    %84 = vector.shape_cast %83 : vector<16x16x128xf32> to vector<256x128xf32>
    %85 = arith.truncf %84 : vector<256x128xf32> to vector<256x128xbf16>
    %c0_82 = arith.constant 0 : index
    %c8_83 = arith.constant 8 : index
    %c0_84 = arith.constant 0 : index
    %c0_85 = arith.constant 0 : index
    %86 = vector.load %arg6[%c0_82, %c8_83, %c0_84, %c0_85] : memref<1x9x128x128xbf16, #tpu.memory_space<vmem>>, vector<1x1x128x128xbf16>
    %87 = vector.shape_cast %86 : vector<1x1x128x128xbf16> to vector<128x128xbf16>
    %cst_86 = arith.constant dense<0.000000e+00> : vector<256x128xf32>
    %88 = tpu.matmul %85, %87, %cst_86 {dimension_numbers = #tpu.dot_dimension_numbers<[1], [0], [0], [1], [0, 0, 1, 1], [], []>} : vector<256x128xbf16>, vector<128x128xbf16>, vector<256x128xf32> -> vector<256x128xf32>
    %89 = arith.addf %82, %88 : vector<256x128xf32>
    %c0_87 = arith.constant 0 : index
    %c0_88 = arith.constant 0 : index
    %c0_89 = arith.constant 0 : index
    %90 = vector.load %arg7[%c0_87, %c0_88, %c0_89] : memref<1x1x128xf32, #tpu.memory_space<vmem>>, vector<1x1x128xf32>
    %91 = vector.shape_cast %90 : vector<1x1x128xf32> to vector<1x128xf32>
    %92 = vector.broadcast %91 : vector<1x128xf32> to vector<256x128xf32>
    %93 = arith.addf %89, %92 : vector<256x128xf32>
    %cst_90 = arith.constant 0.000000e+00 : f32
    %94 = vector.broadcast %cst_90 : f32 to vector<256x128xf32>
    %95 = arith.maximumf %93, %94 : vector<256x128xf32>
    %96 = arith.addf %95, %12 : vector<256x128xf32>
    %97 = arith.truncf %96 : vector<256x128xf32> to vector<256x128xbf16>
    %c0_91 = arith.constant 0 : index
    %c0_92 = arith.constant 0 : index
    %98 = vector.load %arg8[%c0_91, %c0_92] : memref<128x128xbf16, #tpu.memory_space<vmem>>, vector<128x128xbf16>
    %cst_93 = arith.constant dense<0.000000e+00> : vector<256x128xf32>
    %99 = tpu.matmul %97, %98, %cst_93 {dimension_numbers = #tpu.dot_dimension_numbers<[1], [0], [0], [1], [0, 0, 1, 1], [], []>} : vector<256x128xbf16>, vector<128x128xbf16>, vector<256x128xf32> -> vector<256x128xf32>
    %100 = arith.truncf %13 : vector<256x128xf32> to vector<256x128xbf16>
    %c0_94 = arith.constant 0 : index
    %c0_95 = arith.constant 0 : index
    %101 = vector.load %arg9[%c0_94, %c0_95] : memref<128x128xbf16, #tpu.memory_space<vmem>>, vector<128x128xbf16>
    %cst_96 = arith.constant dense<0.000000e+00> : vector<256x128xf32>
    %102 = tpu.matmul %100, %101, %cst_96 {dimension_numbers = #tpu.dot_dimension_numbers<[1], [0], [0], [1], [0, 0, 1, 1], [], []>} : vector<256x128xbf16>, vector<128x128xbf16>, vector<256x128xf32> -> vector<256x128xf32>
    %103 = arith.addf %99, %102 : vector<256x128xf32>
    %c0_97 = arith.constant 0 : index
    %c0_98 = arith.constant 0 : index
    %104 = vector.load %arg10[%c0_97, %c0_98] : memref<1x128xf32, #tpu.memory_space<vmem>>, vector<1x128xf32>
    %105 = vector.broadcast %104 : vector<1x128xf32> to vector<256x128xf32>
    %106 = arith.addf %103, %105 : vector<256x128xf32>
    %cst_99 = arith.constant 0.000000e+00 : f32
    %107 = vector.broadcast %cst_99 : f32 to vector<256x128xf32>
    %108 = arith.maximumf %106, %107 : vector<256x128xf32>
    %109 = vector.shape_cast %108 : vector<256x128xf32> to vector<16x16x128xf32>
    %c0_100 = arith.constant 0 : index
    %c0_101 = arith.constant 0 : index
    %c0_102 = arith.constant 0 : index
    %c0_103 = arith.constant 0 : index
    %110 = vector.load %arg11[%c0_100, %c0_101, %c0_102, %c0_103] : memref<1x16x16x128xf32, #tpu.memory_space<vmem>>, vector<1x16x16x128xf32>
    %111 = vector.shape_cast %110 : vector<1x16x16x128xf32> to vector<16x16x128xf32>
    %112 = vector.shape_cast %109 : vector<16x16x128xf32> to vector<1x16x16x128xf32>
    tpu.vector_store %arg11[%c0_100, %c0_101, %c0_102, %c0_103], %112 {strides = array<i32>} : memref<1x16x16x128xf32, #tpu.memory_space<vmem>>, vector<1x16x16x128xf32>,
    return
  }
  func.func @transform_0(%arg0: i32) -> (i32, i32, i32, i32) {
    %c0_i32 = arith.constant 0 : i32
    %c0_i32_0 = arith.constant 0 : i32
    %c0_i32_1 = arith.constant 0 : i32
    %c0_i32_2 = arith.constant 0 : i32
    return %arg0, %c0_i32, %c0_i32_0, %c0_i32_1 : i32, i32, i32, i32
  }
  func.func @transform_1(%arg0: i32) -> (i32, i32) {
    %c0_i32 = arith.constant 0 : i32
    %c0_i32_0 = arith.constant 0 : i32
    %c0_i32_1 = arith.constant 0 : i32
    return %c0_i32, %c0_i32_0 : i32, i32
  }
  func.func @transform_2(%arg0: i32) -> (i32, i32) {
    %c0_i32 = arith.constant 0 : i32
    %c0_i32_0 = arith.constant 0 : i32
    %c0_i32_1 = arith.constant 0 : i32
    return %c0_i32, %c0_i32_0 : i32, i32
  }
  func.func @transform_3(%arg0: i32) -> (i32, i32, i32) {
    %c0_i32 = arith.constant 0 : i32
    %c0_i32_0 = arith.constant 0 : i32
    %c0_i32_1 = arith.constant 0 : i32
    %c0_i32_2 = arith.constant 0 : i32
    return %c0_i32, %c0_i32_0, %c0_i32_1 : i32, i32, i32
  }
  func.func @transform_4(%arg0: i32) -> (i32, i32, i32) {
    %c0_i32 = arith.constant 0 : i32
    %c0_i32_0 = arith.constant 0 : i32
    %c0_i32_1 = arith.constant 0 : i32
    %c0_i32_2 = arith.constant 0 : i32
    return %c0_i32, %c0_i32_0, %c0_i32_1 : i32, i32, i32
  }
  func.func @transform_5(%arg0: i32) -> (i32, i32, i32, i32) {
    %c0_i32 = arith.constant 0 : i32
    %c0_i32_0 = arith.constant 0 : i32
    %c0_i32_1 = arith.constant 0 : i32
    %c0_i32_2 = arith.constant 0 : i32
    %c0_i32_3 = arith.constant 0 : i32
    return %c0_i32, %c0_i32_0, %c0_i32_1, %c0_i32_2 : i32, i32, i32, i32
  }
  func.func @transform_6(%arg0: i32) -> (i32, i32, i32) {
    %c0_i32 = arith.constant 0 : i32
    %c0_i32_0 = arith.constant 0 : i32
    %c0_i32_1 = arith.constant 0 : i32
    %c0_i32_2 = arith.constant 0 : i32
    return %c0_i32, %c0_i32_0, %c0_i32_1 : i32, i32, i32
  }
  func.func @transform_7(%arg0: i32) -> (i32, i32) {
    %c0_i32 = arith.constant 0 : i32
    %c0_i32_0 = arith.constant 0 : i32
    %c0_i32_1 = arith.constant 0 : i32
    return %c0_i32, %c0_i32_0 : i32, i32
  }
  func.func @transform_8(%arg0: i32) -> (i32, i32) {
    %c0_i32 = arith.constant 0 : i32
    %c0_i32_0 = arith.constant 0 : i32
    %c0_i32_1 = arith.constant 0 : i32
    return %c0_i32, %c0_i32_0 : i32, i32
  }
  func.func @transform_9(%arg0: i32) -> (i32, i32) {
    %c0_i32 = arith.constant 0 : i32
    %c0_i32_0 = arith.constant 0 : i32
    %c0_i32_1 = arith.constant 0 : i32
    return %c0_i32, %c0_i32_0 : i32, i32
  }
  func.func @transform_10(%arg0: i32) -> (i32, i32, i32, i32) {
    %c0_i32 = arith.constant 0 : i32
    %c0_i32_0 = arith.constant 0 : i32
    %c0_i32_1 = arith.constant 0 : i32
    %c0_i32_2 = arith.constant 0 : i32
    return %arg0, %c0_i32, %c0_i32_0, %c0_i32_1 : i32, i32, i32, i32
  }
}

</mosaic_0001>

<llo_original>
// kernel: tpu_custom_call.1
$region0: #{tpu_custom_call.1}
  #allocation0 [shape = 'u32[]', space=smem, size = 0x4, offset = 0x4, fixed_abs, tag = 'smem constant byte address 0x4 - core index']
  #allocation1 [shape = 'u32[144,128]{1,0:T(1,128)}', space=vmem, size = 0x12000, scoped, tag = 'internal scratch']
  #allocation2 [shape = 'f32[18,32,128]{2,1,0:T(8,128)}', space=vmem, size = 0x48000, scoped, tag = 'scratch operand']
  %s0 = inlined_call_operand.hbm [shape: bf16[2,16,16,128], index: 0, kind: input, shape index: {}]
  %s1 = inlined_call_operand.hbm [shape: bf16[128,256], index: 1, kind: input, shape index: {}]
  %s2 = inlined_call_operand.vmem [shape: f32[1,256], index: 2, kind: input, shape index: {}]
  %s3 = inlined_call_operand.hbm [shape: bf16[1,128,128], index: 3, kind: input, shape index: {}]
  %s4 = inlined_call_operand.vmem [shape: f32[1,1,128], index: 4, kind: input, shape index: {}]
  %s5 = inlined_call_operand.hbm [shape: bf16[1,9,128,128], index: 5, kind: input, shape index: {}]
  %s6 = inlined_call_operand.vmem [shape: f32[1,1,128], index: 6, kind: input, shape index: {}]
  %s7 = inlined_call_operand.hbm [shape: bf16[128,128], index: 7, kind: input, shape index: {}]
  %s8 = inlined_call_operand.hbm [shape: bf16[128,128], index: 8, kind: input, shape index: {}]
  %s9 = inlined_call_operand.vmem [shape: f32[1,128], index: 9, kind: input, shape index: {}]
  %s10 = inlined_call_operand.hbm [shape: f32[2,16,16,128], index: 10, kind: output, shape index: {}]
  %s11 = sld [smem:[#allocation0]]
  $region97: #{tpu_custom_call.1} parent=0
    _
  %s13 = ssub.s32 1, %s11
  %s14 = scalar_select 0, %s13, %s11
  $region1: #{tpu_custom_call.1} parent=0
    #allocation3 [shape = 'u8[131072]{0}', space=vmem, size = 0x20000, scoped, tag = 'input window, operand 0']
    #allocation4 [shape = 's32[2]{0}', space=sflag, size = 0x8, scoped, tag = 'scoped memory for tpu_custom_call.1']
    #allocation5 [shape = 's32[2]{0}', space=sflag, size = 0x8, scoped, tag = 'scoped memory for tpu_custom_call.1']
    #allocation6 [shape = 'u8[65536]{0}', space=vmem, size = 0x10000, scoped, tag = 'input window, operand 1, single buffered']
    #allocation7 [shape = 's32[1]{0}', space=sflag, size = 0x4, scoped, tag = 'scoped memory for tpu_custom_call.1']
    #allocation8 [shape = 'u8[32768]{0}', space=vmem, size = 0x8000, scoped, tag = 'input window, operand 3, single buffered']
    #allocation9 [shape = 'u8[294912]{0}', space=vmem, size = 0x48000, scoped, tag = 'input window, operand 5, single buffered']
    #allocation10 [shape = 's32[1]{0}', space=sflag, size = 0x4, scoped, tag = 'scoped memory for tpu_custom_call.1']
    #allocation11 [shape = 'u8[32768]{0}', space=vmem, size = 0x8000, scoped, tag = 'input window, operand 7, single buffered']
    #allocation12 [shape = 'u8[32768]{0}', space=vmem, size = 0x8000, scoped, tag = 'input window, operand 8, single buffered']
    #allocation13 [shape = 's32[1]{0}', space=sflag, size = 0x4, scoped, tag = 'scoped memory for tpu_custom_call.1']
    #allocation14 [shape = 'u8[262144]{0}', space=vmem, size = 0x40000, scoped, tag = 'output window, operand 0']
    %15 = vsyncpa [#allocation4], 0
    %s16 = scalar_lea.sflag [#allocation4], 1
    %17 = vsyncpa %s16, 0
    %18 = vsyncpa [#allocation7], 0
    %19 = vsyncpa [#allocation10], 0
    %20 = vsyncpa [#allocation13], 0
    %21 = vsyncpa [#allocation5], 0
    %s22 = scalar_lea.sflag [#allocation5], 1
    %23 = vsyncpa %s22, 0
    loop: start=0, step=1, limit=4
    $region2: #{tpu_custom_call.1} parent=1 // loop_pre_header
      _
    $region3: #{tpu_custom_call.1} parent=1 // loop_header
      %s25 = sphi 0, %s29
      %p26 = scmp.ge.s32.totalorder %s25, 4
      %s35 = sphi 0, %s37
      %s38 = sphi 0, %s35
      %s39 = sphi 0, %s38
      %s55 = sphi 0, %s39
      %s59 = sphi 0, %s59
      %s61 = sphi 0, %s59
      %s62 = sphi 0, %s61
      %s76 = sphi 0, %s62
      %s80 = sphi 0, %s80
      %s82 = sphi 0, %s80
      %s83 = sphi 0, %s82
      %s97 = sphi 0, %s83
      %s101 = sphi 0, %s101
      %s103 = sphi 0, %s101
      %s104 = sphi 0, %s103
      %s118 = sphi 0, %s104
      %s122 = sphi 0, %s122
      %s124 = sphi 0, %s122
      %s125 = sphi 0, %s124
      %s139 = sphi 0, %s125
      %s143 = sphi 0, %s143
      %s145 = sphi 0, %s143
      %s146 = sphi 0, %s145
      %s160 = sphi 0, %s146
      %s164 = sphi 0, %s164
      %s166 = sphi 0, %s164
      %s167 = sphi 0, %s166
      %s181 = sphi 0, %s167
      %s185 = sphi 0, %s185
      %s187 = sphi 0, %s185
      %s188 = sphi 0, %s187
      %s202 = sphi 0, %s188
      %s206 = sphi 0, %s206
      %s208 = sphi 0, %s206
      %s209 = sphi 0, %s208
      %s223 = sphi 0, %s209
      %s227 = sphi 0, %s227
      %s229 = sphi 0, %s227
      %s230 = sphi 0, %s229
      %s244 = sphi 0, %s230
      %s250 = sphi 0, %s252
      %s253 = sphi 0, %s250
      %s254 = sphi 0, %s253
      %s270 = sphi 0, %s254
    $region4: #{tpu_custom_call.1} parent=1 // loop_header_branch
      %28 = sbr.rel (%p26) target = $region8
    $region5: #{tpu_custom_call.1} parent=1 // loop_body
      %s30 = ssub.s32 %s25, 1
      %s31 = ssub.s32 %s25, 2
      %s32 = sadd.s32 %s25, 1
      %s33 = ssub.s32 %s25, %s32
      %p34 = scmp.eq.s32.totalorder %s33, 0
      %s36 = sadd.s32 %s35, 1
      %s37 = scalar_select %p34, %s35, %s36
      %p40 = pneg %p34
      %p41 = scmp.eq.s32.totalorder %s25, 1
      %p42 = por %p40, %p41
      %p43 = scmp.ne.s32.totalorder %s35, %s38
      %p44 = scmp.eq.s32.totalorder %s25, 0
      %p45 = por %p43, %p44
      %p46 = scmp.ne.s32.totalorder %s35, %s38
      %p47 = scmp.eq.s32.totalorder %s30, 1
      %p48 = por %p46, %p47
      %p49 = scmp.ne.s32.totalorder %s38, %s39
      %p50 = scmp.eq.s32.totalorder %s30, 0
      %p51 = por %p49, %p50
      %p52 = scmp.ne.s32.totalorder %s38, %s39
      %p53 = scmp.eq.s32.totalorder %s31, 1
      %p54 = por %p52, %p53
      %p56 = scmp.ne.s32.totalorder %s39, %s55
      %p57 = scmp.eq.s32.totalorder %s31, 0
      %p58 = por %p56, %p57
      %s60 = sadd.s32 %s59, 1
      %p63 = scmp.eq.s32.totalorder %s25, 1
      %p64 = scmp.ne.s32.totalorder %s59, %s61
      %p65 = scmp.eq.s32.totalorder %s25, 0
      %p66 = por %p64, %p65
      %p67 = scmp.ne.s32.totalorder %s59, %s61
      %p68 = scmp.eq.s32.totalorder %s30, 1
      %p69 = por %p67, %p68
      %p70 = scmp.ne.s32.totalorder %s61, %s62
      %p71 = scmp.eq.s32.totalorder %s30, 0
      %p72 = por %p70, %p71
      %p73 = scmp.ne.s32.totalorder %s61, %s62
      %p74 = scmp.eq.s32.totalorder %s31, 1
      %p75 = por %p73, %p74
      %p77 = scmp.ne.s32.totalorder %s62, %s76
      %p78 = scmp.eq.s32.totalorder %s31, 0
      %p79 = por %p77, %p78
      %s81 = sadd.s32 %s80, 1
      %p84 = scmp.eq.s32.totalorder %s25, 1
      %p85 = scmp.ne.s32.totalorder %s80, %s82
      %p86 = scmp.eq.s32.totalorder %s25, 0
      %p87 = por %p85, %p86
      %p88 = scmp.ne.s32.totalorder %s80, %s82
      %p89 = scmp.eq.s32.totalorder %s30, 1
      %p90 = por %p88, %p89
      %p91 = scmp.ne.s32.totalorder %s82, %s83
      %p92 = scmp.eq.s32.totalorder %s30, 0
      %p93 = por %p91, %p92
      %p94 = scmp.ne.s32.totalorder %s82, %s83
      %p95 = scmp.eq.s32.totalorder %s31, 1
      %p96 = por %p94, %p95
      %p98 = scmp.ne.s32.totalorder %s83, %s97
      %p99 = scmp.eq.s32.totalorder %s31, 0
      %p100 = por %p98, %p99
      %s102 = sadd.s32 %s101, 1
      %p105 = scmp.eq.s32.totalorder %s25, 1
      %p106 = scmp.ne.s32.totalorder %s101, %s103
      %p107 = scmp.eq.s32.totalorder %s25, 0
      %p108 = por %p106, %p107
      %p109 = scmp.ne.s32.totalorder %s101, %s103
      %p110 = scmp.eq.s32.totalorder %s30, 1
      %p111 = por %p109, %p110
      %p112 = scmp.ne.s32.totalorder %s103, %s104
      %p113 = scmp.eq.s32.totalorder %s30, 0
      %p114 = por %p112, %p113
      %p115 = scmp.ne.s32.totalorder %s103, %s104
      %p116 = scmp.eq.s32.totalorder %s31, 1
      %p117 = por %p115, %p116
      %p119 = scmp.ne.s32.totalorder %s104, %s118
      %p120 = scmp.eq.s32.totalorder %s31, 0
      %p121 = por %p119, %p120
      %s123 = sadd.s32 %s122, 1
      %p126 = scmp.eq.s32.totalorder %s25, 1
      %p127 = scmp.ne.s32.totalorder %s122, %s124
      %p128 = scmp.eq.s32.totalorder %s25, 0
      %p129 = por %p127, %p128
      %p130 = scmp.ne.s32.totalorder %s122, %s124
      %p131 = scmp.eq.s32.totalorder %s30, 1
      %p132 = por %p130, %p131
      %p133 = scmp.ne.s32.totalorder %s124, %s125
      %p134 = scmp.eq.s32.totalorder %s30, 0
      %p135 = por %p133, %p134
      %p136 = scmp.ne.s32.totalorder %s124, %s125
      %p137 = scmp.eq.s32.totalorder %s31, 1
      %p138 = por %p136, %p137
      %p140 = scmp.ne.s32.totalorder %s125, %s139
      %p141 = scmp.eq.s32.totalorder %s31, 0
      %p142 = por %p140, %p141
      %s144 = sadd.s32 %s143, 1
      %p147 = scmp.eq.s32.totalorder %s25, 1
      %p148 = scmp.ne.s32.totalorder %s143, %s145
      %p149 = scmp.eq.s32.totalorder %s25, 0
      %p150 = por %p148, %p149
      %p151 = scmp.ne.s32.totalorder %s143, %s145
      %p152 = scmp.eq.s32.totalorder %s30, 1
      %p153 = por %p151, %p152
      %p154 = scmp.ne.s32.totalorder %s145, %s146
      %p155 = scmp.eq.s32.totalorder %s30, 0
      %p156 = por %p154, %p155
      %p157 = scmp.ne.s32.totalorder %s145, %s146
      %p158 = scmp.eq.s32.totalorder %s31, 1
      %p159 = por %p157, %p158
      %p161 = scmp.ne.s32.totalorder %s146, %s160
      %p162 = scmp.eq.s32.totalorder %s31, 0
      %p163 = por %p161, %p162
      %s165 = sadd.s32 %s164, 1
      %p168 = scmp.eq.s32.totalorder %s25, 1
      %p169 = scmp.ne.s32.totalorder %s164, %s166
      %p170 = scmp.eq.s32.totalorder %s25, 0
      %p171 = por %p169, %p170
      %p172 = scmp.ne.s32.totalorder %s164, %s166
      %p173 = scmp.eq.s32.totalorder %s30, 1
      %p174 = por %p172, %p173
      %p175 = scmp.ne.s32.totalorder %s166, %s167
      %p176 = scmp.eq.s32.totalorder %s30, 0
      %p177 = por %p175, %p176
      %p178 = scmp.ne.s32.totalorder %s166, %s167
      %p179 = scmp.eq.s32.totalorder %s31, 1
      %p180 = por %p178, %p179
      %p182 = scmp.ne.s32.totalorder %s167, %s181
      %p183 = scmp.eq.s32.totalorder %s31, 0
      %p184 = por %p182, %p183
      %s186 = sadd.s32 %s185, 1
      %p189 = scmp.eq.s32.totalorder %s25, 1
      %p190 = scmp.ne.s32.totalorder %s185, %s187
      %p191 = scmp.eq.s32.totalorder %s25, 0
      %p192 = por %p190, %p191
      %p193 = scmp.ne.s32.totalorder %s185, %s187
      %p194 = scmp.eq.s32.totalorder %s30, 1
      %p195 = por %p193, %p194
      %p196 = scmp.ne.s32.totalorder %s187, %s188
      %p197 = scmp.eq.s32.totalorder %s30, 0
      %p198 = por %p196, %p197
      %p199 = scmp.ne.s32.totalorder %s187, %s188
      %p200 = scmp.eq.s32.totalorder %s31, 1
      %p201 = por %p199, %p200
      %p203 = scmp.ne.s32.totalorder %s188, %s202
      %p204 = scmp.eq.s32.totalorder %s31, 0
      %p205 = por %p203, %p204
      %s207 = sadd.s32 %s206, 1
      %p210 = scmp.eq.s32.totalorder %s25, 1
      %p211 = scmp.ne.s32.totalorder %s206, %s208
      %p212 = scmp.eq.s32.totalorder %s25, 0
      %p213 = por %p211, %p212
      %p214 = scmp.ne.s32.totalorder %s206, %s208
      %p215 = scmp.eq.s32.totalorder %s30, 1
      %p216 = por %p214, %p215
      %p217 = scmp.ne.s32.totalorder %s208, %s209
      %p218 = scmp.eq.s32.totalorder %s30, 0
      %p219 = por %p217, %p218
      %p220 = scmp.ne.s32.totalorder %s208, %s209
      %p221 = scmp.eq.s32.totalorder %s31, 1
      %p222 = por %p220, %p221
      %p224 = scmp.ne.s32.totalorder %s209, %s223
      %p225 = scmp.eq.s32.totalorder %s31, 0
      %p226 = por %p224, %p225
      %s228 = sadd.s32 %s227, 1
      %p231 = scmp.eq.s32.totalorder %s25, 1
      %p232 = scmp.ne.s32.totalorder %s227, %s229
      %p233 = scmp.eq.s32.totalorder %s25, 0
      %p234 = por %p232, %p233
      %p235 = scmp.ne.s32.totalorder %s227, %s229
      %p236 = scmp.eq.s32.totalorder %s30, 1
      %p237 = por %p235, %p236
      %p238 = scmp.ne.s32.totalorder %s229, %s230
      %p239 = scmp.eq.s32.totalorder %s30, 0
      %p240 = por %p238, %p239
      %p241 = scmp.ne.s32.totalorder %s229, %s230
      %p242 = scmp.eq.s32.totalorder %s31, 1
      %p243 = por %p241, %p242
      %p245 = scmp.ne.s32.totalorder %s230, %s244
      %p246 = scmp.eq.s32.totalorder %s31, 0
      %p247 = por %p245, %p246
      %s248 = ssub.s32 %s25, %s32
      %p249 = scmp.eq.s32.totalorder %s248, 0
      %s251 = sadd.s32 %s250, 1
      %s252 = scalar_select %p249, %s250, %s251
      %p255 = pneg %p249
      %p256 = scmp.eq.s32.totalorder %s25, 1
      %p257 = por %p255, %p256
      %p258 = scmp.ne.s32.totalorder %s250, %s253
      %p259 = scmp.eq.s32.totalorder %s25, 0
      %p260 = por %p258, %p259
      %p261 = scmp.ne.s32.totalorder %s250, %s253
      %p262 = scmp.eq.s32.totalorder %s30, 1
      %p263 = por %p261, %p262
      %p264 = scmp.ne.s32.totalorder %s253, %s254
      %p265 = scmp.eq.s32.totalorder %s30, 0
      %p266 = por %p264, %p265
      %p267 = scmp.ne.s32.totalorder %s253, %s254
      %p268 = scmp.eq.s32.totalorder %s31, 1
      %p269 = por %p267, %p268
      %p271 = scmp.ne.s32.totalorder %s254, %s270
      %p272 = scmp.eq.s32.totalorder %s31, 0
      %p273 = por %p271, %p272
      %p274 = scmp.le.s32.totalorder 1, %s25
      %p275 = scmp.lt.s32.totalorder %s25, 3
      %p276 = pnand %p274, %p275
      %p277 = pneg %p276
      // Predicated region
      $region9: #{tpu_custom_call.1} parent=5 // pred_check
        _
      $region10: #{tpu_custom_call.1} parent=5 // pred_check_branch
        %279 = sbr.rel (%p276) target = $region12
      $region11: #{tpu_custom_call.1} parent=5 // pred_region
        %s280 = ssub.s32 %s25, 1
        // Predicated region
        $region13: #{tpu_custom_call.1} parent=11 // pred_check
          %p281 = pneg %p72
        $region14: #{tpu_custom_call.1} parent=11 // pred_check_branch
          %283 = sbr.rel (%p281) target = $region16
        $region15: #{tpu_custom_call.1} parent=11 // pred_region
          %s285 = ssub.s32 2048, 2048
          %286 = vsyncadd [#allocation7], %s285
          %s287 = sshll.u32 [#allocation6], 4
          %s288 = int_to_ptr.vmem [resolvable:$true] %s287
          %293 = dma.hbm_to_vmem [thread:$0]  %s1, 2048, %s288, [#allocation7], 128, 128, 8
        $region16: #{tpu_custom_call.1} parent=11 // pred_fallthru
          _
        // Predicated region
        $region17: #{tpu_custom_call.1} parent=11 // pred_check
          %p294 = pneg %p93
        $region18: #{tpu_custom_call.1} parent=11 // pred_check_branch
          %296 = sbr.rel (%p294) target = $region20
        $region19: #{tpu_custom_call.1} parent=11 // pred_region
          _
        $region20: #{tpu_custom_call.1} parent=11 // pred_fallthru
          _
        // Predicated region
        $region21: #{tpu_custom_call.1} parent=11 // pred_check
          %p297 = pneg %p114
        $region22: #{tpu_custom_call.1} parent=11 // pred_check_branch
          %299 = sbr.rel (%p297) target = $region24
        $region23: #{tpu_custom_call.1} parent=11 // pred_region
          %s301 = ssub.s32 1024, 1024
          %302 = vsyncadd [#allocation7], %s301
          %s303 = sshll.u32 [#allocation8], 4
          %s304 = int_to_ptr.vmem [resolvable:$true] %s303
          %309 = dma.hbm_to_vmem [thread:$0]  %s3, 1024, %s304, [#allocation7], 64, 64, 4
        $region24: #{tpu_custom_call.1} parent=11 // pred_fallthru
          _
        // Predicated region
        $region25: #{tpu_custom_call.1} parent=11 // pred_check
          %p310 = pneg %p135
        $region26: #{tpu_custom_call.1} parent=11 // pred_check_branch
          %312 = sbr.rel (%p310) target = $region28
        $region27: #{tpu_custom_call.1} parent=11 // pred_region
          _
        $region28: #{tpu_custom_call.1} parent=11 // pred_fallthru
          _
        // Predicated region
        $region29: #{tpu_custom_call.1} parent=11 // pred_check
          %p313 = pneg %p156
        $region30: #{tpu_custom_call.1} parent=11 // pred_check_branch
          %315 = sbr.rel (%p313) target = $region32
        $region31: #{tpu_custom_call.1} parent=11 // pred_region
          %s317 = ssub.s32 9216, 9216
          %318 = vsyncadd [#allocation10], %s317
          %s319 = sshll.u32 [#allocation9], 4
          %s320 = int_to_ptr.vmem [resolvable:$true] %s319
          %325 = dma.hbm_to_vmem [thread:$0]  %s5, 9216, %s320, [#allocation10], 64, 64, 4
        $region32: #{tpu_custom_call.1} parent=11 // pred_fallthru
          _
        // Predicated region
        $region33: #{tpu_custom_call.1} parent=11 // pred_check
          %p326 = pneg %p177
        $region34: #{tpu_custom_call.1} parent=11 // pred_check_branch
          %328 = sbr.rel (%p326) target = $region36
        $region35: #{tpu_custom_call.1} parent=11 // pred_region
          _
        $region36: #{tpu_custom_call.1} parent=11 // pred_fallthru
          _
        // Predicated region
        $region37: #{tpu_custom_call.1} parent=11 // pred_check
          %p329 = pneg %p198
        $region38: #{tpu_custom_call.1} parent=11 // pred_check_branch
          %331 = sbr.rel (%p329) target = $region40
        $region39: #{tpu_custom_call.1} parent=11 // pred_region
          %s333 = ssub.s32 1024, 1024
          %334 = vsyncadd [#allocation10], %s333
          %s335 = sshll.u32 [#allocation11], 4
          %s336 = int_to_ptr.vmem [resolvable:$true] %s335
          %341 = dma.hbm_to_vmem [thread:$0]  %s7, 1024, %s336, [#allocation10], 64, 64, 4
        $region40: #{tpu_custom_call.1} parent=11 // pred_fallthru
          _
        // Predicated region
        $region41: #{tpu_custom_call.1} parent=11 // pred_check
          %p342 = pneg %p219
        $region42: #{tpu_custom_call.1} parent=11 // pred_check_branch
          %344 = sbr.rel (%p342) target = $region44
        $region43: #{tpu_custom_call.1} parent=11 // pred_region
          %s346 = ssub.s32 1024, 1024
          %347 = vsyncadd [#allocation13], %s346
          %s348 = sshll.u32 [#allocation12], 4
          %s349 = int_to_ptr.vmem [resolvable:$true] %s348
          %354 = dma.hbm_to_vmem [thread:$0]  %s8, 1024, %s349, [#allocation13], 64, 64, 4
        $region44: #{tpu_custom_call.1} parent=11 // pred_fallthru
          _
        // Predicated region
        $region45: #{tpu_custom_call.1} parent=11 // pred_check
          %p355 = pneg %p240
        $region46: #{tpu_custom_call.1} parent=11 // pred_check_branch
          %357 = sbr.rel (%p355) target = $region48
        $region47: #{tpu_custom_call.1} parent=11 // pred_region
          _
        $region48: #{tpu_custom_call.1} parent=11 // pred_fallthru
          _
      $region12: #{tpu_custom_call.1} parent=5 // pred_fallthru
        _
      %p358 = scmp.lt.s32.totalorder %s25, 2
      // Predicated region
      $region49: #{tpu_custom_call.1} parent=5 // pred_check
        %p359 = pneg %p358
      $region50: #{tpu_custom_call.1} parent=5 // pred_check_branch
        %361 = sbr.rel (%p359) target = $region52
      $region51: #{tpu_custom_call.1} parent=5 // pred_region
        // Predicated region
        $region53: #{tpu_custom_call.1} parent=51 // pred_check
          %p362 = pneg %p45
        $region54: #{tpu_custom_call.1} parent=51 // pred_check_branch
          %364 = sbr.rel (%p362) target = $region56
        $region55: #{tpu_custom_call.1} parent=51 // pred_region
          %s365 = sand.u32 %s35, 1
          %s366 = scalar_lea.sflag [#allocation4], %s365
          %s367 = sand.u32 %s35, 1
          %s368 = smul.addr %s367, 128
          %s369 = scalar_lea.vmem [#allocation3], %s368
          %s371 = ssub.s32 2048, 2048
          %372 = vsyncadd %s366, %s371
          %s373 = smul.addr %s25, 32
          %s374 = smul.addr %s373, 64
          %s375 = scalar_lea.hbm %s0, %s374
          %s376 = sshll.u32 %s369, 4
          %s377 = int_to_ptr.vmem [resolvable:$true] %s376
          %382 = dma.hbm_to_vmem [thread:$0]  %s375, 2048, %s377, %s366, 64, 64, 4
        $region56: #{tpu_custom_call.1} parent=51 // pred_fallthru
          _
      $region52: #{tpu_custom_call.1} parent=5 // pred_fallthru
        _
      %p383 = scmp.le.s32.totalorder 1, %s25
      %p384 = scmp.lt.s32.totalorder %s25, 3
      %p385 = pnand %p383, %p384
      %p386 = pneg %p385
      // Predicated region
      $region57: #{tpu_custom_call.1} parent=5 // pred_check
        _
      $region58: #{tpu_custom_call.1} parent=5 // pred_check_branch
        %388 = sbr.rel (%p385) target = $region60
      $region59: #{tpu_custom_call.1} parent=5 // pred_region
        %s389 = ssub.s32 %s25, 1
        %s390 = sand.u32 %s38, 1
        %s391 = scalar_lea.sflag [#allocation4], %s390
        %s392 = sand.u32 %s38, 1
        %s393 = smul.addr %s392, 128
        %s394 = scalar_lea.vmem [#allocation3], %s393
        // Predicated region
        $region61: #{tpu_custom_call.1} parent=59 // pred_check
          %p395 = pneg %p51
        $region62: #{tpu_custom_call.1} parent=59 // pred_check_branch
          %397 = sbr.rel (%p395) target = $region64
        $region63: #{tpu_custom_call.1} parent=59 // pred_region
          %398 = dma.done %s391, 2048
        $region64: #{tpu_custom_call.1} parent=59 // pred_fallthru
          _
        // Predicated region
        $region65: #{tpu_custom_call.1} parent=59 // pred_check
          %p399 = pneg %p72
        $region66: #{tpu_custom_call.1} parent=59 // pred_check_branch
          %401 = sbr.rel (%p399) target = $region68
        $region67: #{tpu_custom_call.1} parent=59 // pred_region
          %402 = dma.done [#allocation7], 2048
        $region68: #{tpu_custom_call.1} parent=59 // pred_fallthru
          _
        // Predicated region
        $region69: #{tpu_custom_call.1} parent=59 // pred_check
          %p403 = pneg %p114
        $region70: #{tpu_custom_call.1} parent=59 // pred_check_branch
          %405 = sbr.rel (%p403) target = $region72
        $region71: #{tpu_custom_call.1} parent=59 // pred_region
          %406 = dma.done [#allocation7], 1024
        $region72: #{tpu_custom_call.1} parent=59 // pred_fallthru
          _
        // Predicated region
        $region73: #{tpu_custom_call.1} parent=59 // pred_check
          %p407 = pneg %p156
        $region74: #{tpu_custom_call.1} parent=59 // pred_check_branch
          %409 = sbr.rel (%p407) target = $region76
        $region75: #{tpu_custom_call.1} parent=59 // pred_region
          %410 = dma.done [#allocation10], 9216
        $region76: #{tpu_custom_call.1} parent=59 // pred_fallthru
          _
        // Predicated region
        $region77: #{tpu_custom_call.1} parent=59 // pred_check
          %p411 = pneg %p198
        $region78: #{tpu_custom_call.1} parent=59 // pred_check_branch
          %413 = sbr.rel (%p411) target = $region80
        $region79: #{tpu_custom_call.1} parent=59 // pred_region
          %414 = dma.done [#allocation10], 1024
        $region80: #{tpu_custom_call.1} parent=59 // pred_fallthru
          _
        // Predicated region
        $region81: #{tpu_custom_call.1} parent=59 // pred_check
          %p415 = pneg %p219
        $region82: #{tpu_custom_call.1} parent=59 // pred_check_branch
          %417 = sbr.rel (%p415) target = $region84
        $region83: #{tpu_custom_call.1} parent=59 // pred_region
          %418 = dma.done [#allocation13], 1024
        $region84: #{tpu_custom_call.1} parent=59 // pred_fallthru
          _
        %s419 = sand.u32 %s38, 1
        %s420 = scalar_lea.sflag [#allocation4], %s419
        %s421 = sand.u32 %s38, 1
        %s422 = smul.addr %s421, 128
        %s423 = scalar_lea.vmem [#allocation3], %s422
        %p424 = pneg %p51
        %p425 = pneg %p48
        %p426 = pneg %p72
        %p427 = pneg %p69
        %p428 = pneg %p93
        %p429 = pneg %p90
        %p430 = pneg %p114
        %p431 = pneg %p111
        %p432 = pneg %p135
        %p433 = pneg %p132
        %p434 = pneg %p156
        %p435 = pneg %p153
        %p436 = pneg %p177
        %p437 = pneg %p174
        %p438 = pneg %p198
        %p439 = pneg %p195
        %p440 = pneg %p219
        %p441 = pneg %p216
        %p442 = pneg %p240
        %p443 = pneg %p237
        %p444 = pneg %p266
        %p445 = pneg %p263
        %s446 = sand.u32 %s253, 1
        %s447 = scalar_lea.sflag [#allocation5], %s446
        %s448 = sand.u32 %s253, 1
        %s449 = smul.addr %s448, 256
        %s450 = scalar_lea.vmem [#allocation14], %s449
        %452 = vst [vmem:[#allocation2] sm:$0xff] 0.0
        %453 = vst [vmem:[#allocation2 + $0x8] sm:$0xff] 0.0
        %454 = vst [vmem:[#allocation2 + $0x10] sm:$0xff] 0.0
        %455 = vst [vmem:[#allocation2 + $0x18] sm:$0xff] 0.0
        %456 = vst [vmem:[#allocation2 + $0x20] sm:$0xff] 0.0
        %457 = vst [vmem:[#allocation2 + $0x28] sm:$0xff] 0.0
        %458 = vst [vmem:[#allocation2 + $0x30] sm:$0xff] 0.0
        %459 = vst [vmem:[#allocation2 + $0x38] sm:$0xff] 0.0
        %460 = vst [vmem:[#allocation2 + $0x40] sm:$0xff] 0.0
        %461 = vst [vmem:[#allocation2 + $0x48] sm:$0xff] 0.0
        %462 = vst [vmem:[#allocation2 + $0x50] sm:$0xff] 0.0
        %463 = vst [vmem:[#allocation2 + $0x58] sm:$0xff] 0.0
        %464 = vst [vmem:[#allocation2 + $0x60] sm:$0xff] 0.0
        %465 = vst [vmem:[#allocation2 + $0x68] sm:$0xff] 0.0
        %466 = vst [vmem:[#allocation2 + $0x70] sm:$0xff] 0.0
        %467 = vst [vmem:[#allocation2 + $0x78] sm:$0xff] 0.0
        %468 = vst [vmem:[#allocation2 + $0x80] sm:$0xff] 0.0
        %469 = vst [vmem:[#allocation2 + $0x88] sm:$0xff] 0.0
        %470 = vst [vmem:[#allocation2 + $0x90] sm:$0xff] 0.0
        %471 = vst [vmem:[#allocation2 + $0x98] sm:$0xff] 0.0
        %472 = vst [vmem:[#allocation2 + $0xa0] sm:$0xff] 0.0
        %473 = vst [vmem:[#allocation2 + $0xa8] sm:$0xff] 0.0
        %474 = vst [vmem:[#allocation2 + $0xb0] sm:$0xff] 0.0
        %475 = vst [vmem:[#allocation2 + $0xb8] sm:$0xff] 0.0
        %476 = vst [vmem:[#allocation2 + $0xc0] sm:$0xff] 0.0
        %477 = vst [vmem:[#allocation2 + $0xc8] sm:$0xff] 0.0
        %478 = vst [vmem:[#allocation2 + $0xd0] sm:$0xff] 0.0
        %479 = vst [vmem:[#allocation2 + $0xd8] sm:$0xff] 0.0
        %480 = vst [vmem:[#allocation2 + $0xe0] sm:$0xff] 0.0
        %481 = vst [vmem:[#allocation2 + $0xe8] sm:$0xff] 0.0
        %482 = vst [vmem:[#allocation2 + $0xf0] sm:$0xff] 0.0
        %483 = vst [vmem:[#allocation2 + $0xf8] sm:$0xff] 0.0
        %484 = vst [vmem:[#allocation2 + $0x100] sm:$0xff] 0.0
        %485 = vst [vmem:[#allocation2 + $0x108] sm:$0xff] 0.0
        %486 = vst [vmem:[#allocation2 + $0x110] sm:$0xff] 0.0
        %487 = vst [vmem:[#allocation2 + $0x118] sm:$0xff] 0.0
        %488 = vst [vmem:[#allocation2 + $0x120] sm:$0xff] 0.0
        %489 = vst [vmem:[#allocation2 + $0x128] sm:$0xff] 0.0
        %490 = vst [vmem:[#allocation2 + $0x130] sm:$0xff] 0.0
        %491 = vst [vmem:[#allocation2 + $0x138] sm:$0xff] 0.0
        %492 = vst [vmem:[#allocation2 + $0x140] sm:$0xff] 0.0
        %493 = vst [vmem:[#allocation2 + $0x148] sm:$0xff] 0.0
        %494 = vst [vmem:[#allocation2 + $0x150] sm:$0xff] 0.0
        %495 = vst [vmem:[#allocation2 + $0x158] sm:$0xff] 0.0
        %496 = vst [vmem:[#allocation2 + $0x160] sm:$0xff] 0.0
        %497 = vst [vmem:[#allocation2 + $0x168] sm:$0xff] 0.0
        %498 = vst [vmem:[#allocation2 + $0x170] sm:$0xff] 0.0
        %499 = vst [vmem:[#allocation2 + $0x178] sm:$0xff] 0.0
        %500 = vst [vmem:[#allocation2 + $0x180] sm:$0xff] 0.0
        %501 = vst [vmem:[#allocation2 + $0x188] sm:$0xff] 0.0
        %502 = vst [vmem:[#allocation2 + $0x190] sm:$0xff] 0.0
        %503 = vst [vmem:[#allocation2 + $0x198] sm:$0xff] 0.0
        %504 = vst [vmem:[#allocation2 + $0x1a0] sm:$0xff] 0.0
        %505 = vst [vmem:[#allocation2 + $0x1a8] sm:$0xff] 0.0
        %506 = vst [vmem:[#allocation2 + $0x1b0] sm:$0xff] 0.0
        %507 = vst [vmem:[#allocation2 + $0x1b8] sm:$0xff] 0.0
        %508 = vst [vmem:[#allocation2 + $0x1c0] sm:$0xff] 0.0
        %509 = vst [vmem:[#allocation2 + $0x1c8] sm:$0xff] 0.0
        %510 = vst [vmem:[#allocation2 + $0x1d0] sm:$0xff] 0.0
        %511 = vst [vmem:[#allocation2 + $0x1d8] sm:$0xff] 0.0
        %512 = vst [vmem:[#allocation2 + $0x1e0] sm:$0xff] 0.0
        %513 = vst [vmem:[#allocation2 + $0x1e8] sm:$0xff] 0.0
        %514 = vst [vmem:[#allocation2 + $0x1f0] sm:$0xff] 0.0
        %515 = vst [vmem:[#allocation2 + $0x1f8] sm:$0xff] 0.0
        %516 = vst [vmem:[#allocation2 + $0x200] sm:$0xff] 0.0
        %517 = vst [vmem:[#allocation2 + $0x208] sm:$0xff] 0.0
        %518 = vst [vmem:[#allocation2 + $0x210] sm:$0xff] 0.0
        %519 = vst [vmem:[#allocation2 + $0x218] sm:$0xff] 0.0
        %520 = vst [vmem:[#allocation2 + $0x220] sm:$0xff] 0.0
        %521 = vst [vmem:[#allocation2 + $0x228] sm:$0xff] 0.0
        %522 = vst [vmem:[#allocation2 + $0x230] sm:$0xff] 0.0
        %523 = vst [vmem:[#allocation2 + $0x238] sm:$0xff] 0.0
        %v524 = vld [vmem:[%s394] sm:$0xf]
        %v525 = vld [vmem:[%s394 + $0x4] sm:$0xf]
        %v526 = vld [vmem:[%s394 + $0x8] sm:$0xf]
        %v527 = vld [vmem:[%s394 + $0xc] sm:$0xf]
        %v528 = vld [vmem:[%s394 + $0x10] sm:$0xf]
        %v529 = vld [vmem:[%s394 + $0x14] sm:$0xf]
        %v530 = vld [vmem:[%s394 + $0x18] sm:$0xf]
        %v531 = vld [vmem:[%s394 + $0x1c] sm:$0xf]
        %v532 = vld [vmem:[%s394 + $0x20] sm:$0xf]
        %v533 = vld [vmem:[%s394 + $0x24] sm:$0xf]
        %v534 = vld [vmem:[%s394 + $0x28] sm:$0xf]
        %v535 = vld [vmem:[%s394 + $0x2c] sm:$0xf]
        %v536 = vld [vmem:[%s394 + $0x30] sm:$0xf]
        %v537 = vld [vmem:[%s394 + $0x34] sm:$0xf]
        %v538 = vld [vmem:[%s394 + $0x38] sm:$0xf]
        %v539 = vld [vmem:[%s394 + $0x3c] sm:$0xf]
        %v540 = vld [vmem:[%s394 + $0x40] sm:$0xf]
        %v541 = vld [vmem:[%s394 + $0x44] sm:$0xf]
        %v542 = vld [vmem:[%s394 + $0x48] sm:$0xf]
        %v543 = vld [vmem:[%s394 + $0x4c] sm:$0xf]
        %v544 = vld [vmem:[%s394 + $0x50] sm:$0xf]
        %v545 = vld [vmem:[%s394 + $0x54] sm:$0xf]
        %v546 = vld [vmem:[%s394 + $0x58] sm:$0xf]
        %v547 = vld [vmem:[%s394 + $0x5c] sm:$0xf]
        %v548 = vld [vmem:[%s394 + $0x60] sm:$0xf]
        %v549 = vld [vmem:[%s394 + $0x64] sm:$0xf]
        %v550 = vld [vmem:[%s394 + $0x68] sm:$0xf]
        %v551 = vld [vmem:[%s394 + $0x6c] sm:$0xf]
        %v552 = vld [vmem:[%s394 + $0x70] sm:$0xf]
        %v553 = vld [vmem:[%s394 + $0x74] sm:$0xf]
        %v554 = vld [vmem:[%s394 + $0x78] sm:$0xf]
        %v555 = vld [vmem:[%s394 + $0x7c] sm:$0xf]
        %v556 = vld [vmem:[#allocation6] sm:$0xff]
        %v557 = vld [vmem:[#allocation6 + $0x8] sm:$0xff]
        %v558 = vld [vmem:[#allocation6 + $0x10] sm:$0xff]
        %v559 = vld [vmem:[#allocation6 + $0x18] sm:$0xff]
        %v560 = vld [vmem:[#allocation6 + $0x20] sm:$0xff]
        %v561 = vld [vmem:[#allocation6 + $0x28] sm:$0xff]
        %v562 = vld [vmem:[#allocation6 + $0x30] sm:$0xff]
        %v563 = vld [vmem:[#allocation6 + $0x38] sm:$0xff]
        %v564 = vld [vmem:[#allocation6 + $0x40] sm:$0xff]
        %v565 = vld [vmem:[#allocation6 + $0x48] sm:$0xff]
        %v566 = vld [vmem:[#allocation6 + $0x50] sm:$0xff]
        %v567 = vld [vmem:[#allocation6 + $0x58] sm:$0xff]
        %v568 = vld [vmem:[#allocation6 + $0x60] sm:$0xff]
        %v569 = vld [vmem:[#allocation6 + $0x68] sm:$0xff]
        %v570 = vld [vmem:[#allocation6 + $0x70] sm:$0xff]
        %v571 = vld [vmem:[#allocation6 + $0x78] sm:$0xff]
        %v572 = vld [vmem:[%s2] sm:$0x3]
        %v574 = vlaneseq
        %v575 = vshrl.u32 %v574, 7
        %v576 = vsub.s32 0, %v575
        %v577 = vrot.slane %v572, %v576
        %v578 = vlaneseq
        %v579 = vshrl.u32 %v578, 7
        %v580 = vsub.s32 1, %v579
        %v581 = vrot.slane %v572, %v580
        %v616 = vunpack.c.l.b16 %v524
        %v617 = vunpack.c.l.b16 %v525
        %v618 = vunpack.c.l.b16 %v526
        %v619 = vunpack.c.l.b16 %v527
        %v620 = vunpack.c.l.b16 %v528
        %v621 = vunpack.c.l.b16 %v529
        %v622 = vunpack.c.l.b16 %v530
        %v623 = vunpack.c.l.b16 %v531
        %v624 = vunpack.c.l.b16 %v532
        %v625 = vunpack.c.l.b16 %v533
        %v626 = vunpack.c.l.b16 %v534
        %v627 = vunpack.c.l.b16 %v535
        %v628 = vunpack.c.l.b16 %v536
        %v629 = vunpack.c.l.b16 %v537
        %v630 = vunpack.c.l.b16 %v538
        %v631 = vunpack.c.l.b16 %v539
        %v632 = vunpack.c.l.b16 %v540
        %v633 = vunpack.c.l.b16 %v541
        %v634 = vunpack.c.l.b16 %v542
        %v635 = vunpack.c.l.b16 %v543
        %v636 = vunpack.c.l.b16 %v544
        %v637 = vunpack.c.l.b16 %v545
        %v638 = vunpack.c.l.b16 %v546
        %v639 = vunpack.c.l.b16 %v547
        %v640 = vunpack.c.l.b16 %v548
        %v641 = vunpack.c.l.b16 %v549
        %v642 = vunpack.c.l.b16 %v550
        %v643 = vunpack.c.l.b16 %v551
        %v644 = vunpack.c.l.b16 %v552
        %v645 = vunpack.c.l.b16 %v553
        %v646 = vunpack.c.l.b16 %v554
        %v647 = vunpack.c.l.b16 %v555
        %v648 = vpack.c.b16 %v617, %v616
        %v649 = vpack.c.b16 %v619, %v618
        %v650 = vpack.c.b16 %v621, %v620
        %v651 = vpack.c.b16 %v623, %v622
        %v652 = vpack.c.b16 %v625, %v624
        %v653 = vpack.c.b16 %v627, %v626
        %v654 = vpack.c.b16 %v629, %v628
        %v655 = vpack.c.b16 %v631, %v630
        %v656 = vpack.c.b16 %v633, %v632
        %v657 = vpack.c.b16 %v635, %v634
        %v658 = vpack.c.b16 %v637, %v636
        %v659 = vpack.c.b16 %v639, %v638
        %v660 = vpack.c.b16 %v641, %v640
        %v661 = vpack.c.b16 %v643, %v642
        %v662 = vpack.c.b16 %v645, %v644
        %v663 = vpack.c.b16 %v647, %v646
        %v696 = vunpack.c.l.b16 %v556
        %v697 = vunpack.c.h.b16 %v556
        %v698 = vunpack.c.l.b16 %v557
        %v699 = vunpack.c.h.b16 %v557
        %v700 = vunpack.c.l.b16 %v558
        %v701 = vunpack.c.h.b16 %v558
        %v702 = vunpack.c.l.b16 %v559
        %v703 = vunpack.c.h.b16 %v559
        %v704 = vunpack.c.l.b16 %v560
        %v705 = vunpack.c.h.b16 %v560
        %v706 = vunpack.c.l.b16 %v561
        %v707 = vunpack.c.h.b16 %v561
        %v708 = vunpack.c.l.b16 %v562
        %v709 = vunpack.c.h.b16 %v562
        %v710 = vunpack.c.l.b16 %v563
        %v711 = vunpack.c.h.b16 %v563
        %v712 = vunpack.c.l.b16 %v564
        %v713 = vunpack.c.h.b16 %v564
        %v714 = vunpack.c.l.b16 %v565
        %v715 = vunpack.c.h.b16 %v565
        %v716 = vunpack.c.l.b16 %v566
        %v717 = vunpack.c.h.b16 %v566
        %v718 = vunpack.c.l.b16 %v567
        %v719 = vunpack.c.h.b16 %v567
        %v720 = vunpack.c.l.b16 %v568
        %v721 = vunpack.c.h.b16 %v568
        %v722 = vunpack.c.l.b16 %v569
        %v723 = vunpack.c.h.b16 %v569
        %v724 = vunpack.c.l.b16 %v570
        %v725 = vunpack.c.h.b16 %v570
        %v726 = vunpack.c.l.b16 %v571
        %v727 = vunpack.c.h.b16 %v571
        %v728 = vpack.c.b16 %v698, %v696
        %v729 = vpack.c.b16 %v699, %v697
        %v730 = vpack.c.b16 %v702, %v700
        %v731 = vpack.c.b16 %v703, %v701
        %v732 = vpack.c.b16 %v706, %v704
        %v733 = vpack.c.b16 %v707, %v705
        %v734 = vpack.c.b16 %v710, %v708
        %v735 = vpack.c.b16 %v711, %v709
        %v736 = vpack.c.b16 %v714, %v712
        %v737 = vpack.c.b16 %v715, %v713
        %v738 = vpack.c.b16 %v718, %v716
        %v739 = vpack.c.b16 %v719, %v717
        %v740 = vpack.c.b16 %v722, %v720
        %v741 = vpack.c.b16 %v723, %v721
        %v742 = vpack.c.b16 %v726, %v724
        %v743 = vpack.c.b16 %v727, %v725
        %760 = vmatprep.subr.bf16.mxu0 %v729
        %761 = vmatpush1.bf16.msra.mxu0 %v728
        %762 = vmatprep.subr.bf16.mxu0 %v731
        %763 = vmatpush1.bf16.msra.mxu0 %v730
        %764 = vmatprep.subr.bf16.mxu0 %v733
        %765 = vmatpush1.bf16.msra.mxu0 %v732
        %766 = vmatprep.subr.bf16.mxu0 %v735
        %767 = vmatpush1.bf16.msra.mxu0 %v734
        %768 = vmatprep.subr.bf16.mxu0 %v737
        %769 = vmatpush1.bf16.msra.mxu0 %v736
        %770 = vmatprep.subr.bf16.mxu0 %v739
        %771 = vmatpush1.bf16.msra.mxu0 %v738
        %772 = vmatprep.subr.bf16.mxu0 %v741
        %773 = vmatpush1.bf16.msra.mxu0 %v740
        %774 = vmatprep.subr.bf16.mxu0 %v743
        %775 = vmatpush1.bf16.msra.mxu0 %v742
        %776 = vmatprep.subr.bf16.mxu0 0
        %777 = vmatpush1.bf16.msra.mxu0 0
        %778 = vmatprep.subr.bf16.mxu0 0
        %779 = vmatpush1.bf16.msra.mxu0 0
        %780 = vmatprep.subr.bf16.mxu0 0
        %781 = vmatpush1.bf16.msra.mxu0 0
        %782 = vmatprep.subr.bf16.mxu0 0
        %783 = vmatpush1.bf16.msra.mxu0 0
        %784 = vmatprep.subr.bf16.mxu0 0
        %785 = vmatpush1.bf16.msra.mxu0 0
        %786 = vmatprep.subr.bf16.mxu0 0
        %787 = vmatpush1.bf16.msra.mxu0 0
        %788 = vmatprep.subr.bf16.mxu0 0
        %789 = vmatpush1.bf16.msra.mxu0 0
        %790 = vmatprep.subr.bf16.mxu0 0
        %791 = vmatpush1.bf16.msra.mxu0 0
        %792 = vmatprep.mubr.bf16.mxu0 0
        %793 = vmatmul.mubr.bf16.gmra.mrb[0].mxu0 %v648
        %v794 = vpop.f32.mrb[0].mxu0
        %v795 = vadd.f32 %v577, %v794
        %v796 = vpop.f32.mrb[0].mxu0
        %v797 = vadd.f32 %v581, %v796
        %v798 = vpop.f32.mrb[0].mxu0
        %v799 = vadd.f32 %v577, %v798
        %v800 = vpop.f32.mrb[0].mxu0
        %v801 = vadd.f32 %v581, %v800
        %802 = vmatprep.mubr.bf16.mxu0 0
        %803 = vmatmul.mubr.bf16.gmra.mrb[0].mxu0 %v649
        %v804 = vpop.f32.mrb[0].mxu0
        %v805 = vadd.f32 %v577, %v804
        %v806 = vpop.f32.mrb[0].mxu0
        %v807 = vadd.f32 %v581, %v806
        %v808 = vpop.f32.mrb[0].mxu0
        %v809 = vadd.f32 %v577, %v808
        %v810 = vpop.f32.mrb[0].mxu0
        %v811 = vadd.f32 %v581, %v810
        %812 = vmatprep.mubr.bf16.mxu0 0
        %813 = vmatmul.mubr.bf16.gmra.mrb[0].mxu0 %v650
        %v814 = vpop.f32.mrb[0].mxu0
        %v815 = vadd.f32 %v577, %v814
        %v816 = vpop.f32.mrb[0].mxu0
        %v817 = vadd.f32 %v581, %v816
        %v818 = vpop.f32.mrb[0].mxu0
        %v819 = vadd.f32 %v577, %v818
        %v820 = vpop.f32.mrb[0].mxu0
        %v821 = vadd.f32 %v581, %v820
        %822 = vmatprep.mubr.bf16.mxu0 0
        %823 = vmatmul.mubr.bf16.gmra.mrb[0].mxu0 %v651
        %v824 = vpop.f32.mrb[0].mxu0
        %v825 = vadd.f32 %v577, %v824
        %v826 = vpop.f32.mrb[0].mxu0
        %v827 = vadd.f32 %v581, %v826
        %v828 = vpop.f32.mrb[0].mxu0
        %v829 = vadd.f32 %v577, %v828
        %v830 = vpop.f32.mrb[0].mxu0
        %v831 = vadd.f32 %v581, %v830
        %832 = vmatprep.mubr.bf16.mxu0 0
        %833 = vmatmul.mubr.bf16.gmra.mrb[0].mxu0 %v652
        %v834 = vpop.f32.mrb[0].mxu0
        %v835 = vadd.f32 %v577, %v834
        %v836 = vpop.f32.mrb[0].mxu0
        %v837 = vadd.f32 %v581, %v836
        %v838 = vpop.f32.mrb[0].mxu0
        %v839 = vadd.f32 %v577, %v838
        %v840 = vpop.f32.mrb[0].mxu0
        %v841 = vadd.f32 %v581, %v840
        %842 = vmatprep.mubr.bf16.mxu0 0
        %843 = vmatmul.mubr.bf16.gmra.mrb[0].mxu0 %v653
        %v844 = vpop.f32.mrb[0].mxu0
        %v845 = vadd.f32 %v577, %v844
        %v846 = vpop.f32.mrb[0].mxu0
        %v847 = vadd.f32 %v581, %v846
        %v848 = vpop.f32.mrb[0].mxu0
        %v849 = vadd.f32 %v577, %v848
        %v850 = vpop.f32.mrb[0].mxu0
        %v851 = vadd.f32 %v581, %v850
        %852 = vmatprep.mubr.bf16.mxu0 0
        %853 = vmatmul.mubr.bf16.gmra.mrb[0].mxu0 %v654
        %v854 = vpop.f32.mrb[0].mxu0
        %v855 = vadd.f32 %v577, %v854
        %v856 = vpop.f32.mrb[0].mxu0
        %v857 = vadd.f32 %v581, %v856
        %v858 = vpop.f32.mrb[0].mxu0
        %v859 = vadd.f32 %v577, %v858
        %v860 = vpop.f32.mrb[0].mxu0
        %v861 = vadd.f32 %v581, %v860
        %862 = vmatprep.mubr.bf16.mxu0 0
        %863 = vmatmul.mubr.bf16.gmra.mrb[0].mxu0 %v655
        %v864 = vpop.f32.mrb[0].mxu0
        %v865 = vadd.f32 %v577, %v864
        %v866 = vpop.f32.mrb[0].mxu0
        %v867 = vadd.f32 %v581, %v866
        %v868 = vpop.f32.mrb[0].mxu0
        %v869 = vadd.f32 %v577, %v868
        %v870 = vpop.f32.mrb[0].mxu0
        %v871 = vadd.f32 %v581, %v870
        %872 = vmatprep.mubr.bf16.mxu0 0
        %873 = vmatmul.mubr.bf16.gmra.mrb[0].mxu0 %v656
        %v874 = vpop.f32.mrb[0].mxu0
        %v875 = vadd.f32 %v577, %v874
        %v876 = vpop.f32.mrb[0].mxu0
        %v877 = vadd.f32 %v581, %v876
        %v878 = vpop.f32.mrb[0].mxu0
        %v879 = vadd.f32 %v577, %v878
        %v880 = vpop.f32.mrb[0].mxu0
        %v881 = vadd.f32 %v581, %v880
        %882 = vmatprep.mubr.bf16.mxu0 0
        %883 = vmatmul.mubr.bf16.gmra.mrb[0].mxu0 %v657
        %v884 = vpop.f32.mrb[0].mxu0
        %v885 = vadd.f32 %v577, %v884
        %v886 = vpop.f32.mrb[0].mxu0
        %v887 = vadd.f32 %v581, %v886
        %v888 = vpop.f32.mrb[0].mxu0
        %v889 = vadd.f32 %v577, %v888
        %v890 = vpop.f32.mrb[0].mxu0
        %v891 = vadd.f32 %v581, %v890
        %892 = vmatprep.mubr.bf16.mxu0 0
        %893 = vmatmul.mubr.bf16.gmra.mrb[0].mxu0 %v658
        %v894 = vpop.f32.mrb[0].mxu0
        %v895 = vadd.f32 %v577, %v894
        %v896 = vpop.f32.mrb[0].mxu0
        %v897 = vadd.f32 %v581, %v896
        %v898 = vpop.f32.mrb[0].mxu0
        %v899 = vadd.f32 %v577, %v898
        %v900 = vpop.f32.mrb[0].mxu0
        %v901 = vadd.f32 %v581, %v900
        %902 = vmatprep.mubr.bf16.mxu0 0
        %903 = vmatmul.mubr.bf16.gmra.mrb[0].mxu0 %v659
        %v904 = vpop.f32.mrb[0].mxu0
        %v905 = vadd.f32 %v577, %v904
        %v906 = vpop.f32.mrb[0].mxu0
        %v907 = vadd.f32 %v581, %v906
        %v908 = vpop.f32.mrb[0].mxu0
        %v909 = vadd.f32 %v577, %v908
        %v910 = vpop.f32.mrb[0].mxu0
        %v911 = vadd.f32 %v581, %v910
        %912 = vmatprep.mubr.bf16.mxu0 0
        %913 = vmatmul.mubr.bf16.gmra.mrb[0].mxu0 %v660
        %v914 = vpop.f32.mrb[0].mxu0
        %v915 = vadd.f32 %v577, %v914
        %v916 = vpop.f32.mrb[0].mxu0
        %v917 = vadd.f32 %v581, %v916
        %v918 = vpop.f32.mrb[0].mxu0
        %v919 = vadd.f32 %v577, %v918
        %v920 = vpop.f32.mrb[0].mxu0
        %v921 = vadd.f32 %v581, %v920
        %922 = vmatprep.mubr.bf16.mxu0 0
        %923 = vmatmul.mubr.bf16.gmra.mrb[0].mxu0 %v661
        %v924 = vpop.f32.mrb[0].mxu0
        %v925 = vadd.f32 %v577, %v924
        %v926 = vpop.f32.mrb[0].mxu0
        %v927 = vadd.f32 %v581, %v926
        %v928 = vpop.f32.mrb[0].mxu0
        %v929 = vadd.f32 %v577, %v928
        %v930 = vpop.f32.mrb[0].mxu0
        %v931 = vadd.f32 %v581, %v930
        %932 = vmatprep.mubr.bf16.mxu0 0
        %933 = vmatmul.mubr.bf16.gmra.mrb[0].mxu0 %v662
        %v934 = vpop.f32.mrb[0].mxu0
        %v935 = vadd.f32 %v577, %v934
        %v936 = vpop.f32.mrb[0].mxu0
        %v937 = vadd.f32 %v581, %v936
        %v938 = vpop.f32.mrb[0].mxu0
        %v939 = vadd.f32 %v577, %v938
        %v940 = vpop.f32.mrb[0].mxu0
        %v941 = vadd.f32 %v581, %v940
        %942 = vmatprep.mubr.bf16.mxu0 0
        %943 = vmatmul.mubr.bf16.gmra.mrb[0].mxu0 %v663
        %v944 = vpop.f32.mrb[0].mxu0
        %v945 = vadd.f32 %v577, %v944
        %v946 = vpop.f32.mrb[0].mxu0
        %v947 = vadd.f32 %v581, %v946
        %v948 = vpop.f32.mrb[0].mxu0
        %v949 = vadd.f32 %v577, %v948
        %v950 = vpop.f32.mrb[0].mxu0
        %v951 = vadd.f32 %v581, %v950
        %952 = vdwg.mxu0
        %v953 = vmax.f32 %v795, 0.0
        %v954 = vmax.f32 %v797, 0.0
        %v955 = vmax.f32 %v799, 0.0
        %v956 = vmax.f32 %v801, 0.0
        %v957 = vmax.f32 %v805, 0.0
        %v958 = vmax.f32 %v807, 0.0
        %v959 = vmax.f32 %v809, 0.0
        %v960 = vmax.f32 %v811, 0.0
        %v961 = vmax.f32 %v815, 0.0
        %v962 = vmax.f32 %v817, 0.0
        %v963 = vmax.f32 %v819, 0.0
        %v964 = vmax.f32 %v821, 0.0
        %v965 = vmax.f32 %v825, 0.0
        %v966 = vmax.f32 %v827, 0.0
        %v967 = vmax.f32 %v829, 0.0
        %v968 = vmax.f32 %v831, 0.0
        %v969 = vmax.f32 %v835, 0.0
        %v970 = vmax.f32 %v837, 0.0
        %v971 = vmax.f32 %v839, 0.0
        %v972 = vmax.f32 %v841, 0.0
        %v973 = vmax.f32 %v845, 0.0
        %v974 = vmax.f32 %v847, 0.0
        %v975 = vmax.f32 %v849, 0.0
        %v976 = vmax.f32 %v851, 0.0
        %v977 = vmax.f32 %v855, 0.0
        %v978 = vmax.f32 %v857, 0.0
        %v979 = vmax.f32 %v859, 0.0
        %v980 = vmax.f32 %v861, 0.0
        %v981 = vmax.f32 %v865, 0.0
        %v982 = vmax.f32 %v867, 0.0
        %v983 = vmax.f32 %v869, 0.0
        %v984 = vmax.f32 %v871, 0.0
        %v985 = vmax.f32 %v875, 0.0
        %v986 = vmax.f32 %v877, 0.0
        %v987 = vmax.f32 %v879, 0.0
        %v988 = vmax.f32 %v881, 0.0
        %v989 = vmax.f32 %v885, 0.0
        %v990 = vmax.f32 %v887, 0.0
        %v991 = vmax.f32 %v889, 0.0
        %v992 = vmax.f32 %v891, 0.0
        %v993 = vmax.f32 %v895, 0.0
        %v994 = vmax.f32 %v897, 0.0
        %v995 = vmax.f32 %v899, 0.0
        %v996 = vmax.f32 %v901, 0.0
        %v997 = vmax.f32 %v905, 0.0
        %v998 = vmax.f32 %v907, 0.0
        %v999 = vmax.f32 %v909, 0.0
        %v1000 = vmax.f32 %v911, 0.0
        %v1001 = vmax.f32 %v915, 0.0
        %v1002 = vmax.f32 %v917, 0.0
        %v1003 = vmax.f32 %v919, 0.0
        %v1004 = vmax.f32 %v921, 0.0
        %v1005 = vmax.f32 %v925, 0.0
        %v1006 = vmax.f32 %v927, 0.0
        %v1007 = vmax.f32 %v929, 0.0
        %v1008 = vmax.f32 %v931, 0.0
        %v1009 = vmax.f32 %v935, 0.0
        %v1010 = vmax.f32 %v937, 0.0
        %v1011 = vmax.f32 %v939, 0.0
        %v1012 = vmax.f32 %v941, 0.0
        %v1013 = vmax.f32 %v945, 0.0
        %v1014 = vmax.f32 %v947, 0.0
        %v1015 = vmax.f32 %v949, 0.0
        %v1016 = vmax.f32 %v951, 0.0
        %v1017 = vpack.c.bf16 %v955, %v953
        %v1018 = vpack.c.bf16 %v959, %v957
        %v1019 = vpack.c.bf16 %v963, %v961
        %v1020 = vpack.c.bf16 %v967, %v965
        %v1021 = vpack.c.bf16 %v971, %v969
        %v1022 = vpack.c.bf16 %v975, %v973
        %v1023 = vpack.c.bf16 %v979, %v977
        %v1024 = vpack.c.bf16 %v983, %v981
        %v1025 = vpack.c.bf16 %v987, %v985
        %v1026 = vpack.c.bf16 %v991, %v989
        %v1027 = vpack.c.bf16 %v995, %v993
        %v1028 = vpack.c.bf16 %v999, %v997
        %v1029 = vpack.c.bf16 %v1003, %v1001
        %v1030 = vpack.c.bf16 %v1007, %v1005
        %v1031 = vpack.c.bf16 %v1011, %v1009
        %v1032 = vpack.c.bf16 %v1015, %v1013
        %v1033 = vld [vmem:[#allocation8] sm:$0xf]
        %v1034 = vld [vmem:[#allocation8 + $0x4] sm:$0xf]
        %v1035 = vld [vmem:[#allocation8 + $0x8] sm:$0xf]
        %v1036 = vld [vmem:[#allocation8 + $0xc] sm:$0xf]
        %v1037 = vld [vmem:[#allocation8 + $0x10] sm:$0xf]
        %v1038 = vld [vmem:[#allocation8 + $0x14] sm:$0xf]
        %v1039 = vld [vmem:[#allocation8 + $0x18] sm:$0xf]
        %v1040 = vld [vmem:[#allocation8 + $0x1c] sm:$0xf]
        %v1041 = vld [vmem:[#allocation8 + $0x20] sm:$0xf]
        %v1042 = vld [vmem:[#allocation8 + $0x24] sm:$0xf]
        %v1043 = vld [vmem:[#allocation8 + $0x28] sm:$0xf]
        %v1044 = vld [vmem:[#allocation8 + $0x2c] sm:$0xf]
        %v1045 = vld [vmem:[#allocation8 + $0x30] sm:$0xf]
        %v1046 = vld [vmem:[#allocation8 + $0x34] sm:$0xf]
        %v1047 = vld [vmem:[#allocation8 + $0x38] sm:$0xf]
        %v1048 = vld [vmem:[#allocation8 + $0x3c] sm:$0xf]
        %v1049 = vld [vmem:[%s4] sm:$0x1]
        %v1051 = vlaneseq
        %v1052 = vshrl.u32 %v1051, 7
        %v1053 = vsub.s32 0, %v1052
        %v1054 = vrot.slane %v1049, %v1053
        %v1072 = vunpack.c.l.b16 %v1033
        %v1073 = vunpack.c.l.b16 %v1034
        %v1074 = vunpack.c.l.b16 %v1035
        %v1075 = vunpack.c.l.b16 %v1036
        %v1076 = vunpack.c.l.b16 %v1037
        %v1077 = vunpack.c.l.b16 %v1038
        %v1078 = vunpack.c.l.b16 %v1039
        %v1079 = vunpack.c.l.b16 %v1040
        %v1080 = vunpack.c.l.b16 %v1041
        %v1081 = vunpack.c.l.b16 %v1042
        %v1082 = vunpack.c.l.b16 %v1043
        %v1083 = vunpack.c.l.b16 %v1044
        %v1084 = vunpack.c.l.b16 %v1045
        %v1085 = vunpack.c.l.b16 %v1046
        %v1086 = vunpack.c.l.b16 %v1047
        %v1087 = vunpack.c.l.b16 %v1048
        %v1088 = vpack.c.b16 %v1073, %v1072
        %v1089 = vpack.c.b16 %v1075, %v1074
        %v1090 = vpack.c.b16 %v1077, %v1076
        %v1091 = vpack.c.b16 %v1079, %v1078
        %v1092 = vpack.c.b16 %v1081, %v1080
        %v1093 = vpack.c.b16 %v1083, %v1082
        %v1094 = vpack.c.b16 %v1085, %v1084
        %v1095 = vpack.c.b16 %v1087, %v1086
        %1104 = vmatprep.subr.bf16.mxu0 0
        %1105 = vmatpush1.bf16.msra.mxu0 %v1088
        %1106 = vmatprep.subr.bf16.mxu0 0
        %1107 = vmatpush1.bf16.msra.mxu0 %v1089
        %1108 = vmatprep.subr.bf16.mxu0 0
        %1109 = vmatpush1.bf16.msra.mxu0 %v1090
        %1110 = vmatprep.subr.bf16.mxu0 0
        %1111 = vmatpush1.bf16.msra.mxu0 %v1091
        %1112 = vmatprep.subr.bf16.mxu0 0
        %1113 = vmatpush1.bf16.msra.mxu0 %v1092
        %1114 = vmatprep.subr.bf16.mxu0 0
        %1115 = vmatpush1.bf16.msra.mxu0 %v1093
        %1116 = vmatprep.subr.bf16.mxu0 0
        %1117 = vmatpush1.bf16.msra.mxu0 %v1094
        %1118 = vmatprep.subr.bf16.mxu0 0
        %1119 = vmatpush1.bf16.msra.mxu0 %v1095
        %1120 = vmatprep.subr.bf16.mxu0 0
        %1121 = vmatpush1.bf16.msra.mxu0 0
        %1122 = vmatprep.subr.bf16.mxu0 0
        %1123 = vmatpush1.bf16.msra.mxu0 0
        %1124 = vmatprep.subr.bf16.mxu0 0
        %1125 = vmatpush1.bf16.msra.mxu0 0
        %1126 = vmatprep.subr.bf16.mxu0 0
        %1127 = vmatpush1.bf16.msra.mxu0 0
        %1128 = vmatprep.subr.bf16.mxu0 0
        %1129 = vmatpush1.bf16.msra.mxu0 0
        %1130 = vmatprep.subr.bf16.mxu0 0
        %1131 = vmatpush1.bf16.msra.mxu0 0
        %1132 = vmatprep.subr.bf16.mxu0 0
        %1133 = vmatpush1.bf16.msra.mxu0 0
        %1134 = vmatprep.subr.bf16.mxu0 0
        %1135 = vmatpush1.bf16.msra.mxu0 0
        %1136 = vmatprep.mubr.bf16.mxu0 0
        %1137 = vmatmul.mubr.bf16.gmra.mrb[0].mxu0 %v1017
        %v1138 = vpop.f32.mrb[0].mxu0
        %v1139 = vadd.f32 %v1054, %v1138
        %v1140 = vpop.f32.mrb[0].mxu0
        %v1141 = vpop.f32.mrb[0].mxu0
        %v1142 = vadd.f32 %v1054, %v1141
        %v1143 = vpop.f32.mrb[0].mxu0
        %1144 = vmatprep.mubr.bf16.mxu0 0
        %1145 = vmatmul.mubr.bf16.gmra.mrb[0].mxu0 %v1018
        %v1146 = vpop.f32.mrb[0].mxu0
        %v1147 = vadd.f32 %v1054, %v1146
        %v1148 = vpop.f32.mrb[0].mxu0
        %v1149 = vpop.f32.mrb[0].mxu0
        %v1150 = vadd.f32 %v1054, %v1149
        %v1151 = vpop.f32.mrb[0].mxu0
        %1152 = vmatprep.mubr.bf16.mxu0 0
        %1153 = vmatmul.mubr.bf16.gmra.mrb[0].mxu0 %v1019
        %v1154 = vpop.f32.mrb[0].mxu0
        %v1155 = vadd.f32 %v1054, %v1154
        %v1156 = vpop.f32.mrb[0].mxu0
        %v1157 = vpop.f32.mrb[0].mxu0
        %v1158 = vadd.f32 %v1054, %v1157
        %v1159 = vpop.f32.mrb[0].mxu0
        %1160 = vmatprep.mubr.bf16.mxu0 0
        %1161 = vmatmul.mubr.bf16.gmra.mrb[0].mxu0 %v1020
        %v1162 = vpop.f32.mrb[0].mxu0
        %v1163 = vadd.f32 %v1054, %v1162
        %v1164 = vpop.f32.mrb[0].mxu0
        %v1165 = vpop.f32.mrb[0].mxu0
        %v1166 = vadd.f32 %v1054, %v1165
        %v1167 = vpop.f32.mrb[0].mxu0
        %1168 = vmatprep.mubr.bf16.mxu0 0
        %1169 = vmatmul.mubr.bf16.gmra.mrb[0].mxu0 %v1021
        %v1170 = vpop.f32.mrb[0].mxu0
        %v1171 = vadd.f32 %v1054, %v1170
        %v1172 = vpop.f32.mrb[0].mxu0
        %v1173 = vpop.f32.mrb[0].mxu0
        %v1174 = vadd.f32 %v1054, %v1173
        %v1175 = vpop.f32.mrb[0].mxu0
        %1176 = vmatprep.mubr.bf16.mxu0 0
        %1177 = vmatmul.mubr.bf16.gmra.mrb[0].mxu0 %v1022
        %v1178 = vpop.f32.mrb[0].mxu0
        %v1179 = vadd.f32 %v1054, %v1178
        %v1180 = vpop.f32.mrb[0].mxu0
        %v1181 = vpop.f32.mrb[0].mxu0
        %v1182 = vadd.f32 %v1054, %v1181
        %v1183 = vpop.f32.mrb[0].mxu0
        %1184 = vmatprep.mubr.bf16.mxu0 0
        %1185 = vmatmul.mubr.bf16.gmra.mrb[0].mxu0 %v1023
        %v1186 = vpop.f32.mrb[0].mxu0
        %v1187 = vadd.f32 %v1054, %v1186
        %v1188 = vpop.f32.mrb[0].mxu0
        %v1189 = vpop.f32.mrb[0].mxu0
        %v1190 = vadd.f32 %v1054, %v1189
        %v1191 = vpop.f32.mrb[0].mxu0
        %1192 = vmatprep.mubr.bf16.mxu0 0
        %1193 = vmatmul.mubr.bf16.gmra.mrb[0].mxu0 %v1024
        %v1194 = vpop.f32.mrb[0].mxu0
        %v1195 = vadd.f32 %v1054, %v1194
        %v1196 = vpop.f32.mrb[0].mxu0
        %v1197 = vpop.f32.mrb[0].mxu0
        %v1198 = vadd.f32 %v1054, %v1197
        %v1199 = vpop.f32.mrb[0].mxu0
        %1200 = vmatprep.mubr.bf16.mxu0 0
        %1201 = vmatmul.mubr.bf16.gmra.mrb[0].mxu0 %v1025
        %v1202 = vpop.f32.mrb[0].mxu0
        %v1203 = vadd.f32 %v1054, %v1202
        %v1204 = vpop.f32.mrb[0].mxu0
        %v1205 = vpop.f32.mrb[0].mxu0
        %v1206 = vadd.f32 %v1054, %v1205
        %v1207 = vpop.f32.mrb[0].mxu0
        %1208 = vmatprep.mubr.bf16.mxu0 0
        %1209 = vmatmul.mubr.bf16.gmra.mrb[0].mxu0 %v1026
        %v1210 = vpop.f32.mrb[0].mxu0
        %v1211 = vadd.f32 %v1054, %v1210
        %v1212 = vpop.f32.mrb[0].mxu0
        %v1213 = vpop.f32.mrb[0].mxu0
        %v1214 = vadd.f32 %v1054, %v1213
        %v1215 = vpop.f32.mrb[0].mxu0
        %1216 = vmatprep.mubr.bf16.mxu0 0
        %1217 = vmatmul.mubr.bf16.gmra.mrb[0].mxu0 %v1027
        %v1218 = vpop.f32.mrb[0].mxu0
        %v1219 = vadd.f32 %v1054, %v1218
        %v1220 = vpop.f32.mrb[0].mxu0
        %v1221 = vpop.f32.mrb[0].mxu0
        %v1222 = vadd.f32 %v1054, %v1221
        %v1223 = vpop.f32.mrb[0].mxu0
        %1224 = vmatprep.mubr.bf16.mxu0 0
        %1225 = vmatmul.mubr.bf16.gmra.mrb[0].mxu0 %v1028
        %v1226 = vpop.f32.mrb[0].mxu0
        %v1227 = vadd.f32 %v1054, %v1226
        %v1228 = vpop.f32.mrb[0].mxu0
        %v1229 = vpop.f32.mrb[0].mxu0
        %v1230 = vadd.f32 %v1054, %v1229
        %v1231 = vpop.f32.mrb[0].mxu0
        %1232 = vmatprep.mubr.bf16.mxu0 0
        %1233 = vmatmul.mubr.bf16.gmra.mrb[0].mxu0 %v1029
        %v1234 = vpop.f32.mrb[0].mxu0
        %v1235 = vadd.f32 %v1054, %v1234
        %v1236 = vpop.f32.mrb[0].mxu0
        %v1237 = vpop.f32.mrb[0].mxu0
        %v1238 = vadd.f32 %v1054, %v1237
        %v1239 = vpop.f32.mrb[0].mxu0
        %1240 = vmatprep.mubr.bf16.mxu0 0
        %1241 = vmatmul.mubr.bf16.gmra.mrb[0].mxu0 %v1030
        %v1242 = vpop.f32.mrb[0].mxu0
        %v1243 = vadd.f32 %v1054, %v1242
        %v1244 = vpop.f32.mrb[0].mxu0
        %v1245 = vpop.f32.mrb[0].mxu0
        %v1246 = vadd.f32 %v1054, %v1245
        %v1247 = vpop.f32.mrb[0].mxu0
        %1248 = vmatprep.mubr.bf16.mxu0 0
        %1249 = vmatmul.mubr.bf16.gmra.mrb[0].mxu0 %v1031
        %v1250 = vpop.f32.mrb[0].mxu0
        %v1251 = vadd.f32 %v1054, %v1250
        %v1252 = vpop.f32.mrb[0].mxu0
        %v1253 = vpop.f32.mrb[0].mxu0
        %v1254 = vadd.f32 %v1054, %v1253
        %v1255 = vpop.f32.mrb[0].mxu0
        %1256 = vmatprep.mubr.bf16.mxu0 0
        %1257 = vmatmul.mubr.bf16.gmra.mrb[0].mxu0 %v1032
        %v1258 = vpop.f32.mrb[0].mxu0
        %v1259 = vadd.f32 %v1054, %v1258
        %v1260 = vpop.f32.mrb[0].mxu0
        %v1261 = vpop.f32.mrb[0].mxu0
        %v1262 = vadd.f32 %v1054, %v1261
        %v1263 = vpop.f32.mrb[0].mxu0
        %1264 = vdwg.mxu0
        %v1265 = vmax.f32 %v1139, 0.0
        %v1266 = vmax.f32 %v1142, 0.0
        %v1267 = vmax.f32 %v1147, 0.0
        %v1268 = vmax.f32 %v1150, 0.0
        %v1269 = vmax.f32 %v1155, 0.0
        %v1270 = vmax.f32 %v1158, 0.0
        %v1271 = vmax.f32 %v1163, 0.0
        %v1272 = vmax.f32 %v1166, 0.0
        %v1273 = vmax.f32 %v1171, 0.0
        %v1274 = vmax.f32 %v1174, 0.0
        %v1275 = vmax.f32 %v1179, 0.0
        %v1276 = vmax.f32 %v1182, 0.0
        %v1277 = vmax.f32 %v1187, 0.0
        %v1278 = vmax.f32 %v1190, 0.0
        %v1279 = vmax.f32 %v1195, 0.0
        %v1280 = vmax.f32 %v1198, 0.0
        %v1281 = vmax.f32 %v1203, 0.0
        %v1282 = vmax.f32 %v1206, 0.0
        %v1283 = vmax.f32 %v1211, 0.0
        %v1284 = vmax.f32 %v1214, 0.0
        %v1285 = vmax.f32 %v1219, 0.0
        %v1286 = vmax.f32 %v1222, 0.0
        %v1287 = vmax.f32 %v1227, 0.0
        %v1288 = vmax.f32 %v1230, 0.0
        %v1289 = vmax.f32 %v1235, 0.0
        %v1290 = vmax.f32 %v1238, 0.0
        %v1291 = vmax.f32 %v1243, 0.0
        %v1292 = vmax.f32 %v1246, 0.0
        %v1293 = vmax.f32 %v1251, 0.0
        %v1294 = vmax.f32 %v1254, 0.0
        %v1295 = vmax.f32 %v1259, 0.0
        %v1296 = vmax.f32 %v1262, 0.0
        %s1297 = scalar_lea.vmem [#allocation2], 32
        %1298 = vst [vmem:[%s1297 + $0x8] sm:$0xff] %v1265
        %1299 = vst [vmem:[%s1297 + $0x10] sm:$0xff] %v1266
        %1300 = vst [vmem:[%s1297 + $0x28] sm:$0xff] %v1267
        %1301 = vst [vmem:[%s1297 + $0x30] sm:$0xff] %v1268
        %1302 = vst [vmem:[%s1297 + $0x48] sm:$0xff] %v1269
        %1303 = vst [vmem:[%s1297 + $0x50] sm:$0xff] %v1270
        %1304 = vst [vmem:[%s1297 + $0x68] sm:$0xff] %v1271
        %1305 = vst [vmem:[%s1297 + $0x70] sm:$0xff] %v1272
        %1306 = vst [vmem:[%s1297 + $0x88] sm:$0xff] %v1273
        %1307 = vst [vmem:[%s1297 + $0x90] sm:$0xff] %v1274
        %1308 = vst [vmem:[%s1297 + $0xa8] sm:$0xff] %v1275
        %1309 = vst [vmem:[%s1297 + $0xb0] sm:$0xff] %v1276
        %1310 = vst [vmem:[%s1297 + $0xc8] sm:$0xff] %v1277
        %1311 = vst [vmem:[%s1297 + $0xd0] sm:$0xff] %v1278
        %1312 = vst [vmem:[%s1297 + $0xe8] sm:$0xff] %v1279
        %1313 = vst [vmem:[%s1297 + $0xf0] sm:$0xff] %v1280
        %1314 = vst [vmem:[%s1297 + $0x108] sm:$0xff] %v1281
        %1315 = vst [vmem:[%s1297 + $0x110] sm:$0xff] %v1282
        %1316 = vst [vmem:[%s1297 + $0x128] sm:$0xff] %v1283
        %1317 = vst [vmem:[%s1297 + $0x130] sm:$0xff] %v1284
        %1318 = vst [vmem:[%s1297 + $0x148] sm:$0xff] %v1285
        %1319 = vst [vmem:[%s1297 + $0x150] sm:$0xff] %v1286
        %1320 = vst [vmem:[%s1297 + $0x168] sm:$0xff] %v1287
        %1321 = vst [vmem:[%s1297 + $0x170] sm:$0xff] %v1288
        %1322 = vst [vmem:[%s1297 + $0x188] sm:$0xff] %v1289
        %1323 = vst [vmem:[%s1297 + $0x190] sm:$0xff] %v1290
        %1324 = vst [vmem:[%s1297 + $0x1a8] sm:$0xff] %v1291
        %1325 = vst [vmem:[%s1297 + $0x1b0] sm:$0xff] %v1292
        %1326 = vst [vmem:[%s1297 + $0x1c8] sm:$0xff] %v1293
        %1327 = vst [vmem:[%s1297 + $0x1d0] sm:$0xff] %v1294
        %1328 = vst [vmem:[%s1297 + $0x1e8] sm:$0xff] %v1295
        %1329 = vst [vmem:[%s1297 + $0x1f0] sm:$0xff] %v1296
        %v1330 = vld [vmem:[#allocation2 + $0x7] sm:$0xff]
        %v1331 = vld [vmem:[#allocation2 + $0xf] sm:$0xff]
        %v1332 = vld [vmem:[#allocation2 + $0x27] sm:$0xff]
        %v1333 = vld [vmem:[#allocation2 + $0x2f] sm:$0xff]
        %v1334 = vld [vmem:[#allocation2 + $0x47] sm:$0xff]
        %v1335 = vld [vmem:[#allocation2 + $0x4f] sm:$0xff]
        %v1336 = vld [vmem:[#allocation2 + $0x67] sm:$0xff]
        %v1337 = vld [vmem:[#allocation2 + $0x6f] sm:$0xff]
        %v1338 = vld [vmem:[#allocation2 + $0x87] sm:$0xff]
        %v1339 = vld [vmem:[#allocation2 + $0x8f] sm:$0xff]
        %v1340 = vld [vmem:[#allocation2 + $0xa7] sm:$0xff]
        %v1341 = vld [vmem:[#allocation2 + $0xaf] sm:$0xff]
        %v1342 = vld [vmem:[#allocation2 + $0xc7] sm:$0xff]
        %v1343 = vld [vmem:[#allocation2 + $0xcf] sm:$0xff]
        %v1344 = vld [vmem:[#allocation2 + $0xe7] sm:$0xff]
        %v1345 = vld [vmem:[#allocation2 + $0xef] sm:$0xff]
        %v1346 = vld [vmem:[#allocation2 + $0x107] sm:$0xff]
        %v1347 = vld [vmem:[#allocation2 + $0x10f] sm:$0xff]
        %v1348 = vld [vmem:[#allocation2 + $0x127] sm:$0xff]
        %v1349 = vld [vmem:[#allocation2 + $0x12f] sm:$0xff]
        %v1350 = vld [vmem:[#allocation2 + $0x147] sm:$0xff]
        %v1351 = vld [vmem:[#allocation2 + $0x14f] sm:$0xff]
        %v1352 = vld [vmem:[#allocation2 + $0x167] sm:$0xff]
        %v1353 = vld [vmem:[#allocation2 + $0x16f] sm:$0xff]
        %v1354 = vld [vmem:[#allocation2 + $0x187] sm:$0xff]
        %v1355 = vld [vmem:[#allocation2 + $0x18f] sm:$0xff]
        %v1356 = vld [vmem:[#allocation2 + $0x1a7] sm:$0xff]
        %v1357 = vld [vmem:[#allocation2 + $0x1af] sm:$0xff]
        %v1358 = vld [vmem:[#allocation2 + $0x1c7] sm:$0xff]
        %v1359 = vld [vmem:[#allocation2 + $0x1cf] sm:$0xff]
        %v1360 = vld [vmem:[#allocation2 + $0x1e7] sm:$0xff]
        %v1361 = vld [vmem:[#allocation2 + $0x1ef] sm:$0xff]
        %v1362 = vpack.c.bf16 %v1331, %v1330
        %v1363 = vpack.c.bf16 %v1333, %v1332
        %v1364 = vpack.c.bf16 %v1335, %v1334
        %v1365 = vpack.c.bf16 %v1337, %v1336
        %v1366 = vpack.c.bf16 %v1339, %v1338
        %v1367 = vpack.c.bf16 %v1341, %v1340
        %v1368 = vpack.c.bf16 %v1343, %v1342
        %v1369 = vpack.c.bf16 %v1345, %v1344
        %v1370 = vpack.c.bf16 %v1347, %v1346
        %v1371 = vpack.c.bf16 %v1349, %v1348
        %v1372 = vpack.c.bf16 %v1351, %v1350
        %v1373 = vpack.c.bf16 %v1353, %v1352
        %v1374 = vpack.c.bf16 %v1355, %v1354
        %v1375 = vpack.c.bf16 %v1357, %v1356
        %v1376 = vpack.c.bf16 %v1359, %v1358
        %v1377 = vpack.c.bf16 %v1361, %v1360
        %v1378 = vld [vmem:[#allocation9] sm:$0xf]
        %v1379 = vld [vmem:[#allocation9 + $0x4] sm:$0xf]
        %v1380 = vld [vmem:[#allocation9 + $0x8] sm:$0xf]
        %v1381 = vld [vmem:[#allocation9 + $0xc] sm:$0xf]
        %v1382 = vld [vmem:[#allocation9 + $0x10] sm:$0xf]
        %v1383 = vld [vmem:[#allocation9 + $0x14] sm:$0xf]
        %v1384 = vld [vmem:[#allocation9 + $0x18] sm:$0xf]
        %v1385 = vld [vmem:[#allocation9 + $0x1c] sm:$0xf]
        %v1386 = vld [vmem:[#allocation9 + $0x20] sm:$0xf]
        %v1387 = vld [vmem:[#allocation9 + $0x24] sm:$0xf]
        %v1388 = vld [vmem:[#allocation9 + $0x28] sm:$0xf]
        %v1389 = vld [vmem:[#allocation9 + $0x2c] sm:$0xf]
        %v1390 = vld [vmem:[#allocation9 + $0x30] sm:$0xf]
        %v1391 = vld [vmem:[#allocation9 + $0x34] sm:$0xf]
        %v1392 = vld [vmem:[#allocation9 + $0x38] sm:$0xf]
        %v1393 = vld [vmem:[#allocation9 + $0x3c] sm:$0xf]
        %v1394 = vld [vmem:[#allocation2 + $0x8] sm:$0xff]
        %v1395 = vld [vmem:[#allocation2 + $0x10] sm:$0xff]
        %v1396 = vld [vmem:[#allocation2 + $0x28] sm:$0xff]
        %v1397 = vld [vmem:[#allocation2 + $0x30] sm:$0xff]
        %v1398 = vld [vmem:[#allocation2 + $0x48] sm:$0xff]
        %v1399 = vld [vmem:[#allocation2 + $0x50] sm:$0xff]
        %v1400 = vld [vmem:[#allocation2 + $0x68] sm:$0xff]
        %v1401 = vld [vmem:[#allocation2 + $0x70] sm:$0xff]
        %v1402 = vld [vmem:[#allocation2 + $0x88] sm:$0xff]
        %v1403 = vld [vmem:[#allocation2 + $0x90] sm:$0xff]
        %v1404 = vld [vmem:[#allocation2 + $0xa8] sm:$0xff]
        %v1405 = vld [vmem:[#allocation2 + $0xb0] sm:$0xff]
        %v1406 = vld [vmem:[#allocation2 + $0xc8] sm:$0xff]
        %v1407 = vld [vmem:[#allocation2 + $0xd0] sm:$0xff]
        %v1408 = vld [vmem:[#allocation2 + $0xe8] sm:$0xff]
        %v1409 = vld [vmem:[#allocation2 + $0xf0] sm:$0xff]
        %v1410 = vld [vmem:[#allocation2 + $0x108] sm:$0xff]
        %v1411 = vld [vmem:[#allocation2 + $0x110] sm:$0xff]
        %v1412 = vld [vmem:[#allocation2 + $0x128] sm:$0xff]
        %v1413 = vld [vmem:[#allocation2 + $0x130] sm:$0xff]
        %v1414 = vld [vmem:[#allocation2 + $0x148] sm:$0xff]
        %v1415 = vld [vmem:[#allocation2 + $0x150] sm:$0xff]
        %v1416 = vld [vmem:[#allocation2 + $0x168] sm:$0xff]
        %v1417 = vld [vmem:[#allocation2 + $0x170] sm:$0xff]
        %v1418 = vld [vmem:[#allocation2 + $0x188] sm:$0xff]
        %v1419 = vld [vmem:[#allocation2 + $0x190] sm:$0xff]
        %v1420 = vld [vmem:[#allocation2 + $0x1a8] sm:$0xff]
        %v1421 = vld [vmem:[#allocation2 + $0x1b0] sm:$0xff]
        %v1422 = vld [vmem:[#allocation2 + $0x1c8] sm:$0xff]
        %v1423 = vld [vmem:[#allocation2 + $0x1d0] sm:$0xff]
        %v1424 = vld [vmem:[#allocation2 + $0x1e8] sm:$0xff]
        %v1425 = vld [vmem:[#allocation2 + $0x1f0] sm:$0xff]
        %v1426 = vpack.c.bf16 %v1395, %v1394
        %v1427 = vpack.c.bf16 %v1397, %v1396
        %v1428 = vpack.c.bf16 %v1399, %v1398
        %v1429 = vpack.c.bf16 %v1401, %v1400
        %v1430 = vpack.c.bf16 %v1403, %v1402
        %v1431 = vpack.c.bf16 %v1405, %v1404
        %v1432 = vpack.c.bf16 %v1407, %v1406
        %v1433 = vpack.c.bf16 %v1409, %v1408
        %v1434 = vpack.c.bf16 %v1411, %v1410
        %v1435 = vpack.c.bf16 %v1413, %v1412
        %v1436 = vpack.c.bf16 %v1415, %v1414
        %v1437 = vpack.c.bf16 %v1417, %v1416
        %v1438 = vpack.c.bf16 %v1419, %v1418
        %v1439 = vpack.c.bf16 %v1421, %v1420
        %v1440 = vpack.c.bf16 %v1423, %v1422
        %v1441 = vpack.c.bf16 %v1425, %v1424
        %s1442 = scalar_lea.vmem [#allocation9], 64
        %v1443 = vld [vmem:[%s1442] sm:$0xf]
        %v1444 = vld [vmem:[%s1442 + $0x4] sm:$0xf]
        %v1445 = vld [vmem:[%s1442 + $0x8] sm:$0xf]
        %v1446 = vld [vmem:[%s1442 + $0xc] sm:$0xf]
        %v1447 = vld [vmem:[%s1442 + $0x10] sm:$0xf]
        %v1448 = vld [vmem:[%s1442 + $0x14] sm:$0xf]
        %v1449 = vld [vmem:[%s1442 + $0x18] sm:$0xf]
        %v1450 = vld [vmem:[%s1442 + $0x1c] sm:$0xf]
        %v1451 = vld [vmem:[%s1442 + $0x20] sm:$0xf]
        %v1452 = vld [vmem:[%s1442 + $0x24] sm:$0xf]
        %v1453 = vld [vmem:[%s1442 + $0x28] sm:$0xf]
        %v1454 = vld [vmem:[%s1442 + $0x2c] sm:$0xf]
        %v1455 = vld [vmem:[%s1442 + $0x30] sm:$0xf]
        %v1456 = vld [vmem:[%s1442 + $0x34] sm:$0xf]
        %v1457 = vld [vmem:[%s1442 + $0x38] sm:$0xf]
        %v1458 = vld [vmem:[%s1442 + $0x3c] sm:$0xf]
        %v1475 = vunpack.c.l.b16 %v1443
        %v1476 = vunpack.c.l.b16 %v1444
        %v1477 = vunpack.c.l.b16 %v1445
        %v1478 = vunpack.c.l.b16 %v1446
        %v1479 = vunpack.c.l.b16 %v1447
        %v1480 = vunpack.c.l.b16 %v1448
        %v1481 = vunpack.c.l.b16 %v1449
        %v1482 = vunpack.c.l.b16 %v1450
        %v1483 = vunpack.c.l.b16 %v1451
        %v1484 = vunpack.c.l.b16 %v1452
        %v1485 = vunpack.c.l.b16 %v1453
        %v1486 = vunpack.c.l.b16 %v1454
        %v1487 = vunpack.c.l.b16 %v1455
        %v1488 = vunpack.c.l.b16 %v1456
        %v1489 = vunpack.c.l.b16 %v1457
        %v1490 = vunpack.c.l.b16 %v1458
        %v1491 = vpack.c.b16 %v1476, %v1475
        %v1492 = vpack.c.b16 %v1478, %v1477
        %v1493 = vpack.c.b16 %v1480, %v1479
        %v1494 = vpack.c.b16 %v1482, %v1481
        %v1495 = vpack.c.b16 %v1484, %v1483
        %v1496 = vpack.c.b16 %v1486, %v1485
        %v1497 = vpack.c.b16 %v1488, %v1487
        %v1498 = vpack.c.b16 %v1490, %v1489
        %1507 = vmatprep.subr.bf16.mxu0 0
        %1508 = vmatpush1.bf16.msra.mxu0 %v1491
        %1509 = vmatprep.subr.bf16.mxu0 0
        %1510 = vmatpush1.bf16.msra.mxu0 %v1492
        %1511 = vmatprep.subr.bf16.mxu0 0
        %1512 = vmatpush1.bf16.msra.mxu0 %v1493
        %1513 = vmatprep.subr.bf16.mxu0 0
        %1514 = vmatpush1.bf16.msra.mxu0 %v1494
        %1515 = vmatprep.subr.bf16.mxu0 0
        %1516 = vmatpush1.bf16.msra.mxu0 %v1495
        %1517 = vmatprep.subr.bf16.mxu0 0
        %1518 = vmatpush1.bf16.msra.mxu0 %v1496
        %1519 = vmatprep.subr.bf16.mxu0 0
        %1520 = vmatpush1.bf16.msra.mxu0 %v1497
        %1521 = vmatprep.subr.bf16.mxu0 0
        %1522 = vmatpush1.bf16.msra.mxu0 %v1498
        %1523 = vmatprep.subr.bf16.mxu0 0
        %1524 = vmatpush1.bf16.msra.mxu0 0
        %1525 = vmatprep.subr.bf16.mxu0 0
        %1526 = vmatpush1.bf16.msra.mxu0 0
        %1527 = vmatprep.subr.bf16.mxu0 0
        %1528 = vmatpush1.bf16.msra.mxu0 0
        %1529 = vmatprep.subr.bf16.mxu0 0
        %1530 = vmatpush1.bf16.msra.mxu0 0
        %1531 = vmatprep.subr.bf16.mxu0 0
        %1532 = vmatpush1.bf16.msra.mxu0 0
        %1533 = vmatprep.subr.bf16.mxu0 0
        %1534 = vmatpush1.bf16.msra.mxu0 0
        %1535 = vmatprep.subr.bf16.mxu0 0
        %1536 = vmatpush1.bf16.msra.mxu0 0
        %1537 = vmatprep.subr.bf16.mxu0 0
        %1538 = vmatpush1.bf16.msra.mxu0 0
        %1539 = vmatprep.mubr.bf16.mxu0 0
        %1540 = vmatmul.mubr.bf16.gmra.mrb[0].mxu0 %v1426
        %v1541 = vpop.f32.mrb[0].mxu0
        %v1542 = vadd.f32 0.0, %v1541
        %v1543 = vpop.f32.mrb[0].mxu0
        %v1544 = vpop.f32.mrb[0].mxu0
        %v1545 = vadd.f32 0.0, %v1544
        %v1546 = vpop.f32.mrb[0].mxu0
        %1547 = vmatprep.mubr.bf16.mxu0 0
        %1548 = vmatmul.mubr.bf16.gmra.mrb[0].mxu0 %v1427
        %v1549 = vpop.f32.mrb[0].mxu0
        %v1550 = vadd.f32 0.0, %v1549
        %v1551 = vpop.f32.mrb[0].mxu0
        %v1552 = vpop.f32.mrb[0].mxu0
        %v1553 = vadd.f32 0.0, %v1552
        %v1554 = vpop.f32.mrb[0].mxu0
        %1555 = vmatprep.mubr.bf16.mxu0 0
        %1556 = vmatmul.mubr.bf16.gmra.mrb[0].mxu0 %v1428
        %v1557 = vpop.f32.mrb[0].mxu0
        %v1558 = vadd.f32 0.0, %v1557
        %v1559 = vpop.f32.mrb[0].mxu0
        %v1560 = vpop.f32.mrb[0].mxu0
        %v1561 = vadd.f32 0.0, %v1560
        %v1562 = vpop.f32.mrb[0].mxu0
        %1563 = vmatprep.mubr.bf16.mxu0 0
        %1564 = vmatmul.mubr.bf16.gmra.mrb[0].mxu0 %v1429
        %v1565 = vpop.f32.mrb[0].mxu0
        %v1566 = vadd.f32 0.0, %v1565
        %v1567 = vpop.f32.mrb[0].mxu0
        %v1568 = vpop.f32.mrb[0].mxu0
        %v1569 = vadd.f32 0.0, %v1568
        %v1570 = vpop.f32.mrb[0].mxu0
        %1571 = vmatprep.mubr.bf16.mxu0 0
        %1572 = vmatmul.mubr.bf16.gmra.mrb[0].mxu0 %v1430
        %v1573 = vpop.f32.mrb[0].mxu0
        %v1574 = vadd.f32 0.0, %v1573
        %v1575 = vpop.f32.mrb[0].mxu0
        %v1576 = vpop.f32.mrb[0].mxu0
        %v1577 = vadd.f32 0.0, %v1576
        %v1578 = vpop.f32.mrb[0].mxu0
        %1579 = vmatprep.mubr.bf16.mxu0 0
        %1580 = vmatmul.mubr.bf16.gmra.mrb[0].mxu0 %v1431
        %v1581 = vpop.f32.mrb[0].mxu0
        %v1582 = vadd.f32 0.0, %v1581
        %v1583 = vpop.f32.mrb[0].mxu0
        %v1584 = vpop.f32.mrb[0].mxu0
        %v1585 = vadd.f32 0.0, %v1584
        %v1586 = vpop.f32.mrb[0].mxu0
        %1587 = vmatprep.mubr.bf16.mxu0 0
        %1588 = vmatmul.mubr.bf16.gmra.mrb[0].mxu0 %v1432
        %v1589 = vpop.f32.mrb[0].mxu0
        %v1590 = vadd.f32 0.0, %v1589
        %v1591 = vpop.f32.mrb[0].mxu0
        %v1592 = vpop.f32.mrb[0].mxu0
        %v1593 = vadd.f32 0.0, %v1592
        %v1594 = vpop.f32.mrb[0].mxu0
        %1595 = vmatprep.mubr.bf16.mxu0 0
        %1596 = vmatmul.mubr.bf16.gmra.mrb[0].mxu0 %v1433
        %v1597 = vpop.f32.mrb[0].mxu0
        %v1598 = vadd.f32 0.0, %v1597
        %v1599 = vpop.f32.mrb[0].mxu0
        %v1600 = vpop.f32.mrb[0].mxu0
        %v1601 = vadd.f32 0.0, %v1600
        %v1602 = vpop.f32.mrb[0].mxu0
        %1603 = vmatprep.mubr.bf16.mxu0 0
        %1604 = vmatmul.mubr.bf16.gmra.mrb[0].mxu0 %v1434
        %v1605 = vpop.f32.mrb[0].mxu0
        %v1606 = vadd.f32 0.0, %v1605
        %v1607 = vpop.f32.mrb[0].mxu0
        %v1608 = vpop.f32.mrb[0].mxu0
        %v1609 = vadd.f32 0.0, %v1608
        %v1610 = vpop.f32.mrb[0].mxu0
        %1611 = vmatprep.mubr.bf16.mxu0 0
        %1612 = vmatmul.mubr.bf16.gmra.mrb[0].mxu0 %v1435
        %v1613 = vpop.f32.mrb[0].mxu0
        %v1614 = vadd.f32 0.0, %v1613
        %v1615 = vpop.f32.mrb[0].mxu0
        %v1616 = vpop.f32.mrb[0].mxu0
        %v1617 = vadd.f32 0.0, %v1616
        %v1618 = vpop.f32.mrb[0].mxu0
        %1619 = vmatprep.mubr.bf16.mxu0 0
        %1620 = vmatmul.mubr.bf16.gmra.mrb[0].mxu0 %v1436
        %v1621 = vpop.f32.mrb[0].mxu0
        %v1622 = vadd.f32 0.0, %v1621
        %v1623 = vpop.f32.mrb[0].mxu0
        %v1624 = vpop.f32.mrb[0].mxu0
        %v1625 = vadd.f32 0.0, %v1624
        %v1626 = vpop.f32.mrb[0].mxu0
        %1627 = vmatprep.mubr.bf16.mxu0 0
        %1628 = vmatmul.mubr.bf16.gmra.mrb[0].mxu0 %v1437
        %v1629 = vpop.f32.mrb[0].mxu0
        %v1630 = vadd.f32 0.0, %v1629
        %v1631 = vpop.f32.mrb[0].mxu0
        %v1632 = vpop.f32.mrb[0].mxu0
        %v1633 = vadd.f32 0.0, %v1632
        %v1634 = vpop.f32.mrb[0].mxu0
        %1635 = vmatprep.mubr.bf16.mxu0 0
        %1636 = vmatmul.mubr.bf16.gmra.mrb[0].mxu0 %v1438
        %v1637 = vpop.f32.mrb[0].mxu0
        %v1638 = vadd.f32 0.0, %v1637
        %v1639 = vpop.f32.mrb[0].mxu0
        %v1640 = vpop.f32.mrb[0].mxu0
        %v1641 = vadd.f32 0.0, %v1640
        %v1642 = vpop.f32.mrb[0].mxu0
        %1643 = vmatprep.mubr.bf16.mxu0 0
        %1644 = vmatmul.mubr.bf16.gmra.mrb[0].mxu0 %v1439
        %v1645 = vpop.f32.mrb[0].mxu0
        %v1646 = vadd.f32 0.0, %v1645
        %v1647 = vpop.f32.mrb[0].mxu0
        %v1648 = vpop.f32.mrb[0].mxu0
        %v1649 = vadd.f32 0.0, %v1648
        %v1650 = vpop.f32.mrb[0].mxu0
        %1651 = vmatprep.mubr.bf16.mxu0 0
        %1652 = vmatmul.mubr.bf16.gmra.mrb[0].mxu0 %v1440
        %v1653 = vpop.f32.mrb[0].mxu0
        %v1654 = vadd.f32 0.0, %v1653
        %v1655 = vpop.f32.mrb[0].mxu0
        %v1656 = vpop.f32.mrb[0].mxu0
        %v1657 = vadd.f32 0.0, %v1656
        %v1658 = vpop.f32.mrb[0].mxu0
        %1659 = vmatprep.mubr.bf16.mxu0 0
        %1660 = vmatmul.mubr.bf16.gmra.mrb[0].mxu0 %v1441
        %v1661 = vpop.f32.mrb[0].mxu0
        %v1662 = vadd.f32 0.0, %v1661
        %v1663 = vpop.f32.mrb[0].mxu0
        %v1664 = vpop.f32.mrb[0].mxu0
        %v1665 = vadd.f32 0.0, %v1664
        %v1666 = vpop.f32.mrb[0].mxu0
        %1667 = vdwg.mxu0
        %v1684 = vunpack.c.l.b16 %v1378
        %v1685 = vunpack.c.l.b16 %v1379
        %v1686 = vunpack.c.l.b16 %v1380
        %v1687 = vunpack.c.l.b16 %v1381
        %v1688 = vunpack.c.l.b16 %v1382
        %v1689 = vunpack.c.l.b16 %v1383
        %v1690 = vunpack.c.l.b16 %v1384
        %v1691 = vunpack.c.l.b16 %v1385
        %v1692 = vunpack.c.l.b16 %v1386
        %v1693 = vunpack.c.l.b16 %v1387
        %v1694 = vunpack.c.l.b16 %v1388
        %v1695 = vunpack.c.l.b16 %v1389
        %v1696 = vunpack.c.l.b16 %v1390
        %v1697 = vunpack.c.l.b16 %v1391
        %v1698 = vunpack.c.l.b16 %v1392
        %v1699 = vunpack.c.l.b16 %v1393
        %v1700 = vpack.c.b16 %v1685, %v1684
        %v1701 = vpack.c.b16 %v1687, %v1686
        %v1702 = vpack.c.b16 %v1689, %v1688
        %v1703 = vpack.c.b16 %v1691, %v1690
        %v1704 = vpack.c.b16 %v1693, %v1692
        %v1705 = vpack.c.b16 %v1695, %v1694
        %v1706 = vpack.c.b16 %v1697, %v1696
        %v1707 = vpack.c.b16 %v1699, %v1698
        %1716 = vmatprep.subr.bf16.mxu0 0
        %1717 = vmatpush1.bf16.msra.mxu0 %v1700
        %1718 = vmatprep.subr.bf16.mxu0 0
        %1719 = vmatpush1.bf16.msra.mxu0 %v1701
        %1720 = vmatprep.subr.bf16.mxu0 0
        %1721 = vmatpush1.bf16.msra.mxu0 %v1702
        %1722 = vmatprep.subr.bf16.mxu0 0
        %1723 = vmatpush1.bf16.msra.mxu0 %v1703
        %1724 = vmatprep.subr.bf16.mxu0 0
        %1725 = vmatpush1.bf16.msra.mxu0 %v1704
        %1726 = vmatprep.subr.bf16.mxu0 0
        %1727 = vmatpush1.bf16.msra.mxu0 %v1705
        %1728 = vmatprep.subr.bf16.mxu0 0
        %1729 = vmatpush1.bf16.msra.mxu0 %v1706
        %1730 = vmatprep.subr.bf16.mxu0 0
        %1731 = vmatpush1.bf16.msra.mxu0 %v1707
        %1732 = vmatprep.subr.bf16.mxu0 0
        %1733 = vmatpush1.bf16.msra.mxu0 0
        %1734 = vmatprep.subr.bf16.mxu0 0
        %1735 = vmatpush1.bf16.msra.mxu0 0
        %1736 = vmatprep.subr.bf16.mxu0 0
        %1737 = vmatpush1.bf16.msra.mxu0 0
        %1738 = vmatprep.subr.bf16.mxu0 0
        %1739 = vmatpush1.bf16.msra.mxu0 0
        %1740 = vmatprep.subr.bf16.mxu0 0
        %1741 = vmatpush1.bf16.msra.mxu0 0
        %1742 = vmatprep.subr.bf16.mxu0 0
        %1743 = vmatpush1.bf16.msra.mxu0 0
        %1744 = vmatprep.subr.bf16.mxu0 0
        %1745 = vmatpush1.bf16.msra.mxu0 0
        %1746 = vmatprep.subr.bf16.mxu0 0
        %1747 = vmatpush1.bf16.msra.mxu0 0
        %1748 = vmatprep.mubr.bf16.mxu0 0
        %1749 = vmatmul.mubr.bf16.gmra.mrb[0].mxu0 %v1362
        %v1750 = vpop.f32.mrb[0].mxu0
        %v1751 = vadd.f32 %v1542, %v1750
        %v1752 = vpop.f32.mrb[0].mxu0
        %v1753 = vpop.f32.mrb[0].mxu0
        %v1754 = vadd.f32 %v1545, %v1753
        %v1755 = vpop.f32.mrb[0].mxu0
        %1756 = vmatprep.mubr.bf16.mxu0 0
        %1757 = vmatmul.mubr.bf16.gmra.mrb[0].mxu0 %v1363
        %v1758 = vpop.f32.mrb[0].mxu0
        %v1759 = vadd.f32 %v1550, %v1758
        %v1760 = vpop.f32.mrb[0].mxu0
        %v1761 = vpop.f32.mrb[0].mxu0
        %v1762 = vadd.f32 %v1553, %v1761
        %v1763 = vpop.f32.mrb[0].mxu0
        %1764 = vmatprep.mubr.bf16.mxu0 0
        %1765 = vmatmul.mubr.bf16.gmra.mrb[0].mxu0 %v1364
        %v1766 = vpop.f32.mrb[0].mxu0
        %v1767 = vadd.f32 %v1558, %v1766
        %v1768 = vpop.f32.mrb[0].mxu0
        %v1769 = vpop.f32.mrb[0].mxu0
        %v1770 = vadd.f32 %v1561, %v1769
        %v1771 = vpop.f32.mrb[0].mxu0
        %1772 = vmatprep.mubr.bf16.mxu0 0
        %1773 = vmatmul.mubr.bf16.gmra.mrb[0].mxu0 %v1365
        %v1774 = vpop.f32.mrb[0].mxu0
        %v1775 = vadd.f32 %v1566, %v1774
        %v1776 = vpop.f32.mrb[0].mxu0
        %v1777 = vpop.f32.mrb[0].mxu0
        %v1778 = vadd.f32 %v1569, %v1777
        %v1779 = vpop.f32.mrb[0].mxu0
        %1780 = vmatprep.mubr.bf16.mxu0 0
        %1781 = vmatmul.mubr.bf16.gmra.mrb[0].mxu0 %v1366
        %v1782 = vpop.f32.mrb[0].mxu0
        %v1783 = vadd.f32 %v1574, %v1782
        %v1784 = vpop.f32.mrb[0].mxu0
        %v1785 = vpop.f32.mrb[0].mxu0
        %v1786 = vadd.f32 %v1577, %v1785
        %v1787 = vpop.f32.mrb[0].mxu0
        %1788 = vmatprep.mubr.bf16.mxu0 0
        %1789 = vmatmul.mubr.bf16.gmra.mrb[0].mxu0 %v1367
        %v1790 = vpop.f32.mrb[0].mxu0
        %v1791 = vadd.f32 %v1582, %v1790
        %v1792 = vpop.f32.mrb[0].mxu0
        %v1793 = vpop.f32.mrb[0].mxu0
        %v1794 = vadd.f32 %v1585, %v1793
        %v1795 = vpop.f32.mrb[0].mxu0
        %1796 = vmatprep.mubr.bf16.mxu0 0
        %1797 = vmatmul.mubr.bf16.gmra.mrb[0].mxu0 %v1368
        %v1798 = vpop.f32.mrb[0].mxu0
        %v1799 = vadd.f32 %v1590, %v1798
        %v1800 = vpop.f32.mrb[0].mxu0
        %v1801 = vpop.f32.mrb[0].mxu0
        %v1802 = vadd.f32 %v1593, %v1801
        %v1803 = vpop.f32.mrb[0].mxu0
        %1804 = vmatprep.mubr.bf16.mxu0 0
        %1805 = vmatmul.mubr.bf16.gmra.mrb[0].mxu0 %v1369
        %v1806 = vpop.f32.mrb[0].mxu0
        %v1807 = vadd.f32 %v1598, %v1806
        %v1808 = vpop.f32.mrb[0].mxu0
        %v1809 = vpop.f32.mrb[0].mxu0
        %v1810 = vadd.f32 %v1601, %v1809
        %v1811 = vpop.f32.mrb[0].mxu0
        %1812 = vmatprep.mubr.bf16.mxu0 0
        %1813 = vmatmul.mubr.bf16.gmra.mrb[0].mxu0 %v1370
        %v1814 = vpop.f32.mrb[0].mxu0
        %v1815 = vadd.f32 %v1606, %v1814
        %v1816 = vpop.f32.mrb[0].mxu0
        %v1817 = vpop.f32.mrb[0].mxu0
        %v1818 = vadd.f32 %v1609, %v1817
        %v1819 = vpop.f32.mrb[0].mxu0
        %1820 = vmatprep.mubr.bf16.mxu0 0
        %1821 = vmatmul.mubr.bf16.gmra.mrb[0].mxu0 %v1371
        %v1822 = vpop.f32.mrb[0].mxu0
        %v1823 = vadd.f32 %v1614, %v1822
        %v1824 = vpop.f32.mrb[0].mxu0
        %v1825 = vpop.f32.mrb[0].mxu0
        %v1826 = vadd.f32 %v1617, %v1825
        %v1827 = vpop.f32.mrb[0].mxu0
        %1828 = vmatprep.mubr.bf16.mxu0 0
        %1829 = vmatmul.mubr.bf16.gmra.mrb[0].mxu0 %v1372
        %v1830 = vpop.f32.mrb[0].mxu0
        %v1831 = vadd.f32 %v1622, %v1830
        %v1832 = vpop.f32.mrb[0].mxu0
        %v1833 = vpop.f32.mrb[0].mxu0
        %v1834 = vadd.f32 %v1625, %v1833
        %v1835 = vpop.f32.mrb[0].mxu0
        %1836 = vmatprep.mubr.bf16.mxu0 0
        %1837 = vmatmul.mubr.bf16.gmra.mrb[0].mxu0 %v1373
        %v1838 = vpop.f32.mrb[0].mxu0
        %v1839 = vadd.f32 %v1630, %v1838
        %v1840 = vpop.f32.mrb[0].mxu0
        %v1841 = vpop.f32.mrb[0].mxu0
        %v1842 = vadd.f32 %v1633, %v1841
        %v1843 = vpop.f32.mrb[0].mxu0
        %1844 = vmatprep.mubr.bf16.mxu0 0
        %1845 = vmatmul.mubr.bf16.gmra.mrb[0].mxu0 %v1374
        %v1846 = vpop.f32.mrb[0].mxu0
        %v1847 = vadd.f32 %v1638, %v1846
        %v1848 = vpop.f32.mrb[0].mxu0
        %v1849 = vpop.f32.mrb[0].mxu0
        %v1850 = vadd.f32 %v1641, %v1849
        %v1851 = vpop.f32.mrb[0].mxu0
        %1852 = vmatprep.mubr.bf16.mxu0 0
        %1853 = vmatmul.mubr.bf16.gmra.mrb[0].mxu0 %v1375
        %v1854 = vpop.f32.mrb[0].mxu0
        %v1855 = vadd.f32 %v1646, %v1854
        %v1856 = vpop.f32.mrb[0].mxu0
        %v1857 = vpop.f32.mrb[0].mxu0
        %v1858 = vadd.f32 %v1649, %v1857
        %v1859 = vpop.f32.mrb[0].mxu0
        %1860 = vmatprep.mubr.bf16.mxu0 0
        %1861 = vmatmul.mubr.bf16.gmra.mrb[0].mxu0 %v1376
        %v1862 = vpop.f32.mrb[0].mxu0
        %v1863 = vadd.f32 %v1654, %v1862
        %v1864 = vpop.f32.mrb[0].mxu0
        %v1865 = vpop.f32.mrb[0].mxu0
        %v1866 = vadd.f32 %v1657, %v1865
        %v1867 = vpop.f32.mrb[0].mxu0
        %1868 = vmatprep.mubr.bf16.mxu0 0
        %1869 = vmatmul.mubr.bf16.gmra.mrb[0].mxu0 %v1377
        %v1870 = vpop.f32.mrb[0].mxu0
        %v1871 = vadd.f32 %v1662, %v1870
        %v1872 = vpop.f32.mrb[0].mxu0
        %v1873 = vpop.f32.mrb[0].mxu0
        %v1874 = vadd.f32 %v1665, %v1873
        %v1875 = vpop.f32.mrb[0].mxu0
        %1876 = vdwg.mxu0
        %v1877 = vld [vmem:[#allocation2 + $0x9] sm:$0xff]
        %v1878 = vld [vmem:[#allocation2 + $0x11] sm:$0xff]
        %v1879 = vld [vmem:[#allocation2 + $0x29] sm:$0xff]
        %v1880 = vld [vmem:[#allocation2 + $0x31] sm:$0xff]
        %v1881 = vld [vmem:[#allocation2 + $0x49] sm:$0xff]
        %v1882 = vld [vmem:[#allocation2 + $0x51] sm:$0xff]
        %v1883 = vld [vmem:[#allocation2 + $0x69] sm:$0xff]
        %v1884 = vld [vmem:[#allocation2 + $0x71] sm:$0xff]
        %v1885 = vld [vmem:[#allocation2 + $0x89] sm:$0xff]
        %v1886 = vld [vmem:[#allocation2 + $0x91] sm:$0xff]
        %v1887 = vld [vmem:[#allocation2 + $0xa9] sm:$0xff]
        %v1888 = vld [vmem:[#allocation2 + $0xb1] sm:$0xff]
        %v1889 = vld [vmem:[#allocation2 + $0xc9] sm:$0xff]
        %v1890 = vld [vmem:[#allocation2 + $0xd1] sm:$0xff]
        %v1891 = vld [vmem:[#allocation2 + $0xe9] sm:$0xff]
        %v1892 = vld [vmem:[#allocation2 + $0xf1] sm:$0xff]
        %v1893 = vld [vmem:[#allocation2 + $0x109] sm:$0xff]
        %v1894 = vld [vmem:[#allocation2 + $0x111] sm:$0xff]
        %v1895 = vld [vmem:[#allocation2 + $0x129] sm:$0xff]
        %v1896 = vld [vmem:[#allocation2 + $0x131] sm:$0xff]
        %v1897 = vld [vmem:[#allocation2 + $0x149] sm:$0xff]
        %v1898 = vld [vmem:[#allocation2 + $0x151] sm:$0xff]
        %v1899 = vld [vmem:[#allocation2 + $0x169] sm:$0xff]
        %v1900 = vld [vmem:[#allocation2 + $0x171] sm:$0xff]
        %v1901 = vld [vmem:[#allocation2 + $0x189] sm:$0xff]
        %v1902 = vld [vmem:[#allocation2 + $0x191] sm:$0xff]
        %v1903 = vld [vmem:[#allocation2 + $0x1a9] sm:$0xff]
        %v1904 = vld [vmem:[#allocation2 + $0x1b1] sm:$0xff]
        %v1905 = vld [vmem:[#allocation2 + $0x1c9] sm:$0xff]
        %v1906 = vld [vmem:[#allocation2 + $0x1d1] sm:$0xff]
        %v1907 = vld [vmem:[#allocation2 + $0x1e9] sm:$0xff]
        %v1908 = vld [vmem:[#allocation2 + $0x1f1] sm:$0xff]
        %v1909 = vpack.c.bf16 %v1878, %v1877
        %v1910 = vpack.c.bf16 %v1880, %v1879
        %v1911 = vpack.c.bf16 %v1882, %v1881
        %v1912 = vpack.c.bf16 %v1884, %v1883
        %v1913 = vpack.c.bf16 %v1886, %v1885
        %v1914 = vpack.c.bf16 %v1888, %v1887
        %v1915 = vpack.c.bf16 %v1890, %v1889
        %v1916 = vpack.c.bf16 %v1892, %v1891
        %v1917 = vpack.c.bf16 %v1894, %v1893
        %v1918 = vpack.c.bf16 %v1896, %v1895
        %v1919 = vpack.c.bf16 %v1898, %v1897
        %v1920 = vpack.c.bf16 %v1900, %v1899
        %v1921 = vpack.c.bf16 %v1902, %v1901
        %v1922 = vpack.c.bf16 %v1904, %v1903
        %v1923 = vpack.c.bf16 %v1906, %v1905
        %v1924 = vpack.c.bf16 %v1908, %v1907
        %s1925 = scalar_lea.vmem [#allocation9], 128
        %v1926 = vld [vmem:[%s1925] sm:$0xf]
        %v1927 = vld [vmem:[%s1925 + $0x4] sm:$0xf]
        %v1928 = vld [vmem:[%s1925 + $0x8] sm:$0xf]
        %v1929 = vld [vmem:[%s1925 + $0xc] sm:$0xf]
        %v1930 = vld [vmem:[%s1925 + $0x10] sm:$0xf]
        %v1931 = vld [vmem:[%s1925 + $0x14] sm:$0xf]
        %v1932 = vld [vmem:[%s1925 + $0x18] sm:$0xf]
        %v1933 = vld [vmem:[%s1925 + $0x1c] sm:$0xf]
        %v1934 = vld [vmem:[%s1925 + $0x20] sm:$0xf]
        %v1935 = vld [vmem:[%s1925 + $0x24] sm:$0xf]
        %v1936 = vld [vmem:[%s1925 + $0x28] sm:$0xf]
        %v1937 = vld [vmem:[%s1925 + $0x2c] sm:$0xf]
        %v1938 = vld [vmem:[%s1925 + $0x30] sm:$0xf]
        %v1939 = vld [vmem:[%s1925 + $0x34] sm:$0xf]
        %v1940 = vld [vmem:[%s1925 + $0x38] sm:$0xf]
        %v1941 = vld [vmem:[%s1925 + $0x3c] sm:$0xf]
        %v1958 = vunpack.c.l.b16 %v1926
        %v1959 = vunpack.c.l.b16 %v1927
        %v1960 = vunpack.c.l.b16 %v1928
        %v1961 = vunpack.c.l.b16 %v1929
        %v1962 = vunpack.c.l.b16 %v1930
        %v1963 = vunpack.c.l.b16 %v1931
        %v1964 = vunpack.c.l.b16 %v1932
        %v1965 = vunpack.c.l.b16 %v1933
        %v1966 = vunpack.c.l.b16 %v1934
        %v1967 = vunpack.c.l.b16 %v1935
        %v1968 = vunpack.c.l.b16 %v1936
        %v1969 = vunpack.c.l.b16 %v1937
        %v1970 = vunpack.c.l.b16 %v1938
        %v1971 = vunpack.c.l.b16 %v1939
        %v1972 = vunpack.c.l.b16 %v1940
        %v1973 = vunpack.c.l.b16 %v1941
        %v1974 = vpack.c.b16 %v1959, %v1958
        %v1975 = vpack.c.b16 %v1961, %v1960
        %v1976 = vpack.c.b16 %v1963, %v1962
        %v1977 = vpack.c.b16 %v1965, %v1964
        %v1978 = vpack.c.b16 %v1967, %v1966
        %v1979 = vpack.c.b16 %v1969, %v1968
        %v1980 = vpack.c.b16 %v1971, %v1970
        %v1981 = vpack.c.b16 %v1973, %v1972
        %1990 = vmatprep.subr.bf16.mxu0 0
        %1991 = vmatpush1.bf16.msra.mxu0 %v1974
        %1992 = vmatprep.subr.bf16.mxu0 0
        %1993 = vmatpush1.bf16.msra.mxu0 %v1975
        %1994 = vmatprep.subr.bf16.mxu0 0
        %1995 = vmatpush1.bf16.msra.mxu0 %v1976
        %1996 = vmatprep.subr.bf16.mxu0 0
        %1997 = vmatpush1.bf16.msra.mxu0 %v1977
        %1998 = vmatprep.subr.bf16.mxu0 0
        %1999 = vmatpush1.bf16.msra.mxu0 %v1978
        %2000 = vmatprep.subr.bf16.mxu0 0
        %2001 = vmatpush1.bf16.msra.mxu0 %v1979
        %2002 = vmatprep.subr.bf16.mxu0 0
        %2003 = vmatpush1.bf16.msra.mxu0 %v1980
        %2004 = vmatprep.subr.bf16.mxu0 0
        %2005 = vmatpush1.bf16.msra.mxu0 %v1981
        %2006 = vmatprep.subr.bf16.mxu0 0
        %2007 = vmatpush1.bf16.msra.mxu0 0
        %2008 = vmatprep.subr.bf16.mxu0 0
        %2009 = vmatpush1.bf16.msra.mxu0 0
        %2010 = vmatprep.subr.bf16.mxu0 0
        %2011 = vmatpush1.bf16.msra.mxu0 0
        %2012 = vmatprep.subr.bf16.mxu0 0
        %2013 = vmatpush1.bf16.msra.mxu0 0
        %2014 = vmatprep.subr.bf16.mxu0 0
        %2015 = vmatpush1.bf16.msra.mxu0 0
        %2016 = vmatprep.subr.bf16.mxu0 0
        %2017 = vmatpush1.bf16.msra.mxu0 0
        %2018 = vmatprep.subr.bf16.mxu0 0
        %2019 = vmatpush1.bf16.msra.mxu0 0
        %2020 = vmatprep.subr.bf16.mxu0 0
        %2021 = vmatpush1.bf16.msra.mxu0 0
        %2022 = vmatprep.mubr.bf16.mxu0 0
        %2023 = vmatmul.mubr.bf16.gmra.mrb[0].mxu0 %v1909
        %v2024 = vpop.f32.mrb[0].mxu0
        %v2025 = vadd.f32 0.0, %v2024
        %v2026 = vpop.f32.mrb[0].mxu0
        %v2027 = vpop.f32.mrb[0].mxu0
        %v2028 = vadd.f32 0.0, %v2027
        %v2029 = vpop.f32.mrb[0].mxu0
        %2030 = vmatprep.mubr.bf16.mxu0 0
        %2031 = vmatmul.mubr.bf16.gmra.mrb[0].mxu0 %v1910
        %v2032 = vpop.f32.mrb[0].mxu0
        %v2033 = vadd.f32 0.0, %v2032
        %v2034 = vpop.f32.mrb[0].mxu0
        %v2035 = vpop.f32.mrb[0].mxu0
        %v2036 = vadd.f32 0.0, %v2035
        %v2037 = vpop.f32.mrb[0].mxu0
        %2038 = vmatprep.mubr.bf16.mxu0 0
        %2039 = vmatmul.mubr.bf16.gmra.mrb[0].mxu0 %v1911
        %v2040 = vpop.f32.mrb[0].mxu0
        %v2041 = vadd.f32 0.0, %v2040
        %v2042 = vpop.f32.mrb[0].mxu0
        %v2043 = vpop.f32.mrb[0].mxu0
        %v2044 = vadd.f32 0.0, %v2043
        %v2045 = vpop.f32.mrb[0].mxu0
        %2046 = vmatprep.mubr.bf16.mxu0 0
        %2047 = vmatmul.mubr.bf16.gmra.mrb[0].mxu0 %v1912
        %v2048 = vpop.f32.mrb[0].mxu0
        %v2049 = vadd.f32 0.0, %v2048
        %v2050 = vpop.f32.mrb[0].mxu0
        %v2051 = vpop.f32.mrb[0].mxu0
        %v2052 = vadd.f32 0.0, %v2051
        %v2053 = vpop.f32.mrb[0].mxu0
        %2054 = vmatprep.mubr.bf16.mxu0 0
        %2055 = vmatmul.mubr.bf16.gmra.mrb[0].mxu0 %v1913
        %v2056 = vpop.f32.mrb[0].mxu0
        %v2057 = vadd.f32 0.0, %v2056
        %v2058 = vpop.f32.mrb[0].mxu0
        %v2059 = vpop.f32.mrb[0].mxu0
        %v2060 = vadd.f32 0.0, %v2059
        %v2061 = vpop.f32.mrb[0].mxu0
        %2062 = vmatprep.mubr.bf16.mxu0 0
        %2063 = vmatmul.mubr.bf16.gmra.mrb[0].mxu0 %v1914
        %v2064 = vpop.f32.mrb[0].mxu0
        %v2065 = vadd.f32 0.0, %v2064
        %v2066 = vpop.f32.mrb[0].mxu0
        %v2067 = vpop.f32.mrb[0].mxu0
        %v2068 = vadd.f32 0.0, %v2067
        %v2069 = vpop.f32.mrb[0].mxu0
        %2070 = vmatprep.mubr.bf16.mxu0 0
        %2071 = vmatmul.mubr.bf16.gmra.mrb[0].mxu0 %v1915
        %v2072 = vpop.f32.mrb[0].mxu0
        %v2073 = vadd.f32 0.0, %v2072
        %v2074 = vpop.f32.mrb[0].mxu0
        %v2075 = vpop.f32.mrb[0].mxu0
        %v2076 = vadd.f32 0.0, %v2075
        %v2077 = vpop.f32.mrb[0].mxu0
        %2078 = vmatprep.mubr.bf16.mxu0 0
        %2079 = vmatmul.mubr.bf16.gmra.mrb[0].mxu0 %v1916
        %v2080 = vpop.f32.mrb[0].mxu0
        %v2081 = vadd.f32 0.0, %v2080
        %v2082 = vpop.f32.mrb[0].mxu0
        %v2083 = vpop.f32.mrb[0].mxu0
        %v2084 = vadd.f32 0.0, %v2083
        %v2085 = vpop.f32.mrb[0].mxu0
        %2086 = vmatprep.mubr.bf16.mxu0 0
        %2087 = vmatmul.mubr.bf16.gmra.mrb[0].mxu0 %v1917
        %v2088 = vpop.f32.mrb[0].mxu0
        %v2089 = vadd.f32 0.0, %v2088
        %v2090 = vpop.f32.mrb[0].mxu0
        %v2091 = vpop.f32.mrb[0].mxu0
        %v2092 = vadd.f32 0.0, %v2091
        %v2093 = vpop.f32.mrb[0].mxu0
        %2094 = vmatprep.mubr.bf16.mxu0 0
        %2095 = vmatmul.mubr.bf16.gmra.mrb[0].mxu0 %v1918
        %v2096 = vpop.f32.mrb[0].mxu0
        %v2097 = vadd.f32 0.0, %v2096
        %v2098 = vpop.f32.mrb[0].mxu0
        %v2099 = vpop.f32.mrb[0].mxu0
        %v2100 = vadd.f32 0.0, %v2099
        %v2101 = vpop.f32.mrb[0].mxu0
        %2102 = vmatprep.mubr.bf16.mxu0 0
        %2103 = vmatmul.mubr.bf16.gmra.mrb[0].mxu0 %v1919
        %v2104 = vpop.f32.mrb[0].mxu0
        %v2105 = vadd.f32 0.0, %v2104
        %v2106 = vpop.f32.mrb[0].mxu0
        %v2107 = vpop.f32.mrb[0].mxu0
        %v2108 = vadd.f32 0.0, %v2107
        %v2109 = vpop.f32.mrb[0].mxu0
        %2110 = vmatprep.mubr.bf16.mxu0 0
        %2111 = vmatmul.mubr.bf16.gmra.mrb[0].mxu0 %v1920
        %v2112 = vpop.f32.mrb[0].mxu0
        %v2113 = vadd.f32 0.0, %v2112
        %v2114 = vpop.f32.mrb[0].mxu0
        %v2115 = vpop.f32.mrb[0].mxu0
        %v2116 = vadd.f32 0.0, %v2115
        %v2117 = vpop.f32.mrb[0].mxu0
        %2118 = vmatprep.mubr.bf16.mxu0 0
        %2119 = vmatmul.mubr.bf16.gmra.mrb[0].mxu0 %v1921
        %v2120 = vpop.f32.mrb[0].mxu0
        %v2121 = vadd.f32 0.0, %v2120
        %v2122 = vpop.f32.mrb[0].mxu0
        %v2123 = vpop.f32.mrb[0].mxu0
        %v2124 = vadd.f32 0.0, %v2123
        %v2125 = vpop.f32.mrb[0].mxu0
        %2126 = vmatprep.mubr.bf16.mxu0 0
        %2127 = vmatmul.mubr.bf16.gmra.mrb[0].mxu0 %v1922
        %v2128 = vpop.f32.mrb[0].mxu0
        %v2129 = vadd.f32 0.0, %v2128
        %v2130 = vpop.f32.mrb[0].mxu0
        %v2131 = vpop.f32.mrb[0].mxu0
        %v2132 = vadd.f32 0.0, %v2131
        %v2133 = vpop.f32.mrb[0].mxu0
        %2134 = vmatprep.mubr.bf16.mxu0 0
        %2135 = vmatmul.mubr.bf16.gmra.mrb[0].mxu0 %v1923
        %v2136 = vpop.f32.mrb[0].mxu0
        %v2137 = vadd.f32 0.0, %v2136
        %v2138 = vpop.f32.mrb[0].mxu0
        %v2139 = vpop.f32.mrb[0].mxu0
        %v2140 = vadd.f32 0.0, %v2139
        %v2141 = vpop.f32.mrb[0].mxu0
        %2142 = vmatprep.mubr.bf16.mxu0 0
        %2143 = vmatmul.mubr.bf16.gmra.mrb[0].mxu0 %v1924
        %v2144 = vpop.f32.mrb[0].mxu0
        %v2145 = vadd.f32 0.0, %v2144
        %v2146 = vpop.f32.mrb[0].mxu0
        %v2147 = vpop.f32.mrb[0].mxu0
        %v2148 = vadd.f32 0.0, %v2147
        %v2149 = vpop.f32.mrb[0].mxu0
        %2150 = vdwg.mxu0
        %v2151 = vadd.f32 %v1751, %v2025
        %v2152 = vadd.f32 %v1754, %v2028
        %v2153 = vadd.f32 %v1759, %v2033
        %v2154 = vadd.f32 %v1762, %v2036
        %v2155 = vadd.f32 %v1767, %v2041
        %v2156 = vadd.f32 %v1770, %v2044
        %v2157 = vadd.f32 %v1775, %v2049
        %v2158 = vadd.f32 %v1778, %v2052
        %v2159 = vadd.f32 %v1783, %v2057
        %v2160 = vadd.f32 %v1786, %v2060
        %v2161 = vadd.f32 %v1791, %v2065
        %v2162 = vadd.f32 %v1794, %v2068
        %v2163 = vadd.f32 %v1799, %v2073
        %v2164 = vadd.f32 %v1802, %v2076
        %v2165 = vadd.f32 %v1807, %v2081
        %v2166 = vadd.f32 %v1810, %v2084
        %v2167 = vadd.f32 %v1815, %v2089
        %v2168 = vadd.f32 %v1818, %v2092
        %v2169 = vadd.f32 %v1823, %v2097
        %v2170 = vadd.f32 %v1826, %v2100
        %v2171 = vadd.f32 %v1831, %v2105
        %v2172 = vadd.f32 %v1834, %v2108
        %v2173 = vadd.f32 %v1839, %v2113
        %v2174 = vadd.f32 %v1842, %v2116
        %v2175 = vadd.f32 %v1847, %v2121
        %v2176 = vadd.f32 %v1850, %v2124
        %v2177 = vadd.f32 %v1855, %v2129
        %v2178 = vadd.f32 %v1858, %v2132
        %v2179 = vadd.f32 %v1863, %v2137
        %v2180 = vadd.f32 %v1866, %v2140
        %v2181 = vadd.f32 %v1871, %v2145
        %v2182 = vadd.f32 %v1874, %v2148
        %v2183 = vld [vmem:[%s1297 + $0x7] sm:$0xff]
        %v2184 = vld [vmem:[%s1297 + $0xf] sm:$0xff]
        %v2185 = vld [vmem:[%s1297 + $0x27] sm:$0xff]
        %v2186 = vld [vmem:[%s1297 + $0x2f] sm:$0xff]
        %v2187 = vld [vmem:[%s1297 + $0x47] sm:$0xff]
        %v2188 = vld [vmem:[%s1297 + $0x4f] sm:$0xff]
        %v2189 = vld [vmem:[%s1297 + $0x67] sm:$0xff]
        %v2190 = vld [vmem:[%s1297 + $0x6f] sm:$0xff]
        %v2191 = vld [vmem:[%s1297 + $0x87] sm:$0xff]
        %v2192 = vld [vmem:[%s1297 + $0x8f] sm:$0xff]
        %v2193 = vld [vmem:[%s1297 + $0xa7] sm:$0xff]
        %v2194 = vld [vmem:[%s1297 + $0xaf] sm:$0xff]
        %v2195 = vld [vmem:[%s1297 + $0xc7] sm:$0xff]
        %v2196 = vld [vmem:[%s1297 + $0xcf] sm:$0xff]
        %v2197 = vld [vmem:[%s1297 + $0xe7] sm:$0xff]
        %v2198 = vld [vmem:[%s1297 + $0xef] sm:$0xff]
        %v2199 = vld [vmem:[%s1297 + $0x107] sm:$0xff]
        %v2200 = vld [vmem:[%s1297 + $0x10f] sm:$0xff]
        %v2201 = vld [vmem:[%s1297 + $0x127] sm:$0xff]
        %v2202 = vld [vmem:[%s1297 + $0x12f] sm:$0xff]
        %v2203 = vld [vmem:[%s1297 + $0x147] sm:$0xff]
        %v2204 = vld [vmem:[%s1297 + $0x14f] sm:$0xff]
        %v2205 = vld [vmem:[%s1297 + $0x167] sm:$0xff]
        %v2206 = vld [vmem:[%s1297 + $0x16f] sm:$0xff]
        %v2207 = vld [vmem:[%s1297 + $0x187] sm:$0xff]
        %v2208 = vld [vmem:[%s1297 + $0x18f] sm:$0xff]
        %v2209 = vld [vmem:[%s1297 + $0x1a7] sm:$0xff]
        %v2210 = vld [vmem:[%s1297 + $0x1af] sm:$0xff]
        %v2211 = vld [vmem:[%s1297 + $0x1c7] sm:$0xff]
        %v2212 = vld [vmem:[%s1297 + $0x1cf] sm:$0xff]
        %v2213 = vld [vmem:[%s1297 + $0x1e7] sm:$0xff]
        %v2214 = vld [vmem:[%s1297 + $0x1ef] sm:$0xff]
        %v2215 = vpack.c.bf16 %v2184, %v2183
        %v2216 = vpack.c.bf16 %v2186, %v2185
        %v2217 = vpack.c.bf16 %v2188, %v2187
        %v2218 = vpack.c.bf16 %v2190, %v2189
        %v2219 = vpack.c.bf16 %v2192, %v2191
        %v2220 = vpack.c.bf16 %v2194, %v2193
        %v2221 = vpack.c.bf16 %v2196, %v2195
        %v2222 = vpack.c.bf16 %v2198, %v2197
        %v2223 = vpack.c.bf16 %v2200, %v2199
        %v2224 = vpack.c.bf16 %v2202, %v2201
        %v2225 = vpack.c.bf16 %v2204, %v2203
        %v2226 = vpack.c.bf16 %v2206, %v2205
        %v2227 = vpack.c.bf16 %v2208, %v2207
        %v2228 = vpack.c.bf16 %v2210, %v2209
        %v2229 = vpack.c.bf16 %v2212, %v2211
        %v2230 = vpack.c.bf16 %v2214, %v2213
        %s2231 = scalar_lea.vmem [#allocation9], 192
        %v2232 = vld [vmem:[%s2231] sm:$0xf]
        %v2233 = vld [vmem:[%s2231 + $0x4] sm:$0xf]
        %v2234 = vld [vmem:[%s2231 + $0x8] sm:$0xf]
        %v2235 = vld [vmem:[%s2231 + $0xc] sm:$0xf]
        %v2236 = vld [vmem:[%s2231 + $0x10] sm:$0xf]
        %v2237 = vld [vmem:[%s2231 + $0x14] sm:$0xf]
        %v2238 = vld [vmem:[%s2231 + $0x18] sm:$0xf]
        %v2239 = vld [vmem:[%s2231 + $0x1c] sm:$0xf]
        %v2240 = vld [vmem:[%s2231 + $0x20] sm:$0xf]
        %v2241 = vld [vmem:[%s2231 + $0x24] sm:$0xf]
        %v2242 = vld [vmem:[%s2231 + $0x28] sm:$0xf]
        %v2243 = vld [vmem:[%s2231 + $0x2c] sm:$0xf]
        %v2244 = vld [vmem:[%s2231 + $0x30] sm:$0xf]
        %v2245 = vld [vmem:[%s2231 + $0x34] sm:$0xf]
        %v2246 = vld [vmem:[%s2231 + $0x38] sm:$0xf]
        %v2247 = vld [vmem:[%s2231 + $0x3c] sm:$0xf]
        %v2264 = vunpack.c.l.b16 %v2232
        %v2265 = vunpack.c.l.b16 %v2233
        %v2266 = vunpack.c.l.b16 %v2234
        %v2267 = vunpack.c.l.b16 %v2235
        %v2268 = vunpack.c.l.b16 %v2236
        %v2269 = vunpack.c.l.b16 %v2237
        %v2270 = vunpack.c.l.b16 %v2238
        %v2271 = vunpack.c.l.b16 %v2239
        %v2272 = vunpack.c.l.b16 %v2240
        %v2273 = vunpack.c.l.b16 %v2241
        %v2274 = vunpack.c.l.b16 %v2242
        %v2275 = vunpack.c.l.b16 %v2243
        %v2276 = vunpack.c.l.b16 %v2244
        %v2277 = vunpack.c.l.b16 %v2245
        %v2278 = vunpack.c.l.b16 %v2246
        %v2279 = vunpack.c.l.b16 %v2247
        %v2280 = vpack.c.b16 %v2265, %v2264
        %v2281 = vpack.c.b16 %v2267, %v2266
        %v2282 = vpack.c.b16 %v2269, %v2268
        %v2283 = vpack.c.b16 %v2271, %v2270
        %v2284 = vpack.c.b16 %v2273, %v2272
        %v2285 = vpack.c.b16 %v2275, %v2274
        %v2286 = vpack.c.b16 %v2277, %v2276
        %v2287 = vpack.c.b16 %v2279, %v2278
        %2296 = vmatprep.subr.bf16.mxu0 0
        %2297 = vmatpush1.bf16.msra.mxu0 %v2280
        %2298 = vmatprep.subr.bf16.mxu0 0
        %2299 = vmatpush1.bf16.msra.mxu0 %v2281
        %2300 = vmatprep.subr.bf16.mxu0 0
        %2301 = vmatpush1.bf16.msra.mxu0 %v2282
        %2302 = vmatprep.subr.bf16.mxu0 0
        %2303 = vmatpush1.bf16.msra.mxu0 %v2283
        %2304 = vmatprep.subr.bf16.mxu0 0
        %2305 = vmatpush1.bf16.msra.mxu0 %v2284
        %2306 = vmatprep.subr.bf16.mxu0 0
        %2307 = vmatpush1.bf16.msra.mxu0 %v2285
        %2308 = vmatprep.subr.bf16.mxu0 0
        %2309 = vmatpush1.bf16.msra.mxu0 %v2286
        %2310 = vmatprep.subr.bf16.mxu0 0
        %2311 = vmatpush1.bf16.msra.mxu0 %v2287
        %2312 = vmatprep.subr.bf16.mxu0 0
        %2313 = vmatpush1.bf16.msra.mxu0 0
        %2314 = vmatprep.subr.bf16.mxu0 0
        %2315 = vmatpush1.bf16.msra.mxu0 0
        %2316 = vmatprep.subr.bf16.mxu0 0
        %2317 = vmatpush1.bf16.msra.mxu0 0
        %2318 = vmatprep.subr.bf16.mxu0 0
        %2319 = vmatpush1.bf16.msra.mxu0 0
        %2320 = vmatprep.subr.bf16.mxu0 0
        %2321 = vmatpush1.bf16.msra.mxu0 0
        %2322 = vmatprep.subr.bf16.mxu0 0
        %2323 = vmatpush1.bf16.msra.mxu0 0
        %2324 = vmatprep.subr.bf16.mxu0 0
        %2325 = vmatpush1.bf16.msra.mxu0 0
        %2326 = vmatprep.subr.bf16.mxu0 0
        %2327 = vmatpush1.bf16.msra.mxu0 0
        %2328 = vmatprep.mubr.bf16.mxu0 0
        %2329 = vmatmul.mubr.bf16.gmra.mrb[0].mxu0 %v2215
        %v2330 = vpop.f32.mrb[0].mxu0
        %v2331 = vadd.f32 0.0, %v2330
        %v2332 = vpop.f32.mrb[0].mxu0
        %v2333 = vpop.f32.mrb[0].mxu0
        %v2334 = vadd.f32 0.0, %v2333
        %v2335 = vpop.f32.mrb[0].mxu0
        %2336 = vmatprep.mubr.bf16.mxu0 0
        %2337 = vmatmul.mubr.bf16.gmra.mrb[0].mxu0 %v2216
        %v2338 = vpop.f32.mrb[0].mxu0
        %v2339 = vadd.f32 0.0, %v2338
        %v2340 = vpop.f32.mrb[0].mxu0
        %v2341 = vpop.f32.mrb[0].mxu0
        %v2342 = vadd.f32 0.0, %v2341
        %v2343 = vpop.f32.mrb[0].mxu0
        %2344 = vmatprep.mubr.bf16.mxu0 0
        %2345 = vmatmul.mubr.bf16.gmra.mrb[0].mxu0 %v2217
        %v2346 = vpop.f32.mrb[0].mxu0
        %v2347 = vadd.f32 0.0, %v2346
        %v2348 = vpop.f32.mrb[0].mxu0
        %v2349 = vpop.f32.mrb[0].mxu0
        %v2350 = vadd.f32 0.0, %v2349
        %v2351 = vpop.f32.mrb[0].mxu0
        %2352 = vmatprep.mubr.bf16.mxu0 0
        %2353 = vmatmul.mubr.bf16.gmra.mrb[0].mxu0 %v2218
        %v2354 = vpop.f32.mrb[0].mxu0
        %v2355 = vadd.f32 0.0, %v2354
        %v2356 = vpop.f32.mrb[0].mxu0
        %v2357 = vpop.f32.mrb[0].mxu0
        %v2358 = vadd.f32 0.0, %v2357
        %v2359 = vpop.f32.mrb[0].mxu0
        %2360 = vmatprep.mubr.bf16.mxu0 0
        %2361 = vmatmul.mubr.bf16.gmra.mrb[0].mxu0 %v2219
        %v2362 = vpop.f32.mrb[0].mxu0
        %v2363 = vadd.f32 0.0, %v2362
        %v2364 = vpop.f32.mrb[0].mxu0
        %v2365 = vpop.f32.mrb[0].mxu0
        %v2366 = vadd.f32 0.0, %v2365
        %v2367 = vpop.f32.mrb[0].mxu0
        %2368 = vmatprep.mubr.bf16.mxu0 0
        %2369 = vmatmul.mubr.bf16.gmra.mrb[0].mxu0 %v2220
        %v2370 = vpop.f32.mrb[0].mxu0
        %v2371 = vadd.f32 0.0, %v2370
        %v2372 = vpop.f32.mrb[0].mxu0
        %v2373 = vpop.f32.mrb[0].mxu0
        %v2374 = vadd.f32 0.0, %v2373
        %v2375 = vpop.f32.mrb[0].mxu0
        %2376 = vmatprep.mubr.bf16.mxu0 0
        %2377 = vmatmul.mubr.bf16.gmra.mrb[0].mxu0 %v2221
        %v2378 = vpop.f32.mrb[0].mxu0
        %v2379 = vadd.f32 0.0, %v2378
        %v2380 = vpop.f32.mrb[0].mxu0
        %v2381 = vpop.f32.mrb[0].mxu0
        %v2382 = vadd.f32 0.0, %v2381
        %v2383 = vpop.f32.mrb[0].mxu0
        %2384 = vmatprep.mubr.bf16.mxu0 0
        %2385 = vmatmul.mubr.bf16.gmra.mrb[0].mxu0 %v2222
        %v2386 = vpop.f32.mrb[0].mxu0
        %v2387 = vadd.f32 0.0, %v2386
        %v2388 = vpop.f32.mrb[0].mxu0
        %v2389 = vpop.f32.mrb[0].mxu0
        %v2390 = vadd.f32 0.0, %v2389
        %v2391 = vpop.f32.mrb[0].mxu0
        %2392 = vmatprep.mubr.bf16.mxu0 0
        %2393 = vmatmul.mubr.bf16.gmra.mrb[0].mxu0 %v2223
        %v2394 = vpop.f32.mrb[0].mxu0
        %v2395 = vadd.f32 0.0, %v2394
        %v2396 = vpop.f32.mrb[0].mxu0
        %v2397 = vpop.f32.mrb[0].mxu0
        %v2398 = vadd.f32 0.0, %v2397
        %v2399 = vpop.f32.mrb[0].mxu0
        %2400 = vmatprep.mubr.bf16.mxu0 0
        %2401 = vmatmul.mubr.bf16.gmra.mrb[0].mxu0 %v2224
        %v2402 = vpop.f32.mrb[0].mxu0
        %v2403 = vadd.f32 0.0, %v2402
        %v2404 = vpop.f32.mrb[0].mxu0
        %v2405 = vpop.f32.mrb[0].mxu0
        %v2406 = vadd.f32 0.0, %v2405
        %v2407 = vpop.f32.mrb[0].mxu0
        %2408 = vmatprep.mubr.bf16.mxu0 0
        %2409 = vmatmul.mubr.bf16.gmra.mrb[0].mxu0 %v2225
        %v2410 = vpop.f32.mrb[0].mxu0
        %v2411 = vadd.f32 0.0, %v2410
        %v2412 = vpop.f32.mrb[0].mxu0
        %v2413 = vpop.f32.mrb[0].mxu0
        %v2414 = vadd.f32 0.0, %v2413
        %v2415 = vpop.f32.mrb[0].mxu0
        %2416 = vmatprep.mubr.bf16.mxu0 0
        %2417 = vmatmul.mubr.bf16.gmra.mrb[0].mxu0 %v2226
        %v2418 = vpop.f32.mrb[0].mxu0
        %v2419 = vadd.f32 0.0, %v2418
        %v2420 = vpop.f32.mrb[0].mxu0
        %v2421 = vpop.f32.mrb[0].mxu0
        %v2422 = vadd.f32 0.0, %v2421
        %v2423 = vpop.f32.mrb[0].mxu0
        %2424 = vmatprep.mubr.bf16.mxu0 0
        %2425 = vmatmul.mubr.bf16.gmra.mrb[0].mxu0 %v2227
        %v2426 = vpop.f32.mrb[0].mxu0
        %v2427 = vadd.f32 0.0, %v2426
        %v2428 = vpop.f32.mrb[0].mxu0
        %v2429 = vpop.f32.mrb[0].mxu0
        %v2430 = vadd.f32 0.0, %v2429
        %v2431 = vpop.f32.mrb[0].mxu0
        %2432 = vmatprep.mubr.bf16.mxu0 0
        %2433 = vmatmul.mubr.bf16.gmra.mrb[0].mxu0 %v2228
        %v2434 = vpop.f32.mrb[0].mxu0
        %v2435 = vadd.f32 0.0, %v2434
        %v2436 = vpop.f32.mrb[0].mxu0
        %v2437 = vpop.f32.mrb[0].mxu0
        %v2438 = vadd.f32 0.0, %v2437
        %v2439 = vpop.f32.mrb[0].mxu0
        %2440 = vmatprep.mubr.bf16.mxu0 0
        %2441 = vmatmul.mubr.bf16.gmra.mrb[0].mxu0 %v2229
        %v2442 = vpop.f32.mrb[0].mxu0
        %v2443 = vadd.f32 0.0, %v2442
        %v2444 = vpop.f32.mrb[0].mxu0
        %v2445 = vpop.f32.mrb[0].mxu0
        %v2446 = vadd.f32 0.0, %v2445
        %v2447 = vpop.f32.mrb[0].mxu0
        %2448 = vmatprep.mubr.bf16.mxu0 0
        %2449 = vmatmul.mubr.bf16.gmra.mrb[0].mxu0 %v2230
        %v2450 = vpop.f32.mrb[0].mxu0
        %v2451 = vadd.f32 0.0, %v2450
        %v2452 = vpop.f32.mrb[0].mxu0
        %v2453 = vpop.f32.mrb[0].mxu0
        %v2454 = vadd.f32 0.0, %v2453
        %v2455 = vpop.f32.mrb[0].mxu0
        %2456 = vdwg.mxu0
        %v2457 = vadd.f32 %v2151, %v2331
        %v2458 = vadd.f32 %v2152, %v2334
        %v2459 = vadd.f32 %v2153, %v2339
        %v2460 = vadd.f32 %v2154, %v2342
        %v2461 = vadd.f32 %v2155, %v2347
        %v2462 = vadd.f32 %v2156, %v2350
        %v2463 = vadd.f32 %v2157, %v2355
        %v2464 = vadd.f32 %v2158, %v2358
        %v2465 = vadd.f32 %v2159, %v2363
        %v2466 = vadd.f32 %v2160, %v2366
        %v2467 = vadd.f32 %v2161, %v2371
        %v2468 = vadd.f32 %v2162, %v2374
        %v2469 = vadd.f32 %v2163, %v2379
        %v2470 = vadd.f32 %v2164, %v2382
        %v2471 = vadd.f32 %v2165, %v2387
        %v2472 = vadd.f32 %v2166, %v2390
        %v2473 = vadd.f32 %v2167, %v2395
        %v2474 = vadd.f32 %v2168, %v2398
        %v2475 = vadd.f32 %v2169, %v2403
        %v2476 = vadd.f32 %v2170, %v2406
        %v2477 = vadd.f32 %v2171, %v2411
        %v2478 = vadd.f32 %v2172, %v2414
        %v2479 = vadd.f32 %v2173, %v2419
        %v2480 = vadd.f32 %v2174, %v2422
        %v2481 = vadd.f32 %v2175, %v2427
        %v2482 = vadd.f32 %v2176, %v2430
        %v2483 = vadd.f32 %v2177, %v2435
        %v2484 = vadd.f32 %v2178, %v2438
        %v2485 = vadd.f32 %v2179, %v2443
        %v2486 = vadd.f32 %v2180, %v2446
        %v2487 = vadd.f32 %v2181, %v2451
        %v2488 = vadd.f32 %v2182, %v2454
        %v2489 = vld [vmem:[%s1297 + $0x8] sm:$0xff]
        %v2490 = vld [vmem:[%s1297 + $0x10] sm:$0xff]
        %v2491 = vld [vmem:[%s1297 + $0x28] sm:$0xff]
        %v2492 = vld [vmem:[%s1297 + $0x30] sm:$0xff]
        %v2493 = vld [vmem:[%s1297 + $0x48] sm:$0xff]
        %v2494 = vld [vmem:[%s1297 + $0x50] sm:$0xff]
        %v2495 = vld [vmem:[%s1297 + $0x68] sm:$0xff]
        %v2496 = vld [vmem:[%s1297 + $0x70] sm:$0xff]
        %v2497 = vld [vmem:[%s1297 + $0x88] sm:$0xff]
        %v2498 = vld [vmem:[%s1297 + $0x90] sm:$0xff]
        %v2499 = vld [vmem:[%s1297 + $0xa8] sm:$0xff]
        %v2500 = vld [vmem:[%s1297 + $0xb0] sm:$0xff]
        %v2501 = vld [vmem:[%s1297 + $0xc8] sm:$0xff]
        %v2502 = vld [vmem:[%s1297 + $0xd0] sm:$0xff]
        %v2503 = vld [vmem:[%s1297 + $0xe8] sm:$0xff]
        %v2504 = vld [vmem:[%s1297 + $0xf0] sm:$0xff]
        %v2505 = vld [vmem:[%s1297 + $0x108] sm:$0xff]
        %v2506 = vld [vmem:[%s1297 + $0x110] sm:$0xff]
        %v2507 = vld [vmem:[%s1297 + $0x128] sm:$0xff]
        %v2508 = vld [vmem:[%s1297 + $0x130] sm:$0xff]
        %v2509 = vld [vmem:[%s1297 + $0x148] sm:$0xff]
        %v2510 = vld [vmem:[%s1297 + $0x150] sm:$0xff]
        %v2511 = vld [vmem:[%s1297 + $0x168] sm:$0xff]
        %v2512 = vld [vmem:[%s1297 + $0x170] sm:$0xff]
        %v2513 = vld [vmem:[%s1297 + $0x188] sm:$0xff]
        %v2514 = vld [vmem:[%s1297 + $0x190] sm:$0xff]
        %v2515 = vld [vmem:[%s1297 + $0x1a8] sm:$0xff]
        %v2516 = vld [vmem:[%s1297 + $0x1b0] sm:$0xff]
        %v2517 = vld [vmem:[%s1297 + $0x1c8] sm:$0xff]
        %v2518 = vld [vmem:[%s1297 + $0x1d0] sm:$0xff]
        %v2519 = vld [vmem:[%s1297 + $0x1e8] sm:$0xff]
        %v2520 = vld [vmem:[%s1297 + $0x1f0] sm:$0xff]
        %v2521 = vpack.c.bf16 %v2490, %v2489
        %v2522 = vpack.c.bf16 %v2492, %v2491
        %v2523 = vpack.c.bf16 %v2494, %v2493
        %v2524 = vpack.c.bf16 %v2496, %v2495
        %v2525 = vpack.c.bf16 %v2498, %v2497
        %v2526 = vpack.c.bf16 %v2500, %v2499
        %v2527 = vpack.c.bf16 %v2502, %v2501
        %v2528 = vpack.c.bf16 %v2504, %v2503
        %v2529 = vpack.c.bf16 %v2506, %v2505
        %v2530 = vpack.c.bf16 %v2508, %v2507
        %v2531 = vpack.c.bf16 %v2510, %v2509
        %v2532 = vpack.c.bf16 %v2512, %v2511
        %v2533 = vpack.c.bf16 %v2514, %v2513
        %v2534 = vpack.c.bf16 %v2516, %v2515
        %v2535 = vpack.c.bf16 %v2518, %v2517
        %v2536 = vpack.c.bf16 %v2520, %v2519
        %s2537 = scalar_lea.vmem [#allocation9], 256
        %v2538 = vld [vmem:[%s2537] sm:$0xf]
        %v2539 = vld [vmem:[%s2537 + $0x4] sm:$0xf]
        %v2540 = vld [vmem:[%s2537 + $0x8] sm:$0xf]
        %v2541 = vld [vmem:[%s2537 + $0xc] sm:$0xf]
        %v2542 = vld [vmem:[%s2537 + $0x10] sm:$0xf]
        %v2543 = vld [vmem:[%s2537 + $0x14] sm:$0xf]
        %v2544 = vld [vmem:[%s2537 + $0x18] sm:$0xf]
        %v2545 = vld [vmem:[%s2537 + $0x1c] sm:$0xf]
        %v2546 = vld [vmem:[%s2537 + $0x20] sm:$0xf]
        %v2547 = vld [vmem:[%s2537 + $0x24] sm:$0xf]
        %v2548 = vld [vmem:[%s2537 + $0x28] sm:$0xf]
        %v2549 = vld [vmem:[%s2537 + $0x2c] sm:$0xf]
        %v2550 = vld [vmem:[%s2537 + $0x30] sm:$0xf]
        %v2551 = vld [vmem:[%s2537 + $0x34] sm:$0xf]
        %v2552 = vld [vmem:[%s2537 + $0x38] sm:$0xf]
        %v2553 = vld [vmem:[%s2537 + $0x3c] sm:$0xf]
        %v2570 = vunpack.c.l.b16 %v2538
        %v2571 = vunpack.c.l.b16 %v2539
        %v2572 = vunpack.c.l.b16 %v2540
        %v2573 = vunpack.c.l.b16 %v2541
        %v2574 = vunpack.c.l.b16 %v2542
        %v2575 = vunpack.c.l.b16 %v2543
        %v2576 = vunpack.c.l.b16 %v2544
        %v2577 = vunpack.c.l.b16 %v2545
        %v2578 = vunpack.c.l.b16 %v2546
        %v2579 = vunpack.c.l.b16 %v2547
        %v2580 = vunpack.c.l.b16 %v2548
        %v2581 = vunpack.c.l.b16 %v2549
        %v2582 = vunpack.c.l.b16 %v2550
        %v2583 = vunpack.c.l.b16 %v2551
        %v2584 = vunpack.c.l.b16 %v2552
        %v2585 = vunpack.c.l.b16 %v2553
        %v2586 = vpack.c.b16 %v2571, %v2570
        %v2587 = vpack.c.b16 %v2573, %v2572
        %v2588 = vpack.c.b16 %v2575, %v2574
        %v2589 = vpack.c.b16 %v2577, %v2576
        %v2590 = vpack.c.b16 %v2579, %v2578
        %v2591 = vpack.c.b16 %v2581, %v2580
        %v2592 = vpack.c.b16 %v2583, %v2582
        %v2593 = vpack.c.b16 %v2585, %v2584
        %2602 = vmatprep.subr.bf16.mxu0 0
        %2603 = vmatpush1.bf16.msra.mxu0 %v2586
        %2604 = vmatprep.subr.bf16.mxu0 0
        %2605 = vmatpush1.bf16.msra.mxu0 %v2587
        %2606 = vmatprep.subr.bf16.mxu0 0
        %2607 = vmatpush1.bf16.msra.mxu0 %v2588
        %2608 = vmatprep.subr.bf16.mxu0 0
        %2609 = vmatpush1.bf16.msra.mxu0 %v2589
        %2610 = vmatprep.subr.bf16.mxu0 0
        %2611 = vmatpush1.bf16.msra.mxu0 %v2590
        %2612 = vmatprep.subr.bf16.mxu0 0
        %2613 = vmatpush1.bf16.msra.mxu0 %v2591
        %2614 = vmatprep.subr.bf16.mxu0 0
        %2615 = vmatpush1.bf16.msra.mxu0 %v2592
        %2616 = vmatprep.subr.bf16.mxu0 0
        %2617 = vmatpush1.bf16.msra.mxu0 %v2593
        %2618 = vmatprep.subr.bf16.mxu0 0
        %2619 = vmatpush1.bf16.msra.mxu0 0
        %2620 = vmatprep.subr.bf16.mxu0 0
        %2621 = vmatpush1.bf16.msra.mxu0 0
        %2622 = vmatprep.subr.bf16.mxu0 0
        %2623 = vmatpush1.bf16.msra.mxu0 0
        %2624 = vmatprep.subr.bf16.mxu0 0
        %2625 = vmatpush1.bf16.msra.mxu0 0
        %2626 = vmatprep.subr.bf16.mxu0 0
        %2627 = vmatpush1.bf16.msra.mxu0 0
        %2628 = vmatprep.subr.bf16.mxu0 0
        %2629 = vmatpush1.bf16.msra.mxu0 0
        %2630 = vmatprep.subr.bf16.mxu0 0
        %2631 = vmatpush1.bf16.msra.mxu0 0
        %2632 = vmatprep.subr.bf16.mxu0 0
        %2633 = vmatpush1.bf16.msra.mxu0 0
        %2634 = vmatprep.mubr.bf16.mxu0 0
        %2635 = vmatmul.mubr.bf16.gmra.mrb[0].mxu0 %v2521
        %v2636 = vpop.f32.mrb[0].mxu0
        %v2637 = vadd.f32 0.0, %v2636
        %v2638 = vpop.f32.mrb[0].mxu0
        %v2639 = vpop.f32.mrb[0].mxu0
        %v2640 = vadd.f32 0.0, %v2639
        %v2641 = vpop.f32.mrb[0].mxu0
        %2642 = vmatprep.mubr.bf16.mxu0 0
        %2643 = vmatmul.mubr.bf16.gmra.mrb[0].mxu0 %v2522
        %v2644 = vpop.f32.mrb[0].mxu0
        %v2645 = vadd.f32 0.0, %v2644
        %v2646 = vpop.f32.mrb[0].mxu0
        %v2647 = vpop.f32.mrb[0].mxu0
        %v2648 = vadd.f32 0.0, %v2647
        %v2649 = vpop.f32.mrb[0].mxu0
        %2650 = vmatprep.mubr.bf16.mxu0 0
        %2651 = vmatmul.mubr.bf16.gmra.mrb[0].mxu0 %v2523
        %v2652 = vpop.f32.mrb[0].mxu0
        %v2653 = vadd.f32 0.0, %v2652
        %v2654 = vpop.f32.mrb[0].mxu0
        %v2655 = vpop.f32.mrb[0].mxu0
        %v2656 = vadd.f32 0.0, %v2655
        %v2657 = vpop.f32.mrb[0].mxu0
        %2658 = vmatprep.mubr.bf16.mxu0 0
        %2659 = vmatmul.mubr.bf16.gmra.mrb[0].mxu0 %v2524
        %v2660 = vpop.f32.mrb[0].mxu0
        %v2661 = vadd.f32 0.0, %v2660
        %v2662 = vpop.f32.mrb[0].mxu0
        %v2663 = vpop.f32.mrb[0].mxu0
        %v2664 = vadd.f32 0.0, %v2663
        %v2665 = vpop.f32.mrb[0].mxu0
        %2666 = vmatprep.mubr.bf16.mxu0 0
        %2667 = vmatmul.mubr.bf16.gmra.mrb[0].mxu0 %v2525
        %v2668 = vpop.f32.mrb[0].mxu0
        %v2669 = vadd.f32 0.0, %v2668
        %v2670 = vpop.f32.mrb[0].mxu0
        %v2671 = vpop.f32.mrb[0].mxu0
        %v2672 = vadd.f32 0.0, %v2671
        %v2673 = vpop.f32.mrb[0].mxu0
        %2674 = vmatprep.mubr.bf16.mxu0 0
        %2675 = vmatmul.mubr.bf16.gmra.mrb[0].mxu0 %v2526
        %v2676 = vpop.f32.mrb[0].mxu0
        %v2677 = vadd.f32 0.0, %v2676
        %v2678 = vpop.f32.mrb[0].mxu0
        %v2679 = vpop.f32.mrb[0].mxu0
        %v2680 = vadd.f32 0.0, %v2679
        %v2681 = vpop.f32.mrb[0].mxu0
        %2682 = vmatprep.mubr.bf16.mxu0 0
        %2683 = vmatmul.mubr.bf16.gmra.mrb[0].mxu0 %v2527
        %v2684 = vpop.f32.mrb[0].mxu0
        %v2685 = vadd.f32 0.0, %v2684
        %v2686 = vpop.f32.mrb[0].mxu0
        %v2687 = vpop.f32.mrb[0].mxu0
        %v2688 = vadd.f32 0.0, %v2687
        %v2689 = vpop.f32.mrb[0].mxu0
        %2690 = vmatprep.mubr.bf16.mxu0 0
        %2691 = vmatmul.mubr.bf16.gmra.mrb[0].mxu0 %v2528
        %v2692 = vpop.f32.mrb[0].mxu0
        %v2693 = vadd.f32 0.0, %v2692
        %v2694 = vpop.f32.mrb[0].mxu0
        %v2695 = vpop.f32.mrb[0].mxu0
        %v2696 = vadd.f32 0.0, %v2695
        %v2697 = vpop.f32.mrb[0].mxu0
        %2698 = vmatprep.mubr.bf16.mxu0 0
        %2699 = vmatmul.mubr.bf16.gmra.mrb[0].mxu0 %v2529
        %v2700 = vpop.f32.mrb[0].mxu0
        %v2701 = vadd.f32 0.0, %v2700
        %v2702 = vpop.f32.mrb[0].mxu0
        %v2703 = vpop.f32.mrb[0].mxu0
        %v2704 = vadd.f32 0.0, %v2703
        %v2705 = vpop.f32.mrb[0].mxu0
        %2706 = vmatprep.mubr.bf16.mxu0 0
        %2707 = vmatmul.mubr.bf16.gmra.mrb[0].mxu0 %v2530
        %v2708 = vpop.f32.mrb[0].mxu0
        %v2709 = vadd.f32 0.0, %v2708
        %v2710 = vpop.f32.mrb[0].mxu0
        %v2711 = vpop.f32.mrb[0].mxu0
        %v2712 = vadd.f32 0.0, %v2711
        %v2713 = vpop.f32.mrb[0].mxu0
        %2714 = vmatprep.mubr.bf16.mxu0 0
        %2715 = vmatmul.mubr.bf16.gmra.mrb[0].mxu0 %v2531
        %v2716 = vpop.f32.mrb[0].mxu0
        %v2717 = vadd.f32 0.0, %v2716
        %v2718 = vpop.f32.mrb[0].mxu0
        %v2719 = vpop.f32.mrb[0].mxu0
        %v2720 = vadd.f32 0.0, %v2719
        %v2721 = vpop.f32.mrb[0].mxu0
        %2722 = vmatprep.mubr.bf16.mxu0 0
        %2723 = vmatmul.mubr.bf16.gmra.mrb[0].mxu0 %v2532
        %v2724 = vpop.f32.mrb[0].mxu0
        %v2725 = vadd.f32 0.0, %v2724
        %v2726 = vpop.f32.mrb[0].mxu0
        %v2727 = vpop.f32.mrb[0].mxu0
        %v2728 = vadd.f32 0.0, %v2727
        %v2729 = vpop.f32.mrb[0].mxu0
        %2730 = vmatprep.mubr.bf16.mxu0 0
        %2731 = vmatmul.mubr.bf16.gmra.mrb[0].mxu0 %v2533
        %v2732 = vpop.f32.mrb[0].mxu0
        %v2733 = vadd.f32 0.0, %v2732
        %v2734 = vpop.f32.mrb[0].mxu0
        %v2735 = vpop.f32.mrb[0].mxu0
        %v2736 = vadd.f32 0.0, %v2735
        %v2737 = vpop.f32.mrb[0].mxu0
        %2738 = vmatprep.mubr.bf16.mxu0 0
        %2739 = vmatmul.mubr.bf16.gmra.mrb[0].mxu0 %v2534
        %v2740 = vpop.f32.mrb[0].mxu0
        %v2741 = vadd.f32 0.0, %v2740
        %v2742 = vpop.f32.mrb[0].mxu0
        %v2743 = vpop.f32.mrb[0].mxu0
        %v2744 = vadd.f32 0.0, %v2743
        %v2745 = vpop.f32.mrb[0].mxu0
        %2746 = vmatprep.mubr.bf16.mxu0 0
        %2747 = vmatmul.mubr.bf16.gmra.mrb[0].mxu0 %v2535
        %v2748 = vpop.f32.mrb[0].mxu0
        %v2749 = vadd.f32 0.0, %v2748
        %v2750 = vpop.f32.mrb[0].mxu0
        %v2751 = vpop.f32.mrb[0].mxu0
        %v2752 = vadd.f32 0.0, %v2751
        %v2753 = vpop.f32.mrb[0].mxu0
        %2754 = vmatprep.mubr.bf16.mxu0 0
        %2755 = vmatmul.mubr.bf16.gmra.mrb[0].mxu0 %v2536
        %v2756 = vpop.f32.mrb[0].mxu0
        %v2757 = vadd.f32 0.0, %v2756
        %v2758 = vpop.f32.mrb[0].mxu0
        %v2759 = vpop.f32.mrb[0].mxu0
        %v2760 = vadd.f32 0.0, %v2759
        %v2761 = vpop.f32.mrb[0].mxu0
        %2762 = vdwg.mxu0
        %v2763 = vadd.f32 %v2457, %v2637
        %v2764 = vadd.f32 %v2458, %v2640
        %v2765 = vadd.f32 %v2459, %v2645
        %v2766 = vadd.f32 %v2460, %v2648
        %v2767 = vadd.f32 %v2461, %v2653
        %v2768 = vadd.f32 %v2462, %v2656
        %v2769 = vadd.f32 %v2463, %v2661
        %v2770 = vadd.f32 %v2464, %v2664
        %v2771 = vadd.f32 %v2465, %v2669
        %v2772 = vadd.f32 %v2466, %v2672
        %v2773 = vadd.f32 %v2467, %v2677
        %v2774 = vadd.f32 %v2468, %v2680
        %v2775 = vadd.f32 %v2469, %v2685
        %v2776 = vadd.f32 %v2470, %v2688
        %v2777 = vadd.f32 %v2471, %v2693
        %v2778 = vadd.f32 %v2472, %v2696
        %v2779 = vadd.f32 %v2473, %v2701
        %v2780 = vadd.f32 %v2474, %v2704
        %v2781 = vadd.f32 %v2475, %v2709
        %v2782 = vadd.f32 %v2476, %v2712
        %v2783 = vadd.f32 %v2477, %v2717
        %v2784 = vadd.f32 %v2478, %v2720
        %v2785 = vadd.f32 %v2479, %v2725
        %v2786 = vadd.f32 %v2480, %v2728
        %v2787 = vadd.f32 %v2481, %v2733
        %v2788 = vadd.f32 %v2482, %v2736
        %v2789 = vadd.f32 %v2483, %v2741
        %v2790 = vadd.f32 %v2484, %v2744
        %v2791 = vadd.f32 %v2485, %v2749
        %v2792 = vadd.f32 %v2486, %v2752
        %v2793 = vadd.f32 %v2487, %v2757
        %v2794 = vadd.f32 %v2488, %v2760
        %v2795 = vld [vmem:[%s1297 + $0x9] sm:$0xff]
        %v2796 = vld [vmem:[%s1297 + $0x11] sm:$0xff]
        %v2797 = vld [vmem:[%s1297 + $0x29] sm:$0xff]
        %v2798 = vld [vmem:[%s1297 + $0x31] sm:$0xff]
        %v2799 = vld [vmem:[%s1297 + $0x49] sm:$0xff]
        %v2800 = vld [vmem:[%s1297 + $0x51] sm:$0xff]
        %v2801 = vld [vmem:[%s1297 + $0x69] sm:$0xff]
        %v2802 = vld [vmem:[%s1297 + $0x71] sm:$0xff]
        %v2803 = vld [vmem:[%s1297 + $0x89] sm:$0xff]
        %v2804 = vld [vmem:[%s1297 + $0x91] sm:$0xff]
        %v2805 = vld [vmem:[%s1297 + $0xa9] sm:$0xff]
        %v2806 = vld [vmem:[%s1297 + $0xb1] sm:$0xff]
        %v2807 = vld [vmem:[%s1297 + $0xc9] sm:$0xff]
        %v2808 = vld [vmem:[%s1297 + $0xd1] sm:$0xff]
        %v2809 = vld [vmem:[%s1297 + $0xe9] sm:$0xff]
        %v2810 = vld [vmem:[%s1297 + $0xf1] sm:$0xff]
        %v2811 = vld [vmem:[%s1297 + $0x109] sm:$0xff]
        %v2812 = vld [vmem:[%s1297 + $0x111] sm:$0xff]
        %v2813 = vld [vmem:[%s1297 + $0x129] sm:$0xff]
        %v2814 = vld [vmem:[%s1297 + $0x131] sm:$0xff]
        %v2815 = vld [vmem:[%s1297 + $0x149] sm:$0xff]
        %v2816 = vld [vmem:[%s1297 + $0x151] sm:$0xff]
        %v2817 = vld [vmem:[%s1297 + $0x169] sm:$0xff]
        %v2818 = vld [vmem:[%s1297 + $0x171] sm:$0xff]
        %v2819 = vld [vmem:[%s1297 + $0x189] sm:$0xff]
        %v2820 = vld [vmem:[%s1297 + $0x191] sm:$0xff]
        %v2821 = vld [vmem:[%s1297 + $0x1a9] sm:$0xff]
        %v2822 = vld [vmem:[%s1297 + $0x1b1] sm:$0xff]
        %v2823 = vld [vmem:[%s1297 + $0x1c9] sm:$0xff]
        %v2824 = vld [vmem:[%s1297 + $0x1d1] sm:$0xff]
        %v2825 = vld [vmem:[%s1297 + $0x1e9] sm:$0xff]
        %v2826 = vld [vmem:[%s1297 + $0x1f1] sm:$0xff]
        %v2827 = vpack.c.bf16 %v2796, %v2795
        %v2828 = vpack.c.bf16 %v2798, %v2797
        %v2829 = vpack.c.bf16 %v2800, %v2799
        %v2830 = vpack.c.bf16 %v2802, %v2801
        %v2831 = vpack.c.bf16 %v2804, %v2803
        %v2832 = vpack.c.bf16 %v2806, %v2805
        %v2833 = vpack.c.bf16 %v2808, %v2807
        %v2834 = vpack.c.bf16 %v2810, %v2809
        %v2835 = vpack.c.bf16 %v2812, %v2811
        %v2836 = vpack.c.bf16 %v2814, %v2813
        %v2837 = vpack.c.bf16 %v2816, %v2815
        %v2838 = vpack.c.bf16 %v2818, %v2817
        %v2839 = vpack.c.bf16 %v2820, %v2819
        %v2840 = vpack.c.bf16 %v2822, %v2821
        %v2841 = vpack.c.bf16 %v2824, %v2823
        %v2842 = vpack.c.bf16 %v2826, %v2825
        %s2843 = scalar_lea.vmem [#allocation9], 320
        %v2844 = vld [vmem:[%s2843] sm:$0xf]
        %v2845 = vld [vmem:[%s2843 + $0x4] sm:$0xf]
        %v2846 = vld [vmem:[%s2843 + $0x8] sm:$0xf]
        %v2847 = vld [vmem:[%s2843 + $0xc] sm:$0xf]
        %v2848 = vld [vmem:[%s2843 + $0x10] sm:$0xf]
        %v2849 = vld [vmem:[%s2843 + $0x14] sm:$0xf]
        %v2850 = vld [vmem:[%s2843 + $0x18] sm:$0xf]
        %v2851 = vld [vmem:[%s2843 + $0x1c] sm:$0xf]
        %v2852 = vld [vmem:[%s2843 + $0x20] sm:$0xf]
        %v2853 = vld [vmem:[%s2843 + $0x24] sm:$0xf]
        %v2854 = vld [vmem:[%s2843 + $0x28] sm:$0xf]
        %v2855 = vld [vmem:[%s2843 + $0x2c] sm:$0xf]
        %v2856 = vld [vmem:[%s2843 + $0x30] sm:$0xf]
        %v2857 = vld [vmem:[%s2843 + $0x34] sm:$0xf]
        %v2858 = vld [vmem:[%s2843 + $0x38] sm:$0xf]
        %v2859 = vld [vmem:[%s2843 + $0x3c] sm:$0xf]
        %v2876 = vunpack.c.l.b16 %v2844
        %v2877 = vunpack.c.l.b16 %v2845
        %v2878 = vunpack.c.l.b16 %v2846
        %v2879 = vunpack.c.l.b16 %v2847
        %v2880 = vunpack.c.l.b16 %v2848
        %v2881 = vunpack.c.l.b16 %v2849
        %v2882 = vunpack.c.l.b16 %v2850
        %v2883 = vunpack.c.l.b16 %v2851
        %v2884 = vunpack.c.l.b16 %v2852
        %v2885 = vunpack.c.l.b16 %v2853
        %v2886 = vunpack.c.l.b16 %v2854
        %v2887 = vunpack.c.l.b16 %v2855
        %v2888 = vunpack.c.l.b16 %v2856
        %v2889 = vunpack.c.l.b16 %v2857
        %v2890 = vunpack.c.l.b16 %v2858
        %v2891 = vunpack.c.l.b16 %v2859
        %v2892 = vpack.c.b16 %v2877, %v2876
        %v2893 = vpack.c.b16 %v2879, %v2878
        %v2894 = vpack.c.b16 %v2881, %v2880
        %v2895 = vpack.c.b16 %v2883, %v2882
        %v2896 = vpack.c.b16 %v2885, %v2884
        %v2897 = vpack.c.b16 %v2887, %v2886
        %v2898 = vpack.c.b16 %v2889, %v2888
        %v2899 = vpack.c.b16 %v2891, %v2890
        %2908 = vmatprep.subr.bf16.mxu0 0
        %2909 = vmatpush1.bf16.msra.mxu0 %v2892
        %2910 = vmatprep.subr.bf16.mxu0 0
        %2911 = vmatpush1.bf16.msra.mxu0 %v2893
        %2912 = vmatprep.subr.bf16.mxu0 0
        %2913 = vmatpush1.bf16.msra.mxu0 %v2894
        %2914 = vmatprep.subr.bf16.mxu0 0
        %2915 = vmatpush1.bf16.msra.mxu0 %v2895
        %2916 = vmatprep.subr.bf16.mxu0 0
        %2917 = vmatpush1.bf16.msra.mxu0 %v2896
        %2918 = vmatprep.subr.bf16.mxu0 0
        %2919 = vmatpush1.bf16.msra.mxu0 %v2897
        %2920 = vmatprep.subr.bf16.mxu0 0
        %2921 = vmatpush1.bf16.msra.mxu0 %v2898
        %2922 = vmatprep.subr.bf16.mxu0 0
        %2923 = vmatpush1.bf16.msra.mxu0 %v2899
        %2924 = vmatprep.subr.bf16.mxu0 0
        %2925 = vmatpush1.bf16.msra.mxu0 0
        %2926 = vmatprep.subr.bf16.mxu0 0
        %2927 = vmatpush1.bf16.msra.mxu0 0
        %2928 = vmatprep.subr.bf16.mxu0 0
        %2929 = vmatpush1.bf16.msra.mxu0 0
        %2930 = vmatprep.subr.bf16.mxu0 0
        %2931 = vmatpush1.bf16.msra.mxu0 0
        %2932 = vmatprep.subr.bf16.mxu0 0
        %2933 = vmatpush1.bf16.msra.mxu0 0
        %2934 = vmatprep.subr.bf16.mxu0 0
        %2935 = vmatpush1.bf16.msra.mxu0 0
        %2936 = vmatprep.subr.bf16.mxu0 0
        %2937 = vmatpush1.bf16.msra.mxu0 0
        %2938 = vmatprep.subr.bf16.mxu0 0
        %2939 = vmatpush1.bf16.msra.mxu0 0
        %2940 = vmatprep.mubr.bf16.mxu0 0
        %2941 = vmatmul.mubr.bf16.gmra.mrb[0].mxu0 %v2827
        %v2942 = vpop.f32.mrb[0].mxu0
        %v2943 = vadd.f32 0.0, %v2942
        %v2944 = vpop.f32.mrb[0].mxu0
        %v2945 = vpop.f32.mrb[0].mxu0
        %v2946 = vadd.f32 0.0, %v2945
        %v2947 = vpop.f32.mrb[0].mxu0
        %2948 = vmatprep.mubr.bf16.mxu0 0
        %2949 = vmatmul.mubr.bf16.gmra.mrb[0].mxu0 %v2828
        %v2950 = vpop.f32.mrb[0].mxu0
        %v2951 = vadd.f32 0.0, %v2950
        %v2952 = vpop.f32.mrb[0].mxu0
        %v2953 = vpop.f32.mrb[0].mxu0
        %v2954 = vadd.f32 0.0, %v2953
        %v2955 = vpop.f32.mrb[0].mxu0
        %2956 = vmatprep.mubr.bf16.mxu0 0
        %2957 = vmatmul.mubr.bf16.gmra.mrb[0].mxu0 %v2829
        %v2958 = vpop.f32.mrb[0].mxu0
        %v2959 = vadd.f32 0.0, %v2958
        %v2960 = vpop.f32.mrb[0].mxu0
        %v2961 = vpop.f32.mrb[0].mxu0
        %v2962 = vadd.f32 0.0, %v2961
        %v2963 = vpop.f32.mrb[0].mxu0
        %2964 = vmatprep.mubr.bf16.mxu0 0
        %2965 = vmatmul.mubr.bf16.gmra.mrb[0].mxu0 %v2830
        %v2966 = vpop.f32.mrb[0].mxu0
        %v2967 = vadd.f32 0.0, %v2966
        %v2968 = vpop.f32.mrb[0].mxu0
        %v2969 = vpop.f32.mrb[0].mxu0
        %v2970 = vadd.f32 0.0, %v2969
        %v2971 = vpop.f32.mrb[0].mxu0
        %2972 = vmatprep.mubr.bf16.mxu0 0
        %2973 = vmatmul.mubr.bf16.gmra.mrb[0].mxu0 %v2831
        %v2974 = vpop.f32.mrb[0].mxu0
        %v2975 = vadd.f32 0.0, %v2974
        %v2976 = vpop.f32.mrb[0].mxu0
        %v2977 = vpop.f32.mrb[0].mxu0
        %v2978 = vadd.f32 0.0, %v2977
        %v2979 = vpop.f32.mrb[0].mxu0
        %2980 = vmatprep.mubr.bf16.mxu0 0
        %2981 = vmatmul.mubr.bf16.gmra.mrb[0].mxu0 %v2832
        %v2982 = vpop.f32.mrb[0].mxu0
        %v2983 = vadd.f32 0.0, %v2982
        %v2984 = vpop.f32.mrb[0].mxu0
        %v2985 = vpop.f32.mrb[0].mxu0
        %v2986 = vadd.f32 0.0, %v2985
        %v2987 = vpop.f32.mrb[0].mxu0
        %2988 = vmatprep.mubr.bf16.mxu0 0
        %2989 = vmatmul.mubr.bf16.gmra.mrb[0].mxu0 %v2833
        %v2990 = vpop.f32.mrb[0].mxu0
        %v2991 = vadd.f32 0.0, %v2990
        %v2992 = vpop.f32.mrb[0].mxu0
        %v2993 = vpop.f32.mrb[0].mxu0
        %v2994 = vadd.f32 0.0, %v2993
        %v2995 = vpop.f32.mrb[0].mxu0
        %2996 = vmatprep.mubr.bf16.mxu0 0
        %2997 = vmatmul.mubr.bf16.gmra.mrb[0].mxu0 %v2834
        %v2998 = vpop.f32.mrb[0].mxu0
        %v2999 = vadd.f32 0.0, %v2998
        %v3000 = vpop.f32.mrb[0].mxu0
        %v3001 = vpop.f32.mrb[0].mxu0
        %v3002 = vadd.f32 0.0, %v3001
        %v3003 = vpop.f32.mrb[0].mxu0
        %3004 = vmatprep.mubr.bf16.mxu0 0
        %3005 = vmatmul.mubr.bf16.gmra.mrb[0].mxu0 %v2835
        %v3006 = vpop.f32.mrb[0].mxu0
        %v3007 = vadd.f32 0.0, %v3006
        %v3008 = vpop.f32.mrb[0].mxu0
        %v3009 = vpop.f32.mrb[0].mxu0
        %v3010 = vadd.f32 0.0, %v3009
        %v3011 = vpop.f32.mrb[0].mxu0
        %3012 = vmatprep.mubr.bf16.mxu0 0
        %3013 = vmatmul.mubr.bf16.gmra.mrb[0].mxu0 %v2836
        %v3014 = vpop.f32.mrb[0].mxu0
        %v3015 = vadd.f32 0.0, %v3014
        %v3016 = vpop.f32.mrb[0].mxu0
        %v3017 = vpop.f32.mrb[0].mxu0
        %v3018 = vadd.f32 0.0, %v3017
        %v3019 = vpop.f32.mrb[0].mxu0
        %3020 = vmatprep.mubr.bf16.mxu0 0
        %3021 = vmatmul.mubr.bf16.gmra.mrb[0].mxu0 %v2837
        %v3022 = vpop.f32.mrb[0].mxu0
        %v3023 = vadd.f32 0.0, %v3022
        %v3024 = vpop.f32.mrb[0].mxu0
        %v3025 = vpop.f32.mrb[0].mxu0
        %v3026 = vadd.f32 0.0, %v3025
        %v3027 = vpop.f32.mrb[0].mxu0
        %3028 = vmatprep.mubr.bf16.mxu0 0
        %3029 = vmatmul.mubr.bf16.gmra.mrb[0].mxu0 %v2838
        %v3030 = vpop.f32.mrb[0].mxu0
        %v3031 = vadd.f32 0.0, %v3030
        %v3032 = vpop.f32.mrb[0].mxu0
        %v3033 = vpop.f32.mrb[0].mxu0
        %v3034 = vadd.f32 0.0, %v3033
        %v3035 = vpop.f32.mrb[0].mxu0
        %3036 = vmatprep.mubr.bf16.mxu0 0
        %3037 = vmatmul.mubr.bf16.gmra.mrb[0].mxu0 %v2839
        %v3038 = vpop.f32.mrb[0].mxu0
        %v3039 = vadd.f32 0.0, %v3038
        %v3040 = vpop.f32.mrb[0].mxu0
        %v3041 = vpop.f32.mrb[0].mxu0
        %v3042 = vadd.f32 0.0, %v3041
        %v3043 = vpop.f32.mrb[0].mxu0
        %3044 = vmatprep.mubr.bf16.mxu0 0
        %3045 = vmatmul.mubr.bf16.gmra.mrb[0].mxu0 %v2840
        %v3046 = vpop.f32.mrb[0].mxu0
        %v3047 = vadd.f32 0.0, %v3046
        %v3048 = vpop.f32.mrb[0].mxu0
        %v3049 = vpop.f32.mrb[0].mxu0
        %v3050 = vadd.f32 0.0, %v3049
        %v3051 = vpop.f32.mrb[0].mxu0
        %3052 = vmatprep.mubr.bf16.mxu0 0
        %3053 = vmatmul.mubr.bf16.gmra.mrb[0].mxu0 %v2841
        %v3054 = vpop.f32.mrb[0].mxu0
        %v3055 = vadd.f32 0.0, %v3054
        %v3056 = vpop.f32.mrb[0].mxu0
        %v3057 = vpop.f32.mrb[0].mxu0
        %v3058 = vadd.f32 0.0, %v3057
        %v3059 = vpop.f32.mrb[0].mxu0
        %3060 = vmatprep.mubr.bf16.mxu0 0
        %3061 = vmatmul.mubr.bf16.gmra.mrb[0].mxu0 %v2842
        %v3062 = vpop.f32.mrb[0].mxu0
        %v3063 = vadd.f32 0.0, %v3062
        %v3064 = vpop.f32.mrb[0].mxu0
        %v3065 = vpop.f32.mrb[0].mxu0
        %v3066 = vadd.f32 0.0, %v3065
        %v3067 = vpop.f32.mrb[0].mxu0
        %3068 = vdwg.mxu0
        %v3069 = vadd.f32 %v2763, %v2943
        %v3070 = vadd.f32 %v2764, %v2946
        %v3071 = vadd.f32 %v2765, %v2951
        %v3072 = vadd.f32 %v2766, %v2954
        %v3073 = vadd.f32 %v2767, %v2959
        %v3074 = vadd.f32 %v2768, %v2962
        %v3075 = vadd.f32 %v2769, %v2967
        %v3076 = vadd.f32 %v2770, %v2970
        %v3077 = vadd.f32 %v2771, %v2975
        %v3078 = vadd.f32 %v2772, %v2978
        %v3079 = vadd.f32 %v2773, %v2983
        %v3080 = vadd.f32 %v2774, %v2986
        %v3081 = vadd.f32 %v2775, %v2991
        %v3082 = vadd.f32 %v2776, %v2994
        %v3083 = vadd.f32 %v2777, %v2999
        %v3084 = vadd.f32 %v2778, %v3002
        %v3085 = vadd.f32 %v2779, %v3007
        %v3086 = vadd.f32 %v2780, %v3010
        %v3087 = vadd.f32 %v2781, %v3015
        %v3088 = vadd.f32 %v2782, %v3018
        %v3089 = vadd.f32 %v2783, %v3023
        %v3090 = vadd.f32 %v2784, %v3026
        %v3091 = vadd.f32 %v2785, %v3031
        %v3092 = vadd.f32 %v2786, %v3034
        %v3093 = vadd.f32 %v2787, %v3039
        %v3094 = vadd.f32 %v2788, %v3042
        %v3095 = vadd.f32 %v2789, %v3047
        %v3096 = vadd.f32 %v2790, %v3050
        %v3097 = vadd.f32 %v2791, %v3055
        %v3098 = vadd.f32 %v2792, %v3058
        %v3099 = vadd.f32 %v2793, %v3063
        %v3100 = vadd.f32 %v2794, %v3066
        %s3101 = scalar_lea.vmem [#allocation2], 64
        %v3102 = vld [vmem:[%s3101 + $0x7] sm:$0xff]
        %v3103 = vld [vmem:[%s3101 + $0xf] sm:$0xff]
        %v3104 = vld [vmem:[%s3101 + $0x27] sm:$0xff]
        %v3105 = vld [vmem:[%s3101 + $0x2f] sm:$0xff]
        %v3106 = vld [vmem:[%s3101 + $0x47] sm:$0xff]
        %v3107 = vld [vmem:[%s3101 + $0x4f] sm:$0xff]
        %v3108 = vld [vmem:[%s3101 + $0x67] sm:$0xff]
        %v3109 = vld [vmem:[%s3101 + $0x6f] sm:$0xff]
        %v3110 = vld [vmem:[%s3101 + $0x87] sm:$0xff]
        %v3111 = vld [vmem:[%s3101 + $0x8f] sm:$0xff]
        %v3112 = vld [vmem:[%s3101 + $0xa7] sm:$0xff]
        %v3113 = vld [vmem:[%s3101 + $0xaf] sm:$0xff]
        %v3114 = vld [vmem:[%s3101 + $0xc7] sm:$0xff]
        %v3115 = vld [vmem:[%s3101 + $0xcf] sm:$0xff]
        %v3116 = vld [vmem:[%s3101 + $0xe7] sm:$0xff]
        %v3117 = vld [vmem:[%s3101 + $0xef] sm:$0xff]
        %v3118 = vld [vmem:[%s3101 + $0x107] sm:$0xff]
        %v3119 = vld [vmem:[%s3101 + $0x10f] sm:$0xff]
        %v3120 = vld [vmem:[%s3101 + $0x127] sm:$0xff]
        %v3121 = vld [vmem:[%s3101 + $0x12f] sm:$0xff]
        %v3122 = vld [vmem:[%s3101 + $0x147] sm:$0xff]
        %v3123 = vld [vmem:[%s3101 + $0x14f] sm:$0xff]
        %v3124 = vld [vmem:[%s3101 + $0x167] sm:$0xff]
        %v3125 = vld [vmem:[%s3101 + $0x16f] sm:$0xff]
        %v3126 = vld [vmem:[%s3101 + $0x187] sm:$0xff]
        %v3127 = vld [vmem:[%s3101 + $0x18f] sm:$0xff]
        %v3128 = vld [vmem:[%s3101 + $0x1a7] sm:$0xff]
        %v3129 = vld [vmem:[%s3101 + $0x1af] sm:$0xff]
        %v3130 = vld [vmem:[%s3101 + $0x1c7] sm:$0xff]
        %v3131 = vld [vmem:[%s3101 + $0x1cf] sm:$0xff]
        %v3132 = vld [vmem:[%s3101 + $0x1e7] sm:$0xff]
        %v3133 = vld [vmem:[%s3101 + $0x1ef] sm:$0xff]
        %v3134 = vpack.c.bf16 %v3103, %v3102
        %v3135 = vpack.c.bf16 %v3105, %v3104
        %v3136 = vpack.c.bf16 %v3107, %v3106
        %v3137 = vpack.c.bf16 %v3109, %v3108
        %v3138 = vpack.c.bf16 %v3111, %v3110
        %v3139 = vpack.c.bf16 %v3113, %v3112
        %v3140 = vpack.c.bf16 %v3115, %v3114
        %v3141 = vpack.c.bf16 %v3117, %v3116
        %v3142 = vpack.c.bf16 %v3119, %v3118
        %v3143 = vpack.c.bf16 %v3121, %v3120
        %v3144 = vpack.c.bf16 %v3123, %v3122
        %v3145 = vpack.c.bf16 %v3125, %v3124
        %v3146 = vpack.c.bf16 %v3127, %v3126
        %v3147 = vpack.c.bf16 %v3129, %v3128
        %v3148 = vpack.c.bf16 %v3131, %v3130
        %v3149 = vpack.c.bf16 %v3133, %v3132
        %s3150 = scalar_lea.vmem [#allocation9], 384
        %v3151 = vld [vmem:[%s3150] sm:$0xf]
        %v3152 = vld [vmem:[%s3150 + $0x4] sm:$0xf]
        %v3153 = vld [vmem:[%s3150 + $0x8] sm:$0xf]
        %v3154 = vld [vmem:[%s3150 + $0xc] sm:$0xf]
        %v3155 = vld [vmem:[%s3150 + $0x10] sm:$0xf]
        %v3156 = vld [vmem:[%s3150 + $0x14] sm:$0xf]
        %v3157 = vld [vmem:[%s3150 + $0x18] sm:$0xf]
        %v3158 = vld [vmem:[%s3150 + $0x1c] sm:$0xf]
        %v3159 = vld [vmem:[%s3150 + $0x20] sm:$0xf]
        %v3160 = vld [vmem:[%s3150 + $0x24] sm:$0xf]
        %v3161 = vld [vmem:[%s3150 + $0x28] sm:$0xf]
        %v3162 = vld [vmem:[%s3150 + $0x2c] sm:$0xf]
        %v3163 = vld [vmem:[%s3150 + $0x30] sm:$0xf]
        %v3164 = vld [vmem:[%s3150 + $0x34] sm:$0xf]
        %v3165 = vld [vmem:[%s3150 + $0x38] sm:$0xf]
        %v3166 = vld [vmem:[%s3150 + $0x3c] sm:$0xf]
        %v3183 = vunpack.c.l.b16 %v3151
        %v3184 = vunpack.c.l.b16 %v3152
        %v3185 = vunpack.c.l.b16 %v3153
        %v3186 = vunpack.c.l.b16 %v3154
        %v3187 = vunpack.c.l.b16 %v3155
        %v3188 = vunpack.c.l.b16 %v3156
        %v3189 = vunpack.c.l.b16 %v3157
        %v3190 = vunpack.c.l.b16 %v3158
        %v3191 = vunpack.c.l.b16 %v3159
        %v3192 = vunpack.c.l.b16 %v3160
        %v3193 = vunpack.c.l.b16 %v3161
        %v3194 = vunpack.c.l.b16 %v3162
        %v3195 = vunpack.c.l.b16 %v3163
        %v3196 = vunpack.c.l.b16 %v3164
        %v3197 = vunpack.c.l.b16 %v3165
        %v3198 = vunpack.c.l.b16 %v3166
        %v3199 = vpack.c.b16 %v3184, %v3183
        %v3200 = vpack.c.b16 %v3186, %v3185
        %v3201 = vpack.c.b16 %v3188, %v3187
        %v3202 = vpack.c.b16 %v3190, %v3189
        %v3203 = vpack.c.b16 %v3192, %v3191
        %v3204 = vpack.c.b16 %v3194, %v3193
        %v3205 = vpack.c.b16 %v3196, %v3195
        %v3206 = vpack.c.b16 %v3198, %v3197
        %3215 = vmatprep.subr.bf16.mxu0 0
        %3216 = vmatpush1.bf16.msra.mxu0 %v3199
        %3217 = vmatprep.subr.bf16.mxu0 0
        %3218 = vmatpush1.bf16.msra.mxu0 %v3200
        %3219 = vmatprep.subr.bf16.mxu0 0
        %3220 = vmatpush1.bf16.msra.mxu0 %v3201
        %3221 = vmatprep.subr.bf16.mxu0 0
        %3222 = vmatpush1.bf16.msra.mxu0 %v3202
        %3223 = vmatprep.subr.bf16.mxu0 0
        %3224 = vmatpush1.bf16.msra.mxu0 %v3203
        %3225 = vmatprep.subr.bf16.mxu0 0
        %3226 = vmatpush1.bf16.msra.mxu0 %v3204
        %3227 = vmatprep.subr.bf16.mxu0 0
        %3228 = vmatpush1.bf16.msra.mxu0 %v3205
        %3229 = vmatprep.subr.bf16.mxu0 0
        %3230 = vmatpush1.bf16.msra.mxu0 %v3206
        %3231 = vmatprep.subr.bf16.mxu0 0
        %3232 = vmatpush1.bf16.msra.mxu0 0
        %3233 = vmatprep.subr.bf16.mxu0 0
        %3234 = vmatpush1.bf16.msra.mxu0 0
        %3235 = vmatprep.subr.bf16.mxu0 0
        %3236 = vmatpush1.bf16.msra.mxu0 0
        %3237 = vmatprep.subr.bf16.mxu0 0
        %3238 = vmatpush1.bf16.msra.mxu0 0
        %3239 = vmatprep.subr.bf16.mxu0 0
        %3240 = vmatpush1.bf16.msra.mxu0 0
        %3241 = vmatprep.subr.bf16.mxu0 0
        %3242 = vmatpush1.bf16.msra.mxu0 0
        %3243 = vmatprep.subr.bf16.mxu0 0
        %3244 = vmatpush1.bf16.msra.mxu0 0
        %3245 = vmatprep.subr.bf16.mxu0 0
        %3246 = vmatpush1.bf16.msra.mxu0 0
        %3247 = vmatprep.mubr.bf16.mxu0 0
        %3248 = vmatmul.mubr.bf16.gmra.mrb[0].mxu0 %v3134
        %v3249 = vpop.f32.mrb[0].mxu0
        %v3250 = vadd.f32 0.0, %v3249
        %v3251 = vpop.f32.mrb[0].mxu0
        %v3252 = vpop.f32.mrb[0].mxu0
        %v3253 = vadd.f32 0.0, %v3252
        %v3254 = vpop.f32.mrb[0].mxu0
        %3255 = vmatprep.mubr.bf16.mxu0 0
        %3256 = vmatmul.mubr.bf16.gmra.mrb[0].mxu0 %v3135
        %v3257 = vpop.f32.mrb[0].mxu0
        %v3258 = vadd.f32 0.0, %v3257
        %v3259 = vpop.f32.mrb[0].mxu0
        %v3260 = vpop.f32.mrb[0].mxu0
        %v3261 = vadd.f32 0.0, %v3260
        %v3262 = vpop.f32.mrb[0].mxu0
        %3263 = vmatprep.mubr.bf16.mxu0 0
        %3264 = vmatmul.mubr.bf16.gmra.mrb[0].mxu0 %v3136
        %v3265 = vpop.f32.mrb[0].mxu0
        %v3266 = vadd.f32 0.0, %v3265
        %v3267 = vpop.f32.mrb[0].mxu0
        %v3268 = vpop.f32.mrb[0].mxu0
        %v3269 = vadd.f32 0.0, %v3268
        %v3270 = vpop.f32.mrb[0].mxu0
        %3271 = vmatprep.mubr.bf16.mxu0 0
        %3272 = vmatmul.mubr.bf16.gmra.mrb[0].mxu0 %v3137
        %v3273 = vpop.f32.mrb[0].mxu0
        %v3274 = vadd.f32 0.0, %v3273
        %v3275 = vpop.f32.mrb[0].mxu0
        %v3276 = vpop.f32.mrb[0].mxu0
        %v3277 = vadd.f32 0.0, %v3276
        %v3278 = vpop.f32.mrb[0].mxu0
        %3279 = vmatprep.mubr.bf16.mxu0 0
        %3280 = vmatmul.mubr.bf16.gmra.mrb[0].mxu0 %v3138
        %v3281 = vpop.f32.mrb[0].mxu0
        %v3282 = vadd.f32 0.0, %v3281
        %v3283 = vpop.f32.mrb[0].mxu0
        %v3284 = vpop.f32.mrb[0].mxu0
        %v3285 = vadd.f32 0.0, %v3284
        %v3286 = vpop.f32.mrb[0].mxu0
        %3287 = vmatprep.mubr.bf16.mxu0 0
        %3288 = vmatmul.mubr.bf16.gmra.mrb[0].mxu0 %v3139
        %v3289 = vpop.f32.mrb[0].mxu0
        %v3290 = vadd.f32 0.0, %v3289
        %v3291 = vpop.f32.mrb[0].mxu0
        %v3292 = vpop.f32.mrb[0].mxu0
        %v3293 = vadd.f32 0.0, %v3292
        %v3294 = vpop.f32.mrb[0].mxu0
        %3295 = vmatprep.mubr.bf16.mxu0 0
        %3296 = vmatmul.mubr.bf16.gmra.mrb[0].mxu0 %v3140
        %v3297 = vpop.f32.mrb[0].mxu0
        %v3298 = vadd.f32 0.0, %v3297
        %v3299 = vpop.f32.mrb[0].mxu0
        %v3300 = vpop.f32.mrb[0].mxu0
        %v3301 = vadd.f32 0.0, %v3300
        %v3302 = vpop.f32.mrb[0].mxu0
        %3303 = vmatprep.mubr.bf16.mxu0 0
        %3304 = vmatmul.mubr.bf16.gmra.mrb[0].mxu0 %v3141
        %v3305 = vpop.f32.mrb[0].mxu0
        %v3306 = vadd.f32 0.0, %v3305
        %v3307 = vpop.f32.mrb[0].mxu0
        %v3308 = vpop.f32.mrb[0].mxu0
        %v3309 = vadd.f32 0.0, %v3308
        %v3310 = vpop.f32.mrb[0].mxu0
        %3311 = vmatprep.mubr.bf16.mxu0 0
        %3312 = vmatmul.mubr.bf16.gmra.mrb[0].mxu0 %v3142
        %v3313 = vpop.f32.mrb[0].mxu0
        %v3314 = vadd.f32 0.0, %v3313
        %v3315 = vpop.f32.mrb[0].mxu0
        %v3316 = vpop.f32.mrb[0].mxu0
        %v3317 = vadd.f32 0.0, %v3316
        %v3318 = vpop.f32.mrb[0].mxu0
        %3319 = vmatprep.mubr.bf16.mxu0 0
        %3320 = vmatmul.mubr.bf16.gmra.mrb[0].mxu0 %v3143
        %v3321 = vpop.f32.mrb[0].mxu0
        %v3322 = vadd.f32 0.0, %v3321
        %v3323 = vpop.f32.mrb[0].mxu0
        %v3324 = vpop.f32.mrb[0].mxu0
        %v3325 = vadd.f32 0.0, %v3324
        %v3326 = vpop.f32.mrb[0].mxu0
        %3327 = vmatprep.mubr.bf16.mxu0 0
        %3328 = vmatmul.mubr.bf16.gmra.mrb[0].mxu0 %v3144
        %v3329 = vpop.f32.mrb[0].mxu0
        %v3330 = vadd.f32 0.0, %v3329
        %v3331 = vpop.f32.mrb[0].mxu0
        %v3332 = vpop.f32.mrb[0].mxu0
        %v3333 = vadd.f32 0.0, %v3332
        %v3334 = vpop.f32.mrb[0].mxu0
        %3335 = vmatprep.mubr.bf16.mxu0 0
        %3336 = vmatmul.mubr.bf16.gmra.mrb[0].mxu0 %v3145
        %v3337 = vpop.f32.mrb[0].mxu0
        %v3338 = vadd.f32 0.0, %v3337
        %v3339 = vpop.f32.mrb[0].mxu0
        %v3340 = vpop.f32.mrb[0].mxu0
        %v3341 = vadd.f32 0.0, %v3340
        %v3342 = vpop.f32.mrb[0].mxu0
        %3343 = vmatprep.mubr.bf16.mxu0 0
        %3344 = vmatmul.mubr.bf16.gmra.mrb[0].mxu0 %v3146
        %v3345 = vpop.f32.mrb[0].mxu0
        %v3346 = vadd.f32 0.0, %v3345
        %v3347 = vpop.f32.mrb[0].mxu0
        %v3348 = vpop.f32.mrb[0].mxu0
        %v3349 = vadd.f32 0.0, %v3348
        %v3350 = vpop.f32.mrb[0].mxu0
        %3351 = vmatprep.mubr.bf16.mxu0 0
        %3352 = vmatmul.mubr.bf16.gmra.mrb[0].mxu0 %v3147
        %v3353 = vpop.f32.mrb[0].mxu0
        %v3354 = vadd.f32 0.0, %v3353
        %v3355 = vpop.f32.mrb[0].mxu0
        %v3356 = vpop.f32.mrb[0].mxu0
        %v3357 = vadd.f32 0.0, %v3356
        %v3358 = vpop.f32.mrb[0].mxu0
        %3359 = vmatprep.mubr.bf16.mxu0 0
        %3360 = vmatmul.mubr.bf16.gmra.mrb[0].mxu0 %v3148
        %v3361 = vpop.f32.mrb[0].mxu0
        %v3362 = vadd.f32 0.0, %v3361
        %v3363 = vpop.f32.mrb[0].mxu0
        %v3364 = vpop.f32.mrb[0].mxu0
        %v3365 = vadd.f32 0.0, %v3364
        %v3366 = vpop.f32.mrb[0].mxu0
        %3367 = vmatprep.mubr.bf16.mxu0 0
        %3368 = vmatmul.mubr.bf16.gmra.mrb[0].mxu0 %v3149
        %v3369 = vpop.f32.mrb[0].mxu0
        %v3370 = vadd.f32 0.0, %v3369
        %v3371 = vpop.f32.mrb[0].mxu0
        %v3372 = vpop.f32.mrb[0].mxu0
        %v3373 = vadd.f32 0.0, %v3372
        %v3374 = vpop.f32.mrb[0].mxu0
        %3375 = vdwg.mxu0
        %v3376 = vadd.f32 %v3069, %v3250
        %v3377 = vadd.f32 %v3070, %v3253
        %v3378 = vadd.f32 %v3071, %v3258
        %v3379 = vadd.f32 %v3072, %v3261
        %v3380 = vadd.f32 %v3073, %v3266
        %v3381 = vadd.f32 %v3074, %v3269
        %v3382 = vadd.f32 %v3075, %v3274
        %v3383 = vadd.f32 %v3076, %v3277
        %v3384 = vadd.f32 %v3077, %v3282
        %v3385 = vadd.f32 %v3078, %v3285
        %v3386 = vadd.f32 %v3079, %v3290
        %v3387 = vadd.f32 %v3080, %v3293
        %v3388 = vadd.f32 %v3081, %v3298
        %v3389 = vadd.f32 %v3082, %v3301
        %v3390 = vadd.f32 %v3083, %v3306
        %v3391 = vadd.f32 %v3084, %v3309
        %v3392 = vadd.f32 %v3085, %v3314
        %v3393 = vadd.f32 %v3086, %v3317
        %v3394 = vadd.f32 %v3087, %v3322
        %v3395 = vadd.f32 %v3088, %v3325
        %v3396 = vadd.f32 %v3089, %v3330
        %v3397 = vadd.f32 %v3090, %v3333
        %v3398 = vadd.f32 %v3091, %v3338
        %v3399 = vadd.f32 %v3092, %v3341
        %v3400 = vadd.f32 %v3093, %v3346
        %v3401 = vadd.f32 %v3094, %v3349
        %v3402 = vadd.f32 %v3095, %v3354
        %v3403 = vadd.f32 %v3096, %v3357
        %v3404 = vadd.f32 %v3097, %v3362
        %v3405 = vadd.f32 %v3098, %v3365
        %v3406 = vadd.f32 %v3099, %v3370
        %v3407 = vadd.f32 %v3100, %v3373
        %v3408 = vld [vmem:[%s3101 + $0x8] sm:$0xff]
        %v3409 = vld [vmem:[%s3101 + $0x10] sm:$0xff]
        %v3410 = vld [vmem:[%s3101 + $0x28] sm:$0xff]
        %v3411 = vld [vmem:[%s3101 + $0x30] sm:$0xff]
        %v3412 = vld [vmem:[%s3101 + $0x48] sm:$0xff]
        %v3413 = vld [vmem:[%s3101 + $0x50] sm:$0xff]
        %v3414 = vld [vmem:[%s3101 + $0x68] sm:$0xff]
        %v3415 = vld [vmem:[%s3101 + $0x70] sm:$0xff]
        %v3416 = vld [vmem:[%s3101 + $0x88] sm:$0xff]
        %v3417 = vld [vmem:[%s3101 + $0x90] sm:$0xff]
        %v3418 = vld [vmem:[%s3101 + $0xa8] sm:$0xff]
        %v3419 = vld [vmem:[%s3101 + $0xb0] sm:$0xff]
        %v3420 = vld [vmem:[%s3101 + $0xc8] sm:$0xff]
        %v3421 = vld [vmem:[%s3101 + $0xd0] sm:$0xff]
        %v3422 = vld [vmem:[%s3101 + $0xe8] sm:$0xff]
        %v3423 = vld [vmem:[%s3101 + $0xf0] sm:$0xff]
        %v3424 = vld [vmem:[%s3101 + $0x108] sm:$0xff]
        %v3425 = vld [vmem:[%s3101 + $0x110] sm:$0xff]
        %v3426 = vld [vmem:[%s3101 + $0x128] sm:$0xff]
        %v3427 = vld [vmem:[%s3101 + $0x130] sm:$0xff]
        %v3428 = vld [vmem:[%s3101 + $0x148] sm:$0xff]
        %v3429 = vld [vmem:[%s3101 + $0x150] sm:$0xff]
        %v3430 = vld [vmem:[%s3101 + $0x168] sm:$0xff]
        %v3431 = vld [vmem:[%s3101 + $0x170] sm:$0xff]
        %v3432 = vld [vmem:[%s3101 + $0x188] sm:$0xff]
        %v3433 = vld [vmem:[%s3101 + $0x190] sm:$0xff]
        %v3434 = vld [vmem:[%s3101 + $0x1a8] sm:$0xff]
        %v3435 = vld [vmem:[%s3101 + $0x1b0] sm:$0xff]
        %v3436 = vld [vmem:[%s3101 + $0x1c8] sm:$0xff]
        %v3437 = vld [vmem:[%s3101 + $0x1d0] sm:$0xff]
        %v3438 = vld [vmem:[%s3101 + $0x1e8] sm:$0xff]
        %v3439 = vld [vmem:[%s3101 + $0x1f0] sm:$0xff]
        %v3440 = vpack.c.bf16 %v3409, %v3408
        %v3441 = vpack.c.bf16 %v3411, %v3410
        %v3442 = vpack.c.bf16 %v3413, %v3412
        %v3443 = vpack.c.bf16 %v3415, %v3414
        %v3444 = vpack.c.bf16 %v3417, %v3416
        %v3445 = vpack.c.bf16 %v3419, %v3418
        %v3446 = vpack.c.bf16 %v3421, %v3420
        %v3447 = vpack.c.bf16 %v3423, %v3422
        %v3448 = vpack.c.bf16 %v3425, %v3424
        %v3449 = vpack.c.bf16 %v3427, %v3426
        %v3450 = vpack.c.bf16 %v3429, %v3428
        %v3451 = vpack.c.bf16 %v3431, %v3430
        %v3452 = vpack.c.bf16 %v3433, %v3432
        %v3453 = vpack.c.bf16 %v3435, %v3434
        %v3454 = vpack.c.bf16 %v3437, %v3436
        %v3455 = vpack.c.bf16 %v3439, %v3438
        %s3456 = scalar_lea.vmem [#allocation9], 448
        %v3457 = vld [vmem:[%s3456] sm:$0xf]
        %v3458 = vld [vmem:[%s3456 + $0x4] sm:$0xf]
        %v3459 = vld [vmem:[%s3456 + $0x8] sm:$0xf]
        %v3460 = vld [vmem:[%s3456 + $0xc] sm:$0xf]
        %v3461 = vld [vmem:[%s3456 + $0x10] sm:$0xf]
        %v3462 = vld [vmem:[%s3456 + $0x14] sm:$0xf]
        %v3463 = vld [vmem:[%s3456 + $0x18] sm:$0xf]
        %v3464 = vld [vmem:[%s3456 + $0x1c] sm:$0xf]
        %v3465 = vld [vmem:[%s3456 + $0x20] sm:$0xf]
        %v3466 = vld [vmem:[%s3456 + $0x24] sm:$0xf]
        %v3467 = vld [vmem:[%s3456 + $0x28] sm:$0xf]
        %v3468 = vld [vmem:[%s3456 + $0x2c] sm:$0xf]
        %v3469 = vld [vmem:[%s3456 + $0x30] sm:$0xf]
        %v3470 = vld [vmem:[%s3456 + $0x34] sm:$0xf]
        %v3471 = vld [vmem:[%s3456 + $0x38] sm:$0xf]
        %v3472 = vld [vmem:[%s3456 + $0x3c] sm:$0xf]
        %v3489 = vunpack.c.l.b16 %v3457
        %v3490 = vunpack.c.l.b16 %v3458
        %v3491 = vunpack.c.l.b16 %v3459
        %v3492 = vunpack.c.l.b16 %v3460
        %v3493 = vunpack.c.l.b16 %v3461
        %v3494 = vunpack.c.l.b16 %v3462
        %v3495 = vunpack.c.l.b16 %v3463
        %v3496 = vunpack.c.l.b16 %v3464
        %v3497 = vunpack.c.l.b16 %v3465
        %v3498 = vunpack.c.l.b16 %v3466
        %v3499 = vunpack.c.l.b16 %v3467
        %v3500 = vunpack.c.l.b16 %v3468
        %v3501 = vunpack.c.l.b16 %v3469
        %v3502 = vunpack.c.l.b16 %v3470
        %v3503 = vunpack.c.l.b16 %v3471
        %v3504 = vunpack.c.l.b16 %v3472
        %v3505 = vpack.c.b16 %v3490, %v3489
        %v3506 = vpack.c.b16 %v3492, %v3491
        %v3507 = vpack.c.b16 %v3494, %v3493
        %v3508 = vpack.c.b16 %v3496, %v3495
        %v3509 = vpack.c.b16 %v3498, %v3497
        %v3510 = vpack.c.b16 %v3500, %v3499
        %v3511 = vpack.c.b16 %v3502, %v3501
        %v3512 = vpack.c.b16 %v3504, %v3503
        %3521 = vmatprep.subr.bf16.mxu0 0
        %3522 = vmatpush1.bf16.msra.mxu0 %v3505
        %3523 = vmatprep.subr.bf16.mxu0 0
        %3524 = vmatpush1.bf16.msra.mxu0 %v3506
        %3525 = vmatprep.subr.bf16.mxu0 0
        %3526 = vmatpush1.bf16.msra.mxu0 %v3507
        %3527 = vmatprep.subr.bf16.mxu0 0
        %3528 = vmatpush1.bf16.msra.mxu0 %v3508
        %3529 = vmatprep.subr.bf16.mxu0 0
        %3530 = vmatpush1.bf16.msra.mxu0 %v3509
        %3531 = vmatprep.subr.bf16.mxu0 0
        %3532 = vmatpush1.bf16.msra.mxu0 %v3510
        %3533 = vmatprep.subr.bf16.mxu0 0
        %3534 = vmatpush1.bf16.msra.mxu0 %v3511
        %3535 = vmatprep.subr.bf16.mxu0 0
        %3536 = vmatpush1.bf16.msra.mxu0 %v3512
        %3537 = vmatprep.subr.bf16.mxu0 0
        %3538 = vmatpush1.bf16.msra.mxu0 0
        %3539 = vmatprep.subr.bf16.mxu0 0
        %3540 = vmatpush1.bf16.msra.mxu0 0
        %3541 = vmatprep.subr.bf16.mxu0 0
        %3542 = vmatpush1.bf16.msra.mxu0 0
        %3543 = vmatprep.subr.bf16.mxu0 0
        %3544 = vmatpush1.bf16.msra.mxu0 0
        %3545 = vmatprep.subr.bf16.mxu0 0
        %3546 = vmatpush1.bf16.msra.mxu0 0
        %3547 = vmatprep.subr.bf16.mxu0 0
        %3548 = vmatpush1.bf16.msra.mxu0 0
        %3549 = vmatprep.subr.bf16.mxu0 0
        %3550 = vmatpush1.bf16.msra.mxu0 0
        %3551 = vmatprep.subr.bf16.mxu0 0
        %3552 = vmatpush1.bf16.msra.mxu0 0
        %3553 = vmatprep.mubr.bf16.mxu0 0
        %3554 = vmatmul.mubr.bf16.gmra.mrb[0].mxu0 %v3440
        %v3555 = vpop.f32.mrb[0].mxu0
        %v3556 = vadd.f32 0.0, %v3555
        %v3557 = vpop.f32.mrb[0].mxu0
        %v3558 = vpop.f32.mrb[0].mxu0
        %v3559 = vadd.f32 0.0, %v3558
        %v3560 = vpop.f32.mrb[0].mxu0
        %3561 = vmatprep.mubr.bf16.mxu0 0
        %3562 = vmatmul.mubr.bf16.gmra.mrb[0].mxu0 %v3441
        %v3563 = vpop.f32.mrb[0].mxu0
        %v3564 = vadd.f32 0.0, %v3563
        %v3565 = vpop.f32.mrb[0].mxu0
        %v3566 = vpop.f32.mrb[0].mxu0
        %v3567 = vadd.f32 0.0, %v3566
        %v3568 = vpop.f32.mrb[0].mxu0
        %3569 = vmatprep.mubr.bf16.mxu0 0
        %3570 = vmatmul.mubr.bf16.gmra.mrb[0].mxu0 %v3442
        %v3571 = vpop.f32.mrb[0].mxu0
        %v3572 = vadd.f32 0.0, %v3571
        %v3573 = vpop.f32.mrb[0].mxu0
        %v3574 = vpop.f32.mrb[0].mxu0
        %v3575 = vadd.f32 0.0, %v3574
        %v3576 = vpop.f32.mrb[0].mxu0
        %3577 = vmatprep.mubr.bf16.mxu0 0
        %3578 = vmatmul.mubr.bf16.gmra.mrb[0].mxu0 %v3443
        %v3579 = vpop.f32.mrb[0].mxu0
        %v3580 = vadd.f32 0.0, %v3579
        %v3581 = vpop.f32.mrb[0].mxu0
        %v3582 = vpop.f32.mrb[0].mxu0
        %v3583 = vadd.f32 0.0, %v3582
        %v3584 = vpop.f32.mrb[0].mxu0
        %3585 = vmatprep.mubr.bf16.mxu0 0
        %3586 = vmatmul.mubr.bf16.gmra.mrb[0].mxu0 %v3444
        %v3587 = vpop.f32.mrb[0].mxu0
        %v3588 = vadd.f32 0.0, %v3587
        %v3589 = vpop.f32.mrb[0].mxu0
        %v3590 = vpop.f32.mrb[0].mxu0
        %v3591 = vadd.f32 0.0, %v3590
        %v3592 = vpop.f32.mrb[0].mxu0
        %3593 = vmatprep.mubr.bf16.mxu0 0
        %3594 = vmatmul.mubr.bf16.gmra.mrb[0].mxu0 %v3445
        %v3595 = vpop.f32.mrb[0].mxu0
        %v3596 = vadd.f32 0.0, %v3595
        %v3597 = vpop.f32.mrb[0].mxu0
        %v3598 = vpop.f32.mrb[0].mxu0
        %v3599 = vadd.f32 0.0, %v3598
        %v3600 = vpop.f32.mrb[0].mxu0
        %3601 = vmatprep.mubr.bf16.mxu0 0
        %3602 = vmatmul.mubr.bf16.gmra.mrb[0].mxu0 %v3446
        %v3603 = vpop.f32.mrb[0].mxu0
        %v3604 = vadd.f32 0.0, %v3603
        %v3605 = vpop.f32.mrb[0].mxu0
        %v3606 = vpop.f32.mrb[0].mxu0
        %v3607 = vadd.f32 0.0, %v3606
        %v3608 = vpop.f32.mrb[0].mxu0
        %3609 = vmatprep.mubr.bf16.mxu0 0
        %3610 = vmatmul.mubr.bf16.gmra.mrb[0].mxu0 %v3447
        %v3611 = vpop.f32.mrb[0].mxu0
        %v3612 = vadd.f32 0.0, %v3611
        %v3613 = vpop.f32.mrb[0].mxu0
        %v3614 = vpop.f32.mrb[0].mxu0
        %v3615 = vadd.f32 0.0, %v3614
        %v3616 = vpop.f32.mrb[0].mxu0
        %3617 = vmatprep.mubr.bf16.mxu0 0
        %3618 = vmatmul.mubr.bf16.gmra.mrb[0].mxu0 %v3448
        %v3619 = vpop.f32.mrb[0].mxu0
        %v3620 = vadd.f32 0.0, %v3619
        %v3621 = vpop.f32.mrb[0].mxu0
        %v3622 = vpop.f32.mrb[0].mxu0
        %v3623 = vadd.f32 0.0, %v3622
        %v3624 = vpop.f32.mrb[0].mxu0
        %3625 = vmatprep.mubr.bf16.mxu0 0
        %3626 = vmatmul.mubr.bf16.gmra.mrb[0].mxu0 %v3449
        %v3627 = vpop.f32.mrb[0].mxu0
        %v3628 = vadd.f32 0.0, %v3627
        %v3629 = vpop.f32.mrb[0].mxu0
        %v3630 = vpop.f32.mrb[0].mxu0
        %v3631 = vadd.f32 0.0, %v3630
        %v3632 = vpop.f32.mrb[0].mxu0
        %3633 = vmatprep.mubr.bf16.mxu0 0
        %3634 = vmatmul.mubr.bf16.gmra.mrb[0].mxu0 %v3450
        %v3635 = vpop.f32.mrb[0].mxu0
        %v3636 = vadd.f32 0.0, %v3635
        %v3637 = vpop.f32.mrb[0].mxu0
        %v3638 = vpop.f32.mrb[0].mxu0
        %v3639 = vadd.f32 0.0, %v3638
        %v3640 = vpop.f32.mrb[0].mxu0
        %3641 = vmatprep.mubr.bf16.mxu0 0
        %3642 = vmatmul.mubr.bf16.gmra.mrb[0].mxu0 %v3451
        %v3643 = vpop.f32.mrb[0].mxu0
        %v3644 = vadd.f32 0.0, %v3643
        %v3645 = vpop.f32.mrb[0].mxu0
        %v3646 = vpop.f32.mrb[0].mxu0
        %v3647 = vadd.f32 0.0, %v3646
        %v3648 = vpop.f32.mrb[0].mxu0
        %3649 = vmatprep.mubr.bf16.mxu0 0
        %3650 = vmatmul.mubr.bf16.gmra.mrb[0].mxu0 %v3452
        %v3651 = vpop.f32.mrb[0].mxu0
        %v3652 = vadd.f32 0.0, %v3651
        %v3653 = vpop.f32.mrb[0].mxu0
        %v3654 = vpop.f32.mrb[0].mxu0
        %v3655 = vadd.f32 0.0, %v3654
        %v3656 = vpop.f32.mrb[0].mxu0
        %3657 = vmatprep.mubr.bf16.mxu0 0
        %3658 = vmatmul.mubr.bf16.gmra.mrb[0].mxu0 %v3453
        %v3659 = vpop.f32.mrb[0].mxu0
        %v3660 = vadd.f32 0.0, %v3659
        %v3661 = vpop.f32.mrb[0].mxu0
        %v3662 = vpop.f32.mrb[0].mxu0
        %v3663 = vadd.f32 0.0, %v3662
        %v3664 = vpop.f32.mrb[0].mxu0
        %3665 = vmatprep.mubr.bf16.mxu0 0
        %3666 = vmatmul.mubr.bf16.gmra.mrb[0].mxu0 %v3454
        %v3667 = vpop.f32.mrb[0].mxu0
        %v3668 = vadd.f32 0.0, %v3667
        %v3669 = vpop.f32.mrb[0].mxu0
        %v3670 = vpop.f32.mrb[0].mxu0
        %v3671 = vadd.f32 0.0, %v3670
        %v3672 = vpop.f32.mrb[0].mxu0
        %3673 = vmatprep.mubr.bf16.mxu0 0
        %3674 = vmatmul.mubr.bf16.gmra.mrb[0].mxu0 %v3455
        %v3675 = vpop.f32.mrb[0].mxu0
        %v3676 = vadd.f32 0.0, %v3675
        %v3677 = vpop.f32.mrb[0].mxu0
        %v3678 = vpop.f32.mrb[0].mxu0
        %v3679 = vadd.f32 0.0, %v3678
        %v3680 = vpop.f32.mrb[0].mxu0
        %3681 = vdwg.mxu0
        %v3682 = vadd.f32 %v3376, %v3556
        %v3683 = vadd.f32 %v3377, %v3559
        %v3684 = vadd.f32 %v3378, %v3564
        %v3685 = vadd.f32 %v3379, %v3567
        %v3686 = vadd.f32 %v3380, %v3572
        %v3687 = vadd.f32 %v3381, %v3575
        %v3688 = vadd.f32 %v3382, %v3580
        %v3689 = vadd.f32 %v3383, %v3583
        %v3690 = vadd.f32 %v3384, %v3588
        %v3691 = vadd.f32 %v3385, %v3591
        %v3692 = vadd.f32 %v3386, %v3596
        %v3693 = vadd.f32 %v3387, %v3599
        %v3694 = vadd.f32 %v3388, %v3604
        %v3695 = vadd.f32 %v3389, %v3607
        %v3696 = vadd.f32 %v3390, %v3612
        %v3697 = vadd.f32 %v3391, %v3615
        %v3698 = vadd.f32 %v3392, %v3620
        %v3699 = vadd.f32 %v3393, %v3623
        %v3700 = vadd.f32 %v3394, %v3628
        %v3701 = vadd.f32 %v3395, %v3631
        %v3702 = vadd.f32 %v3396, %v3636
        %v3703 = vadd.f32 %v3397, %v3639
        %v3704 = vadd.f32 %v3398, %v3644
        %v3705 = vadd.f32 %v3399, %v3647
        %v3706 = vadd.f32 %v3400, %v3652
        %v3707 = vadd.f32 %v3401, %v3655
        %v3708 = vadd.f32 %v3402, %v3660
        %v3709 = vadd.f32 %v3403, %v3663
        %v3710 = vadd.f32 %v3404, %v3668
        %v3711 = vadd.f32 %v3405, %v3671
        %v3712 = vadd.f32 %v3406, %v3676
        %v3713 = vadd.f32 %v3407, %v3679
        %v3714 = vld [vmem:[%s3101 + $0x9] sm:$0xff]
        %v3715 = vld [vmem:[%s3101 + $0x11] sm:$0xff]
        %v3716 = vld [vmem:[%s3101 + $0x29] sm:$0xff]
        %v3717 = vld [vmem:[%s3101 + $0x31] sm:$0xff]
        %v3718 = vld [vmem:[%s3101 + $0x49] sm:$0xff]
        %v3719 = vld [vmem:[%s3101 + $0x51] sm:$0xff]
        %v3720 = vld [vmem:[%s3101 + $0x69] sm:$0xff]
        %v3721 = vld [vmem:[%s3101 + $0x71] sm:$0xff]
        %v3722 = vld [vmem:[%s3101 + $0x89] sm:$0xff]
        %v3723 = vld [vmem:[%s3101 + $0x91] sm:$0xff]
        %v3724 = vld [vmem:[%s3101 + $0xa9] sm:$0xff]
        %v3725 = vld [vmem:[%s3101 + $0xb1] sm:$0xff]
        %v3726 = vld [vmem:[%s3101 + $0xc9] sm:$0xff]
        %v3727 = vld [vmem:[%s3101 + $0xd1] sm:$0xff]
        %v3728 = vld [vmem:[%s3101 + $0xe9] sm:$0xff]
        %v3729 = vld [vmem:[%s3101 + $0xf1] sm:$0xff]
        %v3730 = vld [vmem:[%s3101 + $0x109] sm:$0xff]
        %v3731 = vld [vmem:[%s3101 + $0x111] sm:$0xff]
        %v3732 = vld [vmem:[%s3101 + $0x129] sm:$0xff]
        %v3733 = vld [vmem:[%s3101 + $0x131] sm:$0xff]
        %v3734 = vld [vmem:[%s3101 + $0x149] sm:$0xff]
        %v3735 = vld [vmem:[%s3101 + $0x151] sm:$0xff]
        %v3736 = vld [vmem:[%s3101 + $0x169] sm:$0xff]
        %v3737 = vld [vmem:[%s3101 + $0x171] sm:$0xff]
        %v3738 = vld [vmem:[%s3101 + $0x189] sm:$0xff]
        %v3739 = vld [vmem:[%s3101 + $0x191] sm:$0xff]
        %v3740 = vld [vmem:[%s3101 + $0x1a9] sm:$0xff]
        %v3741 = vld [vmem:[%s3101 + $0x1b1] sm:$0xff]
        %v3742 = vld [vmem:[%s3101 + $0x1c9] sm:$0xff]
        %v3743 = vld [vmem:[%s3101 + $0x1d1] sm:$0xff]
        %v3744 = vld [vmem:[%s3101 + $0x1e9] sm:$0xff]
        %v3745 = vld [vmem:[%s3101 + $0x1f1] sm:$0xff]
        %v3746 = vpack.c.bf16 %v3715, %v3714
        %v3747 = vpack.c.bf16 %v3717, %v3716
        %v3748 = vpack.c.bf16 %v3719, %v3718
        %v3749 = vpack.c.bf16 %v3721, %v3720
        %v3750 = vpack.c.bf16 %v3723, %v3722
        %v3751 = vpack.c.bf16 %v3725, %v3724
        %v3752 = vpack.c.bf16 %v3727, %v3726
        %v3753 = vpack.c.bf16 %v3729, %v3728
        %v3754 = vpack.c.bf16 %v3731, %v3730
        %v3755 = vpack.c.bf16 %v3733, %v3732
        %v3756 = vpack.c.bf16 %v3735, %v3734
        %v3757 = vpack.c.bf16 %v3737, %v3736
        %v3758 = vpack.c.bf16 %v3739, %v3738
        %v3759 = vpack.c.bf16 %v3741, %v3740
        %v3760 = vpack.c.bf16 %v3743, %v3742
        %v3761 = vpack.c.bf16 %v3745, %v3744
        %s3762 = scalar_lea.vmem [#allocation9], 512
        %v3763 = vld [vmem:[%s3762] sm:$0xf]
        %v3764 = vld [vmem:[%s3762 + $0x4] sm:$0xf]
        %v3765 = vld [vmem:[%s3762 + $0x8] sm:$0xf]
        %v3766 = vld [vmem:[%s3762 + $0xc] sm:$0xf]
        %v3767 = vld [vmem:[%s3762 + $0x10] sm:$0xf]
        %v3768 = vld [vmem:[%s3762 + $0x14] sm:$0xf]
        %v3769 = vld [vmem:[%s3762 + $0x18] sm:$0xf]
        %v3770 = vld [vmem:[%s3762 + $0x1c] sm:$0xf]
        %v3771 = vld [vmem:[%s3762 + $0x20] sm:$0xf]
        %v3772 = vld [vmem:[%s3762 + $0x24] sm:$0xf]
        %v3773 = vld [vmem:[%s3762 + $0x28] sm:$0xf]
        %v3774 = vld [vmem:[%s3762 + $0x2c] sm:$0xf]
        %v3775 = vld [vmem:[%s3762 + $0x30] sm:$0xf]
        %v3776 = vld [vmem:[%s3762 + $0x34] sm:$0xf]
        %v3777 = vld [vmem:[%s3762 + $0x38] sm:$0xf]
        %v3778 = vld [vmem:[%s3762 + $0x3c] sm:$0xf]
        %v3795 = vunpack.c.l.b16 %v3763
        %v3796 = vunpack.c.l.b16 %v3764
        %v3797 = vunpack.c.l.b16 %v3765
        %v3798 = vunpack.c.l.b16 %v3766
        %v3799 = vunpack.c.l.b16 %v3767
        %v3800 = vunpack.c.l.b16 %v3768
        %v3801 = vunpack.c.l.b16 %v3769
        %v3802 = vunpack.c.l.b16 %v3770
        %v3803 = vunpack.c.l.b16 %v3771
        %v3804 = vunpack.c.l.b16 %v3772
        %v3805 = vunpack.c.l.b16 %v3773
        %v3806 = vunpack.c.l.b16 %v3774
        %v3807 = vunpack.c.l.b16 %v3775
        %v3808 = vunpack.c.l.b16 %v3776
        %v3809 = vunpack.c.l.b16 %v3777
        %v3810 = vunpack.c.l.b16 %v3778
        %v3811 = vpack.c.b16 %v3796, %v3795
        %v3812 = vpack.c.b16 %v3798, %v3797
        %v3813 = vpack.c.b16 %v3800, %v3799
        %v3814 = vpack.c.b16 %v3802, %v3801
        %v3815 = vpack.c.b16 %v3804, %v3803
        %v3816 = vpack.c.b16 %v3806, %v3805
        %v3817 = vpack.c.b16 %v3808, %v3807
        %v3818 = vpack.c.b16 %v3810, %v3809
        %3827 = vmatprep.subr.bf16.mxu0 0
        %3828 = vmatpush1.bf16.msra.mxu0 %v3811
        %3829 = vmatprep.subr.bf16.mxu0 0
        %3830 = vmatpush1.bf16.msra.mxu0 %v3812
        %3831 = vmatprep.subr.bf16.mxu0 0
        %3832 = vmatpush1.bf16.msra.mxu0 %v3813
        %3833 = vmatprep.subr.bf16.mxu0 0
        %3834 = vmatpush1.bf16.msra.mxu0 %v3814
        %3835 = vmatprep.subr.bf16.mxu0 0
        %3836 = vmatpush1.bf16.msra.mxu0 %v3815
        %3837 = vmatprep.subr.bf16.mxu0 0
        %3838 = vmatpush1.bf16.msra.mxu0 %v3816
        %3839 = vmatprep.subr.bf16.mxu0 0
        %3840 = vmatpush1.bf16.msra.mxu0 %v3817
        %3841 = vmatprep.subr.bf16.mxu0 0
        %3842 = vmatpush1.bf16.msra.mxu0 %v3818
        %3843 = vmatprep.subr.bf16.mxu0 0
        %3844 = vmatpush1.bf16.msra.mxu0 0
        %3845 = vmatprep.subr.bf16.mxu0 0
        %3846 = vmatpush1.bf16.msra.mxu0 0
        %3847 = vmatprep.subr.bf16.mxu0 0
        %3848 = vmatpush1.bf16.msra.mxu0 0
        %3849 = vmatprep.subr.bf16.mxu0 0
        %3850 = vmatpush1.bf16.msra.mxu0 0
        %3851 = vmatprep.subr.bf16.mxu0 0
        %3852 = vmatpush1.bf16.msra.mxu0 0
        %3853 = vmatprep.subr.bf16.mxu0 0
        %3854 = vmatpush1.bf16.msra.mxu0 0
        %3855 = vmatprep.subr.bf16.mxu0 0
        %3856 = vmatpush1.bf16.msra.mxu0 0
        %3857 = vmatprep.subr.bf16.mxu0 0
        %3858 = vmatpush1.bf16.msra.mxu0 0
        %3859 = vmatprep.mubr.bf16.mxu0 0
        %3860 = vmatmul.mubr.bf16.gmra.mrb[0].mxu0 %v3746
        %v3861 = vpop.f32.mrb[0].mxu0
        %v3862 = vadd.f32 0.0, %v3861
        %v3863 = vpop.f32.mrb[0].mxu0
        %v3864 = vpop.f32.mrb[0].mxu0
        %v3865 = vadd.f32 0.0, %v3864
        %v3866 = vpop.f32.mrb[0].mxu0
        %3867 = vmatprep.mubr.bf16.mxu0 0
        %3868 = vmatmul.mubr.bf16.gmra.mrb[0].mxu0 %v3747
        %v3869 = vpop.f32.mrb[0].mxu0
        %v3870 = vadd.f32 0.0, %v3869
        %v3871 = vpop.f32.mrb[0].mxu0
        %v3872 = vpop.f32.mrb[0].mxu0
        %v3873 = vadd.f32 0.0, %v3872
        %v3874 = vpop.f32.mrb[0].mxu0
        %3875 = vmatprep.mubr.bf16.mxu0 0
        %3876 = vmatmul.mubr.bf16.gmra.mrb[0].mxu0 %v3748
        %v3877 = vpop.f32.mrb[0].mxu0
        %v3878 = vadd.f32 0.0, %v3877
        %v3879 = vpop.f32.mrb[0].mxu0
        %v3880 = vpop.f32.mrb[0].mxu0
        %v3881 = vadd.f32 0.0, %v3880
        %v3882 = vpop.f32.mrb[0].mxu0
        %3883 = vmatprep.mubr.bf16.mxu0 0
        %3884 = vmatmul.mubr.bf16.gmra.mrb[0].mxu0 %v3749
        %v3885 = vpop.f32.mrb[0].mxu0
        %v3886 = vadd.f32 0.0, %v3885
        %v3887 = vpop.f32.mrb[0].mxu0
        %v3888 = vpop.f32.mrb[0].mxu0
        %v3889 = vadd.f32 0.0, %v3888
        %v3890 = vpop.f32.mrb[0].mxu0
        %3891 = vmatprep.mubr.bf16.mxu0 0
        %3892 = vmatmul.mubr.bf16.gmra.mrb[0].mxu0 %v3750
        %v3893 = vpop.f32.mrb[0].mxu0
        %v3894 = vadd.f32 0.0, %v3893
        %v3895 = vpop.f32.mrb[0].mxu0
        %v3896 = vpop.f32.mrb[0].mxu0
        %v3897 = vadd.f32 0.0, %v3896
        %v3898 = vpop.f32.mrb[0].mxu0
        %3899 = vmatprep.mubr.bf16.mxu0 0
        %3900 = vmatmul.mubr.bf16.gmra.mrb[0].mxu0 %v3751
        %v3901 = vpop.f32.mrb[0].mxu0
        %v3902 = vadd.f32 0.0, %v3901
        %v3903 = vpop.f32.mrb[0].mxu0
        %v3904 = vpop.f32.mrb[0].mxu0
        %v3905 = vadd.f32 0.0, %v3904
        %v3906 = vpop.f32.mrb[0].mxu0
        %3907 = vmatprep.mubr.bf16.mxu0 0
        %3908 = vmatmul.mubr.bf16.gmra.mrb[0].mxu0 %v3752
        %v3909 = vpop.f32.mrb[0].mxu0
        %v3910 = vadd.f32 0.0, %v3909
        %v3911 = vpop.f32.mrb[0].mxu0
        %v3912 = vpop.f32.mrb[0].mxu0
        %v3913 = vadd.f32 0.0, %v3912
        %v3914 = vpop.f32.mrb[0].mxu0
        %3915 = vmatprep.mubr.bf16.mxu0 0
        %3916 = vmatmul.mubr.bf16.gmra.mrb[0].mxu0 %v3753
        %v3917 = vpop.f32.mrb[0].mxu0
        %v3918 = vadd.f32 0.0, %v3917
        %v3919 = vpop.f32.mrb[0].mxu0
        %v3920 = vpop.f32.mrb[0].mxu0
        %v3921 = vadd.f32 0.0, %v3920
        %v3922 = vpop.f32.mrb[0].mxu0
        %3923 = vmatprep.mubr.bf16.mxu0 0
        %3924 = vmatmul.mubr.bf16.gmra.mrb[0].mxu0 %v3754
        %v3925 = vpop.f32.mrb[0].mxu0
        %v3926 = vadd.f32 0.0, %v3925
        %v3927 = vpop.f32.mrb[0].mxu0
        %v3928 = vpop.f32.mrb[0].mxu0
        %v3929 = vadd.f32 0.0, %v3928
        %v3930 = vpop.f32.mrb[0].mxu0
        %3931 = vmatprep.mubr.bf16.mxu0 0
        %3932 = vmatmul.mubr.bf16.gmra.mrb[0].mxu0 %v3755
        %v3933 = vpop.f32.mrb[0].mxu0
        %v3934 = vadd.f32 0.0, %v3933
        %v3935 = vpop.f32.mrb[0].mxu0
        %v3936 = vpop.f32.mrb[0].mxu0
        %v3937 = vadd.f32 0.0, %v3936
        %v3938 = vpop.f32.mrb[0].mxu0
        %3939 = vmatprep.mubr.bf16.mxu0 0
        %3940 = vmatmul.mubr.bf16.gmra.mrb[0].mxu0 %v3756
        %v3941 = vpop.f32.mrb[0].mxu0
        %v3942 = vadd.f32 0.0, %v3941
        %v3943 = vpop.f32.mrb[0].mxu0
        %v3944 = vpop.f32.mrb[0].mxu0
        %v3945 = vadd.f32 0.0, %v3944
        %v3946 = vpop.f32.mrb[0].mxu0
        %3947 = vmatprep.mubr.bf16.mxu0 0
        %3948 = vmatmul.mubr.bf16.gmra.mrb[0].mxu0 %v3757
        %v3949 = vpop.f32.mrb[0].mxu0
        %v3950 = vadd.f32 0.0, %v3949
        %v3951 = vpop.f32.mrb[0].mxu0
        %v3952 = vpop.f32.mrb[0].mxu0
        %v3953 = vadd.f32 0.0, %v3952
        %v3954 = vpop.f32.mrb[0].mxu0
        %3955 = vmatprep.mubr.bf16.mxu0 0
        %3956 = vmatmul.mubr.bf16.gmra.mrb[0].mxu0 %v3758
        %v3957 = vpop.f32.mrb[0].mxu0
        %v3958 = vadd.f32 0.0, %v3957
        %v3959 = vpop.f32.mrb[0].mxu0
        %v3960 = vpop.f32.mrb[0].mxu0
        %v3961 = vadd.f32 0.0, %v3960
        %v3962 = vpop.f32.mrb[0].mxu0
        %3963 = vmatprep.mubr.bf16.mxu0 0
        %3964 = vmatmul.mubr.bf16.gmra.mrb[0].mxu0 %v3759
        %v3965 = vpop.f32.mrb[0].mxu0
        %v3966 = vadd.f32 0.0, %v3965
        %v3967 = vpop.f32.mrb[0].mxu0
        %v3968 = vpop.f32.mrb[0].mxu0
        %v3969 = vadd.f32 0.0, %v3968
        %v3970 = vpop.f32.mrb[0].mxu0
        %3971 = vmatprep.mubr.bf16.mxu0 0
        %3972 = vmatmul.mubr.bf16.gmra.mrb[0].mxu0 %v3760
        %v3973 = vpop.f32.mrb[0].mxu0
        %v3974 = vadd.f32 0.0, %v3973
        %v3975 = vpop.f32.mrb[0].mxu0
        %v3976 = vpop.f32.mrb[0].mxu0
        %v3977 = vadd.f32 0.0, %v3976
        %v3978 = vpop.f32.mrb[0].mxu0
        %3979 = vmatprep.mubr.bf16.mxu0 0
        %3980 = vmatmul.mubr.bf16.gmra.mrb[0].mxu0 %v3761
        %v3981 = vpop.f32.mrb[0].mxu0
        %v3982 = vadd.f32 0.0, %v3981
        %v3983 = vpop.f32.mrb[0].mxu0
        %v3984 = vpop.f32.mrb[0].mxu0
        %v3985 = vadd.f32 0.0, %v3984
        %v3986 = vpop.f32.mrb[0].mxu0
        %3987 = vdwg.mxu0
        %v3988 = vadd.f32 %v3682, %v3862
        %v3989 = vadd.f32 %v3683, %v3865
        %v3990 = vadd.f32 %v3684, %v3870
        %v3991 = vadd.f32 %v3685, %v3873
        %v3992 = vadd.f32 %v3686, %v3878
        %v3993 = vadd.f32 %v3687, %v3881
        %v3994 = vadd.f32 %v3688, %v3886
        %v3995 = vadd.f32 %v3689, %v3889
        %v3996 = vadd.f32 %v3690, %v3894
        %v3997 = vadd.f32 %v3691, %v3897
        %v3998 = vadd.f32 %v3692, %v3902
        %v3999 = vadd.f32 %v3693, %v3905
        %v4000 = vadd.f32 %v3694, %v3910
        %v4001 = vadd.f32 %v3695, %v3913
        %v4002 = vadd.f32 %v3696, %v3918
        %v4003 = vadd.f32 %v3697, %v3921
        %v4004 = vadd.f32 %v3698, %v3926
        %v4005 = vadd.f32 %v3699, %v3929
        %v4006 = vadd.f32 %v3700, %v3934
        %v4007 = vadd.f32 %v3701, %v3937
        %v4008 = vadd.f32 %v3702, %v3942
        %v4009 = vadd.f32 %v3703, %v3945
        %v4010 = vadd.f32 %v3704, %v3950
        %v4011 = vadd.f32 %v3705, %v3953
        %v4012 = vadd.f32 %v3706, %v3958
        %v4013 = vadd.f32 %v3707, %v3961
        %v4014 = vadd.f32 %v3708, %v3966
        %v4015 = vadd.f32 %v3709, %v3969
        %v4016 = vadd.f32 %v3710, %v3974
        %v4017 = vadd.f32 %v3711, %v3977
        %v4018 = vadd.f32 %v3712, %v3982
        %v4019 = vadd.f32 %v3713, %v3985
        %v4020 = vld [vmem:[%s6] sm:$0x1]
        %v4022 = vlaneseq
        %v4023 = vshrl.u32 %v4022, 7
        %v4024 = vsub.s32 0, %v4023
        %v4025 = vrot.slane %v4020, %v4024
        %v4027 = vadd.f32 %v3988, %v4025
        %v4028 = vadd.f32 %v3989, %v4025
        %v4029 = vadd.f32 %v3990, %v4025
        %v4030 = vadd.f32 %v3991, %v4025
        %v4031 = vadd.f32 %v3992, %v4025
        %v4032 = vadd.f32 %v3993, %v4025
        %v4033 = vadd.f32 %v3994, %v4025
        %v4034 = vadd.f32 %v3995, %v4025
        %v4035 = vadd.f32 %v3996, %v4025
        %v4036 = vadd.f32 %v3997, %v4025
        %v4037 = vadd.f32 %v3998, %v4025
        %v4038 = vadd.f32 %v3999, %v4025
        %v4039 = vadd.f32 %v4000, %v4025
        %v4040 = vadd.f32 %v4001, %v4025
        %v4041 = vadd.f32 %v4002, %v4025
        %v4042 = vadd.f32 %v4003, %v4025
        %v4043 = vadd.f32 %v4004, %v4025
        %v4044 = vadd.f32 %v4005, %v4025
        %v4045 = vadd.f32 %v4006, %v4025
        %v4046 = vadd.f32 %v4007, %v4025
        %v4047 = vadd.f32 %v4008, %v4025
        %v4048 = vadd.f32 %v4009, %v4025
        %v4049 = vadd.f32 %v4010, %v4025
        %v4050 = vadd.f32 %v4011, %v4025
        %v4051 = vadd.f32 %v4012, %v4025
        %v4052 = vadd.f32 %v4013, %v4025
        %v4053 = vadd.f32 %v4014, %v4025
        %v4054 = vadd.f32 %v4015, %v4025
        %v4055 = vadd.f32 %v4016, %v4025
        %v4056 = vadd.f32 %v4017, %v4025
        %v4057 = vadd.f32 %v4018, %v4025
        %v4058 = vadd.f32 %v4019, %v4025
        %v4059 = vmax.f32 %v4027, 0.0
        %v4060 = vmax.f32 %v4028, 0.0
        %v4061 = vmax.f32 %v4029, 0.0
        %v4062 = vmax.f32 %v4030, 0.0
        %v4063 = vmax.f32 %v4031, 0.0
        %v4064 = vmax.f32 %v4032, 0.0
        %v4065 = vmax.f32 %v4033, 0.0
        %v4066 = vmax.f32 %v4034, 0.0
        %v4067 = vmax.f32 %v4035, 0.0
        %v4068 = vmax.f32 %v4036, 0.0
        %v4069 = vmax.f32 %v4037, 0.0
        %v4070 = vmax.f32 %v4038, 0.0
        %v4071 = vmax.f32 %v4039, 0.0
        %v4072 = vmax.f32 %v4040, 0.0
        %v4073 = vmax.f32 %v4041, 0.0
        %v4074 = vmax.f32 %v4042, 0.0
        %v4075 = vmax.f32 %v4043, 0.0
        %v4076 = vmax.f32 %v4044, 0.0
        %v4077 = vmax.f32 %v4045, 0.0
        %v4078 = vmax.f32 %v4046, 0.0
        %v4079 = vmax.f32 %v4047, 0.0
        %v4080 = vmax.f32 %v4048, 0.0
        %v4081 = vmax.f32 %v4049, 0.0
        %v4082 = vmax.f32 %v4050, 0.0
        %v4083 = vmax.f32 %v4051, 0.0
        %v4084 = vmax.f32 %v4052, 0.0
        %v4085 = vmax.f32 %v4053, 0.0
        %v4086 = vmax.f32 %v4054, 0.0
        %v4087 = vmax.f32 %v4055, 0.0
        %v4088 = vmax.f32 %v4056, 0.0
        %v4089 = vmax.f32 %v4057, 0.0
        %v4090 = vmax.f32 %v4058, 0.0
        %v4091 = vadd.f32 %v4059, %v953
        %v4092 = vadd.f32 %v4060, %v955
        %v4093 = vadd.f32 %v4061, %v957
        %v4094 = vadd.f32 %v4062, %v959
        %v4095 = vadd.f32 %v4063, %v961
        %v4096 = vadd.f32 %v4064, %v963
        %v4097 = vadd.f32 %v4065, %v965
        %v4098 = vadd.f32 %v4066, %v967
        %v4099 = vadd.f32 %v4067, %v969
        %v4100 = vadd.f32 %v4068, %v971
        %v4101 = vadd.f32 %v4069, %v973
        %v4102 = vadd.f32 %v4070, %v975
        %v4103 = vadd.f32 %v4071, %v977
        %v4104 = vadd.f32 %v4072, %v979
        %v4105 = vadd.f32 %v4073, %v981
        %v4106 = vadd.f32 %v4074, %v983
        %v4107 = vadd.f32 %v4075, %v985
        %v4108 = vadd.f32 %v4076, %v987
        %v4109 = vadd.f32 %v4077, %v989
        %v4110 = vadd.f32 %v4078, %v991
        %v4111 = vadd.f32 %v4079, %v993
        %v4112 = vadd.f32 %v4080, %v995
        %v4113 = vadd.f32 %v4081, %v997
        %v4114 = vadd.f32 %v4082, %v999
        %v4115 = vadd.f32 %v4083, %v1001
        %v4116 = vadd.f32 %v4084, %v1003
        %v4117 = vadd.f32 %v4085, %v1005
        %v4118 = vadd.f32 %v4086, %v1007
        %v4119 = vadd.f32 %v4087, %v1009
        %v4120 = vadd.f32 %v4088, %v1011
        %v4121 = vadd.f32 %v4089, %v1013
        %v4122 = vadd.f32 %v4090, %v1015
        %v4123 = vpack.c.bf16 %v4092, %v4091
        %v4124 = vpack.c.bf16 %v4094, %v4093
        %v4125 = vpack.c.bf16 %v4096, %v4095
        %v4126 = vpack.c.bf16 %v4098, %v4097
        %v4127 = vpack.c.bf16 %v4100, %v4099
        %v4128 = vpack.c.bf16 %v4102, %v4101
        %v4129 = vpack.c.bf16 %v4104, %v4103
        %v4130 = vpack.c.bf16 %v4106, %v4105
        %v4131 = vpack.c.bf16 %v4108, %v4107
        %v4132 = vpack.c.bf16 %v4110, %v4109
        %v4133 = vpack.c.bf16 %v4112, %v4111
        %v4134 = vpack.c.bf16 %v4114, %v4113
        %v4135 = vpack.c.bf16 %v4116, %v4115
        %v4136 = vpack.c.bf16 %v4118, %v4117
        %v4137 = vpack.c.bf16 %v4120, %v4119
        %v4138 = vpack.c.bf16 %v4122, %v4121
        %v4139 = vld [vmem:[#allocation11] sm:$0xf]
        %v4140 = vld [vmem:[#allocation11 + $0x4] sm:$0xf]
        %v4141 = vld [vmem:[#allocation11 + $0x8] sm:$0xf]
        %v4142 = vld [vmem:[#allocation11 + $0xc] sm:$0xf]
        %v4143 = vld [vmem:[#allocation11 + $0x10] sm:$0xf]
        %v4144 = vld [vmem:[#allocation11 + $0x14] sm:$0xf]
        %v4145 = vld [vmem:[#allocation11 + $0x18] sm:$0xf]
        %v4146 = vld [vmem:[#allocation11 + $0x1c] sm:$0xf]
        %v4147 = vld [vmem:[#allocation11 + $0x20] sm:$0xf]
        %v4148 = vld [vmem:[#allocation11 + $0x24] sm:$0xf]
        %v4149 = vld [vmem:[#allocation11 + $0x28] sm:$0xf]
        %v4150 = vld [vmem:[#allocation11 + $0x2c] sm:$0xf]
        %v4151 = vld [vmem:[#allocation11 + $0x30] sm:$0xf]
        %v4152 = vld [vmem:[#allocation11 + $0x34] sm:$0xf]
        %v4153 = vld [vmem:[#allocation11 + $0x38] sm:$0xf]
        %v4154 = vld [vmem:[#allocation11 + $0x3c] sm:$0xf]
        %v4155 = vpack.c.bf16 %v956, %v954
        %v4156 = vpack.c.bf16 %v960, %v958
        %v4157 = vpack.c.bf16 %v964, %v962
        %v4158 = vpack.c.bf16 %v968, %v966
        %v4159 = vpack.c.bf16 %v972, %v970
        %v4160 = vpack.c.bf16 %v976, %v974
        %v4161 = vpack.c.bf16 %v980, %v978
        %v4162 = vpack.c.bf16 %v984, %v982
        %v4163 = vpack.c.bf16 %v988, %v986
        %v4164 = vpack.c.bf16 %v992, %v990
        %v4165 = vpack.c.bf16 %v996, %v994
        %v4166 = vpack.c.bf16 %v1000, %v998
        %v4167 = vpack.c.bf16 %v1004, %v1002
        %v4168 = vpack.c.bf16 %v1008, %v1006
        %v4169 = vpack.c.bf16 %v1012, %v1010
        %v4170 = vpack.c.bf16 %v1016, %v1014
        %v4171 = vld [vmem:[#allocation12] sm:$0xf]
        %v4172 = vld [vmem:[#allocation12 + $0x4] sm:$0xf]
        %v4173 = vld [vmem:[#allocation12 + $0x8] sm:$0xf]
        %v4174 = vld [vmem:[#allocation12 + $0xc] sm:$0xf]
        %v4175 = vld [vmem:[#allocation12 + $0x10] sm:$0xf]
        %v4176 = vld [vmem:[#allocation12 + $0x14] sm:$0xf]
        %v4177 = vld [vmem:[#allocation12 + $0x18] sm:$0xf]
        %v4178 = vld [vmem:[#allocation12 + $0x1c] sm:$0xf]
        %v4179 = vld [vmem:[#allocation12 + $0x20] sm:$0xf]
        %v4180 = vld [vmem:[#allocation12 + $0x24] sm:$0xf]
        %v4181 = vld [vmem:[#allocation12 + $0x28] sm:$0xf]
        %v4182 = vld [vmem:[#allocation12 + $0x2c] sm:$0xf]
        %v4183 = vld [vmem:[#allocation12 + $0x30] sm:$0xf]
        %v4184 = vld [vmem:[#allocation12 + $0x34] sm:$0xf]
        %v4185 = vld [vmem:[#allocation12 + $0x38] sm:$0xf]
        %v4186 = vld [vmem:[#allocation12 + $0x3c] sm:$0xf]
        %v4203 = vunpack.c.l.b16 %v4171
        %v4204 = vunpack.c.l.b16 %v4172
        %v4205 = vunpack.c.l.b16 %v4173
        %v4206 = vunpack.c.l.b16 %v4174
        %v4207 = vunpack.c.l.b16 %v4175
        %v4208 = vunpack.c.l.b16 %v4176
        %v4209 = vunpack.c.l.b16 %v4177
        %v4210 = vunpack.c.l.b16 %v4178
        %v4211 = vunpack.c.l.b16 %v4179
        %v4212 = vunpack.c.l.b16 %v4180
        %v4213 = vunpack.c.l.b16 %v4181
        %v4214 = vunpack.c.l.b16 %v4182
        %v4215 = vunpack.c.l.b16 %v4183
        %v4216 = vunpack.c.l.b16 %v4184
        %v4217 = vunpack.c.l.b16 %v4185
        %v4218 = vunpack.c.l.b16 %v4186
        %v4219 = vpack.c.b16 %v4204, %v4203
        %v4220 = vpack.c.b16 %v4206, %v4205
        %v4221 = vpack.c.b16 %v4208, %v4207
        %v4222 = vpack.c.b16 %v4210, %v4209
        %v4223 = vpack.c.b16 %v4212, %v4211
        %v4224 = vpack.c.b16 %v4214, %v4213
        %v4225 = vpack.c.b16 %v4216, %v4215
        %v4226 = vpack.c.b16 %v4218, %v4217
        %4235 = vmatprep.subr.bf16.mxu0 0
        %4236 = vmatpush1.bf16.msra.mxu0 %v4219
        %4237 = vmatprep.subr.bf16.mxu0 0
        %4238 = vmatpush1.bf16.msra.mxu0 %v4220
        %4239 = vmatprep.subr.bf16.mxu0 0
        %4240 = vmatpush1.bf16.msra.mxu0 %v4221
        %4241 = vmatprep.subr.bf16.mxu0 0
        %4242 = vmatpush1.bf16.msra.mxu0 %v4222
        %4243 = vmatprep.subr.bf16.mxu0 0
        %4244 = vmatpush1.bf16.msra.mxu0 %v4223
        %4245 = vmatprep.subr.bf16.mxu0 0
        %4246 = vmatpush1.bf16.msra.mxu0 %v4224
        %4247 = vmatprep.subr.bf16.mxu0 0
        %4248 = vmatpush1.bf16.msra.mxu0 %v4225
        %4249 = vmatprep.subr.bf16.mxu0 0
        %4250 = vmatpush1.bf16.msra.mxu0 %v4226
        %4251 = vmatprep.subr.bf16.mxu0 0
        %4252 = vmatpush1.bf16.msra.mxu0 0
        %4253 = vmatprep.subr.bf16.mxu0 0
        %4254 = vmatpush1.bf16.msra.mxu0 0
        %4255 = vmatprep.subr.bf16.mxu0 0
        %4256 = vmatpush1.bf16.msra.mxu0 0
        %4257 = vmatprep.subr.bf16.mxu0 0
        %4258 = vmatpush1.bf16.msra.mxu0 0
        %4259 = vmatprep.subr.bf16.mxu0 0
        %4260 = vmatpush1.bf16.msra.mxu0 0
        %4261 = vmatprep.subr.bf16.mxu0 0
        %4262 = vmatpush1.bf16.msra.mxu0 0
        %4263 = vmatprep.subr.bf16.mxu0 0
        %4264 = vmatpush1.bf16.msra.mxu0 0
        %4265 = vmatprep.subr.bf16.mxu0 0
        %4266 = vmatpush1.bf16.msra.mxu0 0
        %4267 = vmatprep.mubr.bf16.mxu0 0
        %4268 = vmatmul.mubr.bf16.gmra.mrb[0].mxu0 %v4155
        %v4269 = vpop.f32.mrb[0].mxu0
        %v4270 = vadd.f32 0.0, %v4269
        %v4271 = vpop.f32.mrb[0].mxu0
        %v4272 = vpop.f32.mrb[0].mxu0
        %v4273 = vadd.f32 0.0, %v4272
        %v4274 = vpop.f32.mrb[0].mxu0
        %4275 = vmatprep.mubr.bf16.mxu0 0
        %4276 = vmatmul.mubr.bf16.gmra.mrb[0].mxu0 %v4156
        %v4277 = vpop.f32.mrb[0].mxu0
        %v4278 = vadd.f32 0.0, %v4277
        %v4279 = vpop.f32.mrb[0].mxu0
        %v4280 = vpop.f32.mrb[0].mxu0
        %v4281 = vadd.f32 0.0, %v4280
        %v4282 = vpop.f32.mrb[0].mxu0
        %4283 = vmatprep.mubr.bf16.mxu0 0
        %4284 = vmatmul.mubr.bf16.gmra.mrb[0].mxu0 %v4157
        %v4285 = vpop.f32.mrb[0].mxu0
        %v4286 = vadd.f32 0.0, %v4285
        %v4287 = vpop.f32.mrb[0].mxu0
        %v4288 = vpop.f32.mrb[0].mxu0
        %v4289 = vadd.f32 0.0, %v4288
        %v4290 = vpop.f32.mrb[0].mxu0
        %4291 = vmatprep.mubr.bf16.mxu0 0
        %4292 = vmatmul.mubr.bf16.gmra.mrb[0].mxu0 %v4158
        %v4293 = vpop.f32.mrb[0].mxu0
        %v4294 = vadd.f32 0.0, %v4293
        %v4295 = vpop.f32.mrb[0].mxu0
        %v4296 = vpop.f32.mrb[0].mxu0
        %v4297 = vadd.f32 0.0, %v4296
        %v4298 = vpop.f32.mrb[0].mxu0
        %4299 = vmatprep.mubr.bf16.mxu0 0
        %4300 = vmatmul.mubr.bf16.gmra.mrb[0].mxu0 %v4159
        %v4301 = vpop.f32.mrb[0].mxu0
        %v4302 = vadd.f32 0.0, %v4301
        %v4303 = vpop.f32.mrb[0].mxu0
        %v4304 = vpop.f32.mrb[0].mxu0
        %v4305 = vadd.f32 0.0, %v4304
        %v4306 = vpop.f32.mrb[0].mxu0
        %4307 = vmatprep.mubr.bf16.mxu0 0
        %4308 = vmatmul.mubr.bf16.gmra.mrb[0].mxu0 %v4160
        %v4309 = vpop.f32.mrb[0].mxu0
        %v4310 = vadd.f32 0.0, %v4309
        %v4311 = vpop.f32.mrb[0].mxu0
        %v4312 = vpop.f32.mrb[0].mxu0
        %v4313 = vadd.f32 0.0, %v4312
        %v4314 = vpop.f32.mrb[0].mxu0
        %4315 = vmatprep.mubr.bf16.mxu0 0
        %4316 = vmatmul.mubr.bf16.gmra.mrb[0].mxu0 %v4161
        %v4317 = vpop.f32.mrb[0].mxu0
        %v4318 = vadd.f32 0.0, %v4317
        %v4319 = vpop.f32.mrb[0].mxu0
        %v4320 = vpop.f32.mrb[0].mxu0
        %v4321 = vadd.f32 0.0, %v4320
        %v4322 = vpop.f32.mrb[0].mxu0
        %4323 = vmatprep.mubr.bf16.mxu0 0
        %4324 = vmatmul.mubr.bf16.gmra.mrb[0].mxu0 %v4162
        %v4325 = vpop.f32.mrb[0].mxu0
        %v4326 = vadd.f32 0.0, %v4325
        %v4327 = vpop.f32.mrb[0].mxu0
        %v4328 = vpop.f32.mrb[0].mxu0
        %v4329 = vadd.f32 0.0, %v4328
        %v4330 = vpop.f32.mrb[0].mxu0
        %4331 = vmatprep.mubr.bf16.mxu0 0
        %4332 = vmatmul.mubr.bf16.gmra.mrb[0].mxu0 %v4163
        %v4333 = vpop.f32.mrb[0].mxu0
        %v4334 = vadd.f32 0.0, %v4333
        %v4335 = vpop.f32.mrb[0].mxu0
        %v4336 = vpop.f32.mrb[0].mxu0
        %v4337 = vadd.f32 0.0, %v4336
        %v4338 = vpop.f32.mrb[0].mxu0
        %4339 = vmatprep.mubr.bf16.mxu0 0
        %4340 = vmatmul.mubr.bf16.gmra.mrb[0].mxu0 %v4164
        %v4341 = vpop.f32.mrb[0].mxu0
        %v4342 = vadd.f32 0.0, %v4341
        %v4343 = vpop.f32.mrb[0].mxu0
        %v4344 = vpop.f32.mrb[0].mxu0
        %v4345 = vadd.f32 0.0, %v4344
        %v4346 = vpop.f32.mrb[0].mxu0
        %4347 = vmatprep.mubr.bf16.mxu0 0
        %4348 = vmatmul.mubr.bf16.gmra.mrb[0].mxu0 %v4165
        %v4349 = vpop.f32.mrb[0].mxu0
        %v4350 = vadd.f32 0.0, %v4349
        %v4351 = vpop.f32.mrb[0].mxu0
        %v4352 = vpop.f32.mrb[0].mxu0
        %v4353 = vadd.f32 0.0, %v4352
        %v4354 = vpop.f32.mrb[0].mxu0
        %4355 = vmatprep.mubr.bf16.mxu0 0
        %4356 = vmatmul.mubr.bf16.gmra.mrb[0].mxu0 %v4166
        %v4357 = vpop.f32.mrb[0].mxu0
        %v4358 = vadd.f32 0.0, %v4357
        %v4359 = vpop.f32.mrb[0].mxu0
        %v4360 = vpop.f32.mrb[0].mxu0
        %v4361 = vadd.f32 0.0, %v4360
        %v4362 = vpop.f32.mrb[0].mxu0
        %4363 = vmatprep.mubr.bf16.mxu0 0
        %4364 = vmatmul.mubr.bf16.gmra.mrb[0].mxu0 %v4167
        %v4365 = vpop.f32.mrb[0].mxu0
        %v4366 = vadd.f32 0.0, %v4365
        %v4367 = vpop.f32.mrb[0].mxu0
        %v4368 = vpop.f32.mrb[0].mxu0
        %v4369 = vadd.f32 0.0, %v4368
        %v4370 = vpop.f32.mrb[0].mxu0
        %4371 = vmatprep.mubr.bf16.mxu0 0
        %4372 = vmatmul.mubr.bf16.gmra.mrb[0].mxu0 %v4168
        %v4373 = vpop.f32.mrb[0].mxu0
        %v4374 = vadd.f32 0.0, %v4373
        %v4375 = vpop.f32.mrb[0].mxu0
        %v4376 = vpop.f32.mrb[0].mxu0
        %v4377 = vadd.f32 0.0, %v4376
        %v4378 = vpop.f32.mrb[0].mxu0
        %4379 = vmatprep.mubr.bf16.mxu0 0
        %4380 = vmatmul.mubr.bf16.gmra.mrb[0].mxu0 %v4169
        %v4381 = vpop.f32.mrb[0].mxu0
        %v4382 = vadd.f32 0.0, %v4381
        %v4383 = vpop.f32.mrb[0].mxu0
        %v4384 = vpop.f32.mrb[0].mxu0
        %v4385 = vadd.f32 0.0, %v4384
        %v4386 = vpop.f32.mrb[0].mxu0
        %4387 = vmatprep.mubr.bf16.mxu0 0
        %4388 = vmatmul.mubr.bf16.gmra.mrb[0].mxu0 %v4170
        %v4389 = vpop.f32.mrb[0].mxu0
        %v4390 = vadd.f32 0.0, %v4389
        %v4391 = vpop.f32.mrb[0].mxu0
        %v4392 = vpop.f32.mrb[0].mxu0
        %v4393 = vadd.f32 0.0, %v4392
        %v4394 = vpop.f32.mrb[0].mxu0
        %4395 = vdwg.mxu0
        %v4412 = vunpack.c.l.b16 %v4139
        %v4413 = vunpack.c.l.b16 %v4140
        %v4414 = vunpack.c.l.b16 %v4141
        %v4415 = vunpack.c.l.b16 %v4142
        %v4416 = vunpack.c.l.b16 %v4143
        %v4417 = vunpack.c.l.b16 %v4144
        %v4418 = vunpack.c.l.b16 %v4145
        %v4419 = vunpack.c.l.b16 %v4146
        %v4420 = vunpack.c.l.b16 %v4147
        %v4421 = vunpack.c.l.b16 %v4148
        %v4422 = vunpack.c.l.b16 %v4149
        %v4423 = vunpack.c.l.b16 %v4150
        %v4424 = vunpack.c.l.b16 %v4151
        %v4425 = vunpack.c.l.b16 %v4152
        %v4426 = vunpack.c.l.b16 %v4153
        %v4427 = vunpack.c.l.b16 %v4154
        %v4428 = vpack.c.b16 %v4413, %v4412
        %v4429 = vpack.c.b16 %v4415, %v4414
        %v4430 = vpack.c.b16 %v4417, %v4416
        %v4431 = vpack.c.b16 %v4419, %v4418
        %v4432 = vpack.c.b16 %v4421, %v4420
        %v4433 = vpack.c.b16 %v4423, %v4422
        %v4434 = vpack.c.b16 %v4425, %v4424
        %v4435 = vpack.c.b16 %v4427, %v4426
        %4444 = vmatprep.subr.bf16.mxu0 0
        %4445 = vmatpush1.bf16.msra.mxu0 %v4428
        %4446 = vmatprep.subr.bf16.mxu0 0
        %4447 = vmatpush1.bf16.msra.mxu0 %v4429
        %4448 = vmatprep.subr.bf16.mxu0 0
        %4449 = vmatpush1.bf16.msra.mxu0 %v4430
        %4450 = vmatprep.subr.bf16.mxu0 0
        %4451 = vmatpush1.bf16.msra.mxu0 %v4431
        %4452 = vmatprep.subr.bf16.mxu0 0
        %4453 = vmatpush1.bf16.msra.mxu0 %v4432
        %4454 = vmatprep.subr.bf16.mxu0 0
        %4455 = vmatpush1.bf16.msra.mxu0 %v4433
        %4456 = vmatprep.subr.bf16.mxu0 0
        %4457 = vmatpush1.bf16.msra.mxu0 %v4434
        %4458 = vmatprep.subr.bf16.mxu0 0
        %4459 = vmatpush1.bf16.msra.mxu0 %v4435
        %4460 = vmatprep.subr.bf16.mxu0 0
        %4461 = vmatpush1.bf16.msra.mxu0 0
        %4462 = vmatprep.subr.bf16.mxu0 0
        %4463 = vmatpush1.bf16.msra.mxu0 0
        %4464 = vmatprep.subr.bf16.mxu0 0
        %4465 = vmatpush1.bf16.msra.mxu0 0
        %4466 = vmatprep.subr.bf16.mxu0 0
        %4467 = vmatpush1.bf16.msra.mxu0 0
        %4468 = vmatprep.subr.bf16.mxu0 0
        %4469 = vmatpush1.bf16.msra.mxu0 0
        %4470 = vmatprep.subr.bf16.mxu0 0
        %4471 = vmatpush1.bf16.msra.mxu0 0
        %4472 = vmatprep.subr.bf16.mxu0 0
        %4473 = vmatpush1.bf16.msra.mxu0 0
        %4474 = vmatprep.subr.bf16.mxu0 0
        %4475 = vmatpush1.bf16.msra.mxu0 0
        %4476 = vmatprep.mubr.bf16.mxu0 0
        %4477 = vmatmul.mubr.bf16.gmra.mrb[0].mxu0 %v4123
        %v4478 = vpop.f32.mrb[0].mxu0
        %v4479 = vadd.f32 %v4270, %v4478
        %v4480 = vpop.f32.mrb[0].mxu0
        %v4481 = vpop.f32.mrb[0].mxu0
        %v4482 = vadd.f32 %v4273, %v4481
        %v4483 = vpop.f32.mrb[0].mxu0
        %4484 = vmatprep.mubr.bf16.mxu0 0
        %4485 = vmatmul.mubr.bf16.gmra.mrb[0].mxu0 %v4124
        %v4486 = vpop.f32.mrb[0].mxu0
        %v4487 = vadd.f32 %v4278, %v4486
        %v4488 = vpop.f32.mrb[0].mxu0
        %v4489 = vpop.f32.mrb[0].mxu0
        %v4490 = vadd.f32 %v4281, %v4489
        %v4491 = vpop.f32.mrb[0].mxu0
        %4492 = vmatprep.mubr.bf16.mxu0 0
        %4493 = vmatmul.mubr.bf16.gmra.mrb[0].mxu0 %v4125
        %v4494 = vpop.f32.mrb[0].mxu0
        %v4495 = vadd.f32 %v4286, %v4494
        %v4496 = vpop.f32.mrb[0].mxu0
        %v4497 = vpop.f32.mrb[0].mxu0
        %v4498 = vadd.f32 %v4289, %v4497
        %v4499 = vpop.f32.mrb[0].mxu0
        %4500 = vmatprep.mubr.bf16.mxu0 0
        %4501 = vmatmul.mubr.bf16.gmra.mrb[0].mxu0 %v4126
        %v4502 = vpop.f32.mrb[0].mxu0
        %v4503 = vadd.f32 %v4294, %v4502
        %v4504 = vpop.f32.mrb[0].mxu0
        %v4505 = vpop.f32.mrb[0].mxu0
        %v4506 = vadd.f32 %v4297, %v4505
        %v4507 = vpop.f32.mrb[0].mxu0
        %4508 = vmatprep.mubr.bf16.mxu0 0
        %4509 = vmatmul.mubr.bf16.gmra.mrb[0].mxu0 %v4127
        %v4510 = vpop.f32.mrb[0].mxu0
        %v4511 = vadd.f32 %v4302, %v4510
        %v4512 = vpop.f32.mrb[0].mxu0
        %v4513 = vpop.f32.mrb[0].mxu0
        %v4514 = vadd.f32 %v4305, %v4513
        %v4515 = vpop.f32.mrb[0].mxu0
        %4516 = vmatprep.mubr.bf16.mxu0 0
        %4517 = vmatmul.mubr.bf16.gmra.mrb[0].mxu0 %v4128
        %v4518 = vpop.f32.mrb[0].mxu0
        %v4519 = vadd.f32 %v4310, %v4518
        %v4520 = vpop.f32.mrb[0].mxu0
        %v4521 = vpop.f32.mrb[0].mxu0
        %v4522 = vadd.f32 %v4313, %v4521
        %v4523 = vpop.f32.mrb[0].mxu0
        %4524 = vmatprep.mubr.bf16.mxu0 0
        %4525 = vmatmul.mubr.bf16.gmra.mrb[0].mxu0 %v4129
        %v4526 = vpop.f32.mrb[0].mxu0
        %v4527 = vadd.f32 %v4318, %v4526
        %v4528 = vpop.f32.mrb[0].mxu0
        %v4529 = vpop.f32.mrb[0].mxu0
        %v4530 = vadd.f32 %v4321, %v4529
        %v4531 = vpop.f32.mrb[0].mxu0
        %4532 = vmatprep.mubr.bf16.mxu0 0
        %4533 = vmatmul.mubr.bf16.gmra.mrb[0].mxu0 %v4130
        %v4534 = vpop.f32.mrb[0].mxu0
        %v4535 = vadd.f32 %v4326, %v4534
        %v4536 = vpop.f32.mrb[0].mxu0
        %v4537 = vpop.f32.mrb[0].mxu0
        %v4538 = vadd.f32 %v4329, %v4537
        %v4539 = vpop.f32.mrb[0].mxu0
        %4540 = vmatprep.mubr.bf16.mxu0 0
        %4541 = vmatmul.mubr.bf16.gmra.mrb[0].mxu0 %v4131
        %v4542 = vpop.f32.mrb[0].mxu0
        %v4543 = vadd.f32 %v4334, %v4542
        %v4544 = vpop.f32.mrb[0].mxu0
        %v4545 = vpop.f32.mrb[0].mxu0
        %v4546 = vadd.f32 %v4337, %v4545
        %v4547 = vpop.f32.mrb[0].mxu0
        %4548 = vmatprep.mubr.bf16.mxu0 0
        %4549 = vmatmul.mubr.bf16.gmra.mrb[0].mxu0 %v4132
        %v4550 = vpop.f32.mrb[0].mxu0
        %v4551 = vadd.f32 %v4342, %v4550
        %v4552 = vpop.f32.mrb[0].mxu0
        %v4553 = vpop.f32.mrb[0].mxu0
        %v4554 = vadd.f32 %v4345, %v4553
        %v4555 = vpop.f32.mrb[0].mxu0
        %4556 = vmatprep.mubr.bf16.mxu0 0
        %4557 = vmatmul.mubr.bf16.gmra.mrb[0].mxu0 %v4133
        %v4558 = vpop.f32.mrb[0].mxu0
        %v4559 = vadd.f32 %v4350, %v4558
        %v4560 = vpop.f32.mrb[0].mxu0
        %v4561 = vpop.f32.mrb[0].mxu0
        %v4562 = vadd.f32 %v4353, %v4561
        %v4563 = vpop.f32.mrb[0].mxu0
        %4564 = vmatprep.mubr.bf16.mxu0 0
        %4565 = vmatmul.mubr.bf16.gmra.mrb[0].mxu0 %v4134
        %v4566 = vpop.f32.mrb[0].mxu0
        %v4567 = vadd.f32 %v4358, %v4566
        %v4568 = vpop.f32.mrb[0].mxu0
        %v4569 = vpop.f32.mrb[0].mxu0
        %v4570 = vadd.f32 %v4361, %v4569
        %v4571 = vpop.f32.mrb[0].mxu0
        %4572 = vmatprep.mubr.bf16.mxu0 0
        %4573 = vmatmul.mubr.bf16.gmra.mrb[0].mxu0 %v4135
        %v4574 = vpop.f32.mrb[0].mxu0
        %v4575 = vadd.f32 %v4366, %v4574
        %v4576 = vpop.f32.mrb[0].mxu0
        %v4577 = vpop.f32.mrb[0].mxu0
        %v4578 = vadd.f32 %v4369, %v4577
        %v4579 = vpop.f32.mrb[0].mxu0
        %4580 = vmatprep.mubr.bf16.mxu0 0
        %4581 = vmatmul.mubr.bf16.gmra.mrb[0].mxu0 %v4136
        %v4582 = vpop.f32.mrb[0].mxu0
        %v4583 = vadd.f32 %v4374, %v4582
        %v4584 = vpop.f32.mrb[0].mxu0
        %v4585 = vpop.f32.mrb[0].mxu0
        %v4586 = vadd.f32 %v4377, %v4585
        %v4587 = vpop.f32.mrb[0].mxu0
        %4588 = vmatprep.mubr.bf16.mxu0 0
        %4589 = vmatmul.mubr.bf16.gmra.mrb[0].mxu0 %v4137
        %v4590 = vpop.f32.mrb[0].mxu0
        %v4591 = vadd.f32 %v4382, %v4590
        %v4592 = vpop.f32.mrb[0].mxu0
        %v4593 = vpop.f32.mrb[0].mxu0
        %v4594 = vadd.f32 %v4385, %v4593
        %v4595 = vpop.f32.mrb[0].mxu0
        %4596 = vmatprep.mubr.bf16.mxu0 0
        %4597 = vmatmul.mubr.bf16.gmra.mrb[0].mxu0 %v4138
        %v4598 = vpop.f32.mrb[0].mxu0
        %v4599 = vadd.f32 %v4390, %v4598
        %v4600 = vpop.f32.mrb[0].mxu0
        %v4601 = vpop.f32.mrb[0].mxu0
        %v4602 = vadd.f32 %v4393, %v4601
        %v4603 = vpop.f32.mrb[0].mxu0
        %4604 = vdwg.mxu0
        %v4605 = vld [vmem:[%s9] sm:$0x1]
        %v4607 = vlaneseq
        %v4608 = vshrl.u32 %v4607, 7
        %v4609 = vsub.s32 0, %v4608
        %v4610 = vrot.slane %v4605, %v4609
        %v4612 = vadd.f32 %v4479, %v4610
        %v4613 = vadd.f32 %v4482, %v4610
        %v4614 = vadd.f32 %v4487, %v4610
        %v4615 = vadd.f32 %v4490, %v4610
        %v4616 = vadd.f32 %v4495, %v4610
        %v4617 = vadd.f32 %v4498, %v4610
        %v4618 = vadd.f32 %v4503, %v4610
        %v4619 = vadd.f32 %v4506, %v4610
        %v4620 = vadd.f32 %v4511, %v4610
        %v4621 = vadd.f32 %v4514, %v4610
        %v4622 = vadd.f32 %v4519, %v4610
        %v4623 = vadd.f32 %v4522, %v4610
        %v4624 = vadd.f32 %v4527, %v4610
        %v4625 = vadd.f32 %v4530, %v4610
        %v4626 = vadd.f32 %v4535, %v4610
        %v4627 = vadd.f32 %v4538, %v4610
        %v4628 = vadd.f32 %v4543, %v4610
        %v4629 = vadd.f32 %v4546, %v4610
        %v4630 = vadd.f32 %v4551, %v4610
        %v4631 = vadd.f32 %v4554, %v4610
        %v4632 = vadd.f32 %v4559, %v4610
        %v4633 = vadd.f32 %v4562, %v4610
        %v4634 = vadd.f32 %v4567, %v4610
        %v4635 = vadd.f32 %v4570, %v4610
        %v4636 = vadd.f32 %v4575, %v4610
        %v4637 = vadd.f32 %v4578, %v4610
        %v4638 = vadd.f32 %v4583, %v4610
        %v4639 = vadd.f32 %v4586, %v4610
        %v4640 = vadd.f32 %v4591, %v4610
        %v4641 = vadd.f32 %v4594, %v4610
        %v4642 = vadd.f32 %v4599, %v4610
        %v4643 = vadd.f32 %v4602, %v4610
        %v4644 = vmax.f32 %v4612, 0.0
        %v4645 = vmax.f32 %v4613, 0.0
        %v4646 = vmax.f32 %v4614, 0.0
        %v4647 = vmax.f32 %v4615, 0.0
        %v4648 = vmax.f32 %v4616, 0.0
        %v4649 = vmax.f32 %v4617, 0.0
        %v4650 = vmax.f32 %v4618, 0.0
        %v4651 = vmax.f32 %v4619, 0.0
        %v4652 = vmax.f32 %v4620, 0.0
        %v4653 = vmax.f32 %v4621, 0.0
        %v4654 = vmax.f32 %v4622, 0.0
        %v4655 = vmax.f32 %v4623, 0.0
        %v4656 = vmax.f32 %v4624, 0.0
        %v4657 = vmax.f32 %v4625, 0.0
        %v4658 = vmax.f32 %v4626, 0.0
        %v4659 = vmax.f32 %v4627, 0.0
        %v4660 = vmax.f32 %v4628, 0.0
        %v4661 = vmax.f32 %v4629, 0.0
        %v4662 = vmax.f32 %v4630, 0.0
        %v4663 = vmax.f32 %v4631, 0.0
        %v4664 = vmax.f32 %v4632, 0.0
        %v4665 = vmax.f32 %v4633, 0.0
        %v4666 = vmax.f32 %v4634, 0.0
        %v4667 = vmax.f32 %v4635, 0.0
        %v4668 = vmax.f32 %v4636, 0.0
        %v4669 = vmax.f32 %v4637, 0.0
        %v4670 = vmax.f32 %v4638, 0.0
        %v4671 = vmax.f32 %v4639, 0.0
        %v4672 = vmax.f32 %v4640, 0.0
        %v4673 = vmax.f32 %v4641, 0.0
        %v4674 = vmax.f32 %v4642, 0.0
        %v4675 = vmax.f32 %v4643, 0.0
        %4676 = vst [vmem:[%s450] sm:$0xff] %v4644
        %4677 = vst [vmem:[%s450 + $0x8] sm:$0xff] %v4645
        %4678 = vst [vmem:[%s450 + $0x10] sm:$0xff] %v4646
        %4679 = vst [vmem:[%s450 + $0x18] sm:$0xff] %v4647
        %4680 = vst [vmem:[%s450 + $0x20] sm:$0xff] %v4648
        %4681 = vst [vmem:[%s450 + $0x28] sm:$0xff] %v4649
        %4682 = vst [vmem:[%s450 + $0x30] sm:$0xff] %v4650
        %4683 = vst [vmem:[%s450 + $0x38] sm:$0xff] %v4651
        %4684 = vst [vmem:[%s450 + $0x40] sm:$0xff] %v4652
        %4685 = vst [vmem:[%s450 + $0x48] sm:$0xff] %v4653
        %4686 = vst [vmem:[%s450 + $0x50] sm:$0xff] %v4654
        %4687 = vst [vmem:[%s450 + $0x58] sm:$0xff] %v4655
        %4688 = vst [vmem:[%s450 + $0x60] sm:$0xff] %v4656
        %4689 = vst [vmem:[%s450 + $0x68] sm:$0xff] %v4657
        %4690 = vst [vmem:[%s450 + $0x70] sm:$0xff] %v4658
        %4691 = vst [vmem:[%s450 + $0x78] sm:$0xff] %v4659
        %4692 = vst [vmem:[%s450 + $0x80] sm:$0xff] %v4660
        %4693 = vst [vmem:[%s450 + $0x88] sm:$0xff] %v4661
        %4694 = vst [vmem:[%s450 + $0x90] sm:$0xff] %v4662
        %4695 = vst [vmem:[%s450 + $0x98] sm:$0xff] %v4663
        %4696 = vst [vmem:[%s450 + $0xa0] sm:$0xff] %v4664
        %4697 = vst [vmem:[%s450 + $0xa8] sm:$0xff] %v4665
        %4698 = vst [vmem:[%s450 + $0xb0] sm:$0xff] %v4666
        %4699 = vst [vmem:[%s450 + $0xb8] sm:$0xff] %v4667
        %4700 = vst [vmem:[%s450 + $0xc0] sm:$0xff] %v4668
        %4701 = vst [vmem:[%s450 + $0xc8] sm:$0xff] %v4669
        %4702 = vst [vmem:[%s450 + $0xd0] sm:$0xff] %v4670
        %4703 = vst [vmem:[%s450 + $0xd8] sm:$0xff] %v4671
        %4704 = vst [vmem:[%s450 + $0xe0] sm:$0xff] %v4672
        %4705 = vst [vmem:[%s450 + $0xe8] sm:$0xff] %v4673
        %4706 = vst [vmem:[%s450 + $0xf0] sm:$0xff] %v4674
        %4707 = vst [vmem:[%s450 + $0xf8] sm:$0xff] %v4675
        %s4708 = sand.u32 %s253, 1
        %s4709 = scalar_lea.sflag [#allocation5], %s4708
        %s4710 = sand.u32 %s253, 1
        %s4711 = smul.addr %s4710, 256
        %s4712 = scalar_lea.vmem [#allocation14], %s4711
        // Predicated region
        $region85: #{tpu_custom_call.1} parent=59 // pred_check
          %p4713 = pneg %p263
        $region86: #{tpu_custom_call.1} parent=59 // pred_check_branch
          %4715 = sbr.rel (%p4713) target = $region88
        $region87: #{tpu_custom_call.1} parent=59 // pred_region
          %s4717 = ssub.s32 4096, 4096
          %4718 = vsyncadd %s4709, %s4717
          %s4719 = smul.addr %s30, 32
          %s4720 = smul.addr %s4719, 128
          %s4721 = scalar_lea.hbm %s10, %s4720
          %s4722 = sshll.u32 %s4712, 4
          %s4723 = int_to_ptr.vmem [resolvable:$true] %s4722
          %4728 = dma.vmem_to_hbm [thread:$0]  %s4723, 4096, %s4721, %s4709, 128, 128, 8
        $region88: #{tpu_custom_call.1} parent=59 // pred_fallthru
          _
      $region60: #{tpu_custom_call.1} parent=5 // pred_fallthru
        _
      %p4729 = scmp.le.s32.totalorder 2, %s25
      // Predicated region
      $region89: #{tpu_custom_call.1} parent=5 // pred_check
        %p4730 = pneg %p4729
      $region90: #{tpu_custom_call.1} parent=5 // pred_check_branch
        %4732 = sbr.rel (%p4730) target = $region92
      $region91: #{tpu_custom_call.1} parent=5 // pred_region
        %s4733 = ssub.s32 %s25, 2
        // Predicated region
        $region93: #{tpu_custom_call.1} parent=91 // pred_check
          %p4734 = pneg %p269
        $region94: #{tpu_custom_call.1} parent=91 // pred_check_branch
          %4736 = sbr.rel (%p4734) target = $region96
        $region95: #{tpu_custom_call.1} parent=91 // pred_region
          %s4737 = sand.u32 %s254, 1
          %s4738 = scalar_lea.sflag [#allocation5], %s4737
          %s4739 = sand.u32 %s254, 1
          %s4740 = smul.addr %s4739, 256
          %s4741 = scalar_lea.vmem [#allocation14], %s4740
          %4742 = dma.done %s4738, 4096
        $region96: #{tpu_custom_call.1} parent=91 // pred_fallthru
          _
      $region92: #{tpu_custom_call.1} parent=5 // pred_fallthru
        _
    $region6: #{tpu_custom_call.1} parent=1 // loop_footer
      %s29 = sadd.s32 1, %s25
    $region7: #{tpu_custom_call.1} parent=1 // loop_footer_branch
      %24 = sbr.rel target = $region3
    $region8: #{tpu_custom_call.1} parent=1 // loop_exit
      _
    %4743 = vsyncpa [#allocation4], 1
    %s4744 = scalar_lea.sflag [#allocation4], 1
    %4745 = vsyncpa %s4744, 1
    %4746 = vsyncpa [#allocation7], 1
    %4747 = vsyncpa [#allocation10], 1
    %4748 = vsyncpa [#allocation13], 1
    %4749 = vsyncpa [#allocation5], 1
    %s4750 = scalar_lea.sflag [#allocation5], 1
    %4751 = vsyncpa %s4750, 1

</llo_original>
